<compile_context>
chip_gen: v5e
topology: v5e:2x2
jax: 0.10.0
libtpu: 0.0.40
codegen_flags: <defaults>
</compile_context>

<pallas_src>
import functools

import numpy as np

import jax
import jax.numpy as jnp
from jax.experimental import pallas as pl
from jax.experimental.pallas import tpu as pltpu

_F32 = jnp.float32
_BF16 = jnp.bfloat16
_VMEM = pl.BlockSpec(memory_space=pltpu.MemorySpace.VMEM)


def _ceil8(n):
    return (n + 7) // 8 * 8


# ----------------------------------------------------------------------------
# Host-side (numpy) constant builders
# ----------------------------------------------------------------------------
def _interp_matrix(in_size, out_size):
    """Row weights of F.interpolate('bilinear', align_corners=False) as a matrix."""
    scale = in_size / out_size
    dst = np.arange(out_size, dtype=np.float64)
    src = np.maximum((dst + 0.5) * scale - 0.5, 0.0)
    i0 = np.minimum(np.floor(src).astype(np.int64), in_size - 1)
    i1 = np.minimum(i0 + 1, in_size - 1)
    w1 = src - i0
    w0 = 1.0 - w1
    m = np.zeros((out_size, in_size), dtype=np.float64)
    rows = np.arange(out_size)
    np.add.at(m, (rows, i0), w0)
    np.add.at(m, (rows, i1), w1)
    return m.astype(np.float32)


def _resize_rhs(h_in, w_in, h_out, w_out):
    """(h_in*w_in, h_out*w_out) operator s.t. X_flat @ R == vec(Mh @ X @ Mw^T)."""
    mh = _interp_matrix(h_in, h_out)           # (h_out, h_in)
    mwt = _interp_matrix(w_in, w_out).T        # (w_in, w_out)
    return np.kron(mh.T, mwt).astype(np.float32)


def _tail_rhs(hi, wi, hp, wp, ho, wo):
    """resize-to-pred + 1x1-conv padding=(1,1) quirk + final resize, composed.

    Bilinear rows sum to 1 and the padded border of the 1x1 conv holds only the
    bias, hence
      interpolate(pad(V) + b) == Mh3[:,1:-1] @ Mh2 @ V @ Mw2^T @ Mw3^T[1:-1,:] + b.
    """
    mh2 = _interp_matrix(hi, hp)                        # (hp, hi)
    mwt2 = _interp_matrix(wi, wp).T                     # (wi, wp)
    mh3p = _interp_matrix(hp + 2, ho)[:, 1:hp + 1]      # (ho, hp)  interior cols
    mwt3p = _interp_matrix(wp + 2, wo).T[1:wp + 1, :]   # (wp, wo)  interior rows
    mh_comb = mh3p @ mh2                                # (ho, hi)
    mwt_comb = mwt2 @ mwt3p                             # (wi, wo)
    return np.kron(mh_comb.T, mwt_comb).astype(np.float32)   # (hi*wi, ho*wo)


def _im2col_masks(h, w):
    """(9, h*w) {0,1} masks zeroing out-of-image taps after a flattened lane roll."""
    y, x = np.meshgrid(np.arange(h), np.arange(w), indexing="ij")
    rows = []
    for dy in (-1, 0, 1):
        for dx in (-1, 0, 1):
            ok = (y + dy >= 0) & (y + dy < h) & (x + dx >= 0) & (x + dx < w)
            rows.append(ok.reshape(-1))
    return np.stack(rows).astype(np.float32)


def _pack_conv3x3(w_pt, cout_p, cin_p, cin_pos=None):
    """PyTorch (Cout, Cin, 3, 3) -> (cout_p, 9*cin_p) matching the im2col stack.

    Column k*cin_p + pos (k = ky*3 + kx) holds w[:, ci, ky, kx] at the padded
    channel position pos = cin_pos[ci]; all other columns/rows stay zero.
    """
    w = np.asarray(w_pt, np.float32)
    cout, cin = w.shape[:2]
    if cin_pos is None:
        cin_pos = list(range(cin))
    src = w.transpose(0, 2, 3, 1)                        # (cout, 3, 3, cin)
    wp = np.zeros((cout_p, 3, 3, cin_p), np.float32)
    for ci, pos in enumerate(cin_pos):
        wp[:cout, :, :, pos] = src[..., ci]
    return wp.reshape(cout_p, 9 * cin_p)


def _pad_bias(b_pt, cout_p):
    b = np.zeros((cout_p, 1), np.float32)
    v = np.asarray(b_pt, np.float32).reshape(-1)
    b[:v.shape[0], 0] = v
    return b


# ----------------------------------------------------------------------------
# The fused kernel
# ----------------------------------------------------------------------------
def _readout_kernel(
    img_ref, node_ref,
    m1_ref, w1a_ref, b1a_ref, wda_ref, bda_ref, w2a_ref, b2a_ref,
    r1_ref,
    m2_ref, w1b_ref, b1b_ref, wdb_ref, bdb_ref, w2b_ref, b2b_ref,
    wcls_ref, ktail_ref,
    out_ref,
    *, width_a, width_b, cls_bias,
):
    def im2col(x, mask_ref, width):
        # x: (C, H*W) f32.  9-tap neighbourhood stack (9*C, H*W): flattened lane
        # rolls on the XLU + host-precomputed boundary masks on the VPU.
        n = x.shape[-1]
        pieces = []
        k = 0
        for dy in (-1, 0, 1):
            for dx in (-1, 0, 1):
                off = dy * width + dx
                shifted = x if off == 0 else pltpu.roll(x, (-off) % n, 1)
                pieces.append(shifted * mask_ref[k])
                k += 1
        return jnp.concatenate(pieces, axis=0)           # (9*C, H*W) f32, 8-aligned

    def res_block(x, mask_ref, width, w1_ref, b1_ref, wd_ref, bd_ref, w2_ref, b2_ref):
        # ResBlock.forward: downsample(x) + conv2(relu(conv1(relu(x)))).
        # One shared im2col stack (relu commutes with shift+mask); one bf16 MXU
        # matmul per 3x3 conv, f32 accumulation; biases/relu on the VPU in f32.
        s = im2col(x, mask_ref, width)
        skip = jnp.dot(wd_ref[...], s.astype(_BF16),
                       preferred_element_type=_F32) + bd_ref[...]
        r = jnp.dot(w1_ref[...], jnp.maximum(s, 0.0).astype(_BF16),
                    preferred_element_type=_F32) + b1_ref[...]
        s2 = im2col(jnp.maximum(r, 0.0), mask_ref, width)
        r = jnp.dot(w2_ref[...], s2.astype(_BF16),
                    preferred_element_type=_F32) + b2_ref[...]
        return skip + r                                   # (Cout_p, H*W) f32

    # refinement_bloc1 on the graph read-out (lanes = H0*W0)
    x = res_block(node_ref[...], m1_ref, width_a,
                  w1a_ref, b1a_ref, wda_ref, bda_ref, w2a_ref, b2a_ref)
    # bilinear upsample to the image-feature resolution: one matmul against the
    # host-composed kron(Mh^T, Mw^T) spatial operator (lane-dense in and out)
    x = jnp.dot(x.astype(_BF16), r1_ref[...], preferred_element_type=_F32)
    # torch.cat((image_feats, upsampled_node_out), dim=channels) -- both pieces
    # are zero-padded to 8-aligned channel counts, so the sublane concat is aligned.
    x = jnp.concatenate([img_ref[...], x], axis=0)
    # refinement_bloc2 (lanes = Hi*Wi)
    x = res_block(x, m2_ref, width_b,
                  w1b_ref, b1b_ref, wdb_ref, bdb_ref, w2b_ref, b2b_ref)
    # 1x1 classifier folded BEFORE the tail resizes (linearity), then one
    # matmul against the composed resize/pad/resize operator, bias and sigmoid.
    v = jnp.dot(wcls_ref[...], x.astype(_BF16), preferred_element_type=_F32)  # (1, Hi*Wi)
    logits = jnp.dot(v.astype(_BF16), ktail_ref[...],
                     preferred_element_type=_F32) + cls_bias                  # (1, Ho*Wo)
    out_ref[...] = jax.nn.sigmoid(logits)                                     # EUP


# ----------------------------------------------------------------------------
# Wrapper: precompute all matmul-form constants, return a jitted forward fn.
# ----------------------------------------------------------------------------
def make_readout_forward(params, feats_shape, node_shape, pred_res, orig_size):
    cf, hi, wi = feats_shape
    _, cg, h0, w0 = node_shape
    cn = int(params["bloc1"]["w1"].shape[0])              # OUT_NODE_FEATURES
    ci = int(params["bloc2"]["w1"].shape[0])              # INTERMEDIATE_CHANNELS
    hp, wp = int(pred_res[0]), int(pred_res[1])
    ho, wo = int(orig_size[0]), int(orig_size[1])
    assert params["bloc1"]["w1"].shape[1] == cg
    assert params["bloc2"]["w1"].shape[1] == cf + cn       # torch.cat order: [feats, node]

    # channel counts zero-padded to sublane (8) multiples -> aligned concats/tiles
    cfp, cgp, cnp, cip = _ceil8(cf), _ceil8(cg), _ceil8(cn), _ceil8(ci)
    cin2p = cfp + cnp
    # bloc2 input-channel positions after padding: feats at [0,cf), node at [cfp, cfp+cn)
    pos2 = list(range(cf)) + [cfp + j for j in range(cn)]

    b1p, b2p = params["bloc1"], params["bloc2"]
    bf16 = lambda a: jnp.asarray(a, _BF16)
    f32 = lambda a: jnp.asarray(a, _F32)

    consts = (
        f32(_im2col_masks(h0, w0)),
        bf16(_pack_conv3x3(b1p["w1"], cnp, cgp)), f32(_pad_bias(b1p["b1"], cnp)),
        bf16(_pack_conv3x3(b1p["wd"], cnp, cgp)), f32(_pad_bias(b1p["bd"], cnp)),
        bf16(_pack_conv3x3(b1p["w2"], cnp, cnp)), f32(_pad_bias(b1p["b2"], cnp)),
        bf16(_resize_rhs(h0, w0, hi, wi)),
        f32(_im2col_masks(hi, wi)),
        bf16(_pack_conv3x3(b2p["w1"], cip, cin2p, pos2)), f32(_pad_bias(b2p["b1"], cip)),
        bf16(_pack_conv3x3(b2p["wd"], cip, cin2p, pos2)), f32(_pad_bias(b2p["bd"], cip)),
        bf16(_pack_conv3x3(b2p["w2"], cip, cip)), f32(_pad_bias(b2p["b2"], cip)),
        bf16(np.pad(np.asarray(params["cls_w"], np.float32).reshape(1, ci),
                    ((0, 0), (0, cip - ci)))),
        bf16(_tail_rhs(hi, wi, hp, wp, ho, wo)),
    )
    cls_bias = float(np.asarray(params["cls_b"], np.float32).reshape(()))

    kernel = functools.partial(_readout_kernel, width_a=w0, width_b=wi,
                               cls_bias=cls_bias)
    fused = pl.pallas_call(
        kernel,
        out_shape=jax.ShapeDtypeStruct((1, ho * wo), jnp.float32),
        in_specs=[_VMEM] * (2 + len(consts)),
        out_specs=_VMEM,
    )

    @jax.jit
    def forward(image_feats, node_out):
        img = jnp.pad(image_feats.reshape(cf, hi * wi).astype(_F32),
                      ((0, cfp - cf), (0, 0)))
        node = jnp.pad(node_out[0].reshape(cg, h0 * w0).astype(_F32),
                       ((0, cgp - cg), (0, 0)))
        probs = fused(img, node, *consts)                  # (1, Ho*Wo), lane dense
        return probs.reshape(1, 1, ho, wo)

    return forward


# ----------------------------------------------------------------------------
# Random parameters in PyTorch nn.Conv2d layout: W (Cout, Cin, k, k), b (Cout,)
# ----------------------------------------------------------------------------
def init_params(key, c_feats, c_graph, out_node, int_ch):
    def conv_wb(k, cin, cout, ksize=3):
        k1, k2 = jax.random.split(k)
        w = jax.random.normal(k1, (cout, cin, ksize, ksize), jnp.float32) * 0.1
        b = jax.random.normal(k2, (cout,), jnp.float32) * 0.1
        return w, b

    keys = jax.random.split(key, 7)
    p = {"bloc1": {}, "bloc2": {}}
    p["bloc1"]["w1"], p["bloc1"]["b1"] = conv_wb(keys[0], c_graph, out_node)
    p["bloc1"]["w2"], p["bloc1"]["b2"] = conv_wb(keys[1], out_node, out_node)
    p["bloc1"]["wd"], p["bloc1"]["bd"] = conv_wb(keys[2], c_graph, out_node)
    cin2 = c_feats + out_node
    p["bloc2"]["w1"], p["bloc2"]["b1"] = conv_wb(keys[3], cin2, int_ch)
    p["bloc2"]["w2"], p["bloc2"]["b2"] = conv_wb(keys[4], int_ch, int_ch)
    p["bloc2"]["wd"], p["bloc2"]["bd"] = conv_wb(keys[5], cin2, int_ch)
    p["cls_w"], p["cls_b"] = conv_wb(keys[6], int_ch, 1, ksize=1)
    return p


if __name__ == "__main__":
    key = jax.random.PRNGKey(0)
    k_feats, k_node, k_params = jax.random.split(key, 3)

    # cfg-style constants; spatial sizes chosen so every flattened H*W is a
    # multiple of 128 (lane-dense tiles end to end).
    C_FEATS, C_GRAPH = 4, 8            # input_channels_feats / input_channels_graph
    OUT_NODE, INT_CH = 6, 12           # OUT_NODE_FEATURES / INTERMEDIATE_CHANNELS
    ORIG_SIZE = (32, 64)               # cfg.DATA.IMAGE_SIZE (H, W)
    PRED_RES = (ORIG_SIZE[0] // 2, ORIG_SIZE[1] // 2)
    FEAT_HW = (16, 32)                 # image-feature resolution
    NODE_HW = (8, 16)                  # graph read-out resolution

    image_feats = jax.random.normal(k_feats, (C_FEATS,) + FEAT_HW, jnp.float32)
    node_out = jax.random.normal(k_node, (1, C_GRAPH) + NODE_HW, jnp.float32)
    params = init_params(k_params, C_FEATS, C_GRAPH, OUT_NODE, INT_CH)

    forward = make_readout_forward(params, image_feats.shape, node_out.shape,
                                   PRED_RES, ORIG_SIZE)
    out = jax.block_until_ready(forward(image_feats, node_out))
    assert out.shape == (1, 1) + ORIG_SIZE, out.shape
    assert bool(jnp.all(jnp.isfinite(out)))
    assert bool(jnp.all((out >= 0.0) & (out <= 1.0)))
    print("KERNEL_OK")
</pallas_src>

<mosaic_0001>
module attributes {stable_mosaic.version = 11 : i64} {
  func.func @_readout_kernel(%arg0: memref<8x512xf32, #tpu.memory_space<vmem>>, %arg1: memref<8x128xf32, #tpu.memory_space<vmem>>, %arg2: memref<9x128xf32, #tpu.memory_space<vmem>>, %arg3: memref<8x72xbf16, #tpu.memory_space<vmem>>, %arg4: memref<8x1xf32, #tpu.memory_space<vmem>>, %arg5: memref<8x72xbf16, #tpu.memory_space<vmem>>, %arg6: memref<8x1xf32, #tpu.memory_space<vmem>>, %arg7: memref<8x72xbf16, #tpu.memory_space<vmem>>, %arg8: memref<8x1xf32, #tpu.memory_space<vmem>>, %arg9: memref<128x512xbf16, #tpu.memory_space<vmem>>, %arg10: memref<9x512xf32, #tpu.memory_space<vmem>>, %arg11: memref<16x144xbf16, #tpu.memory_space<vmem>>, %arg12: memref<16x1xf32, #tpu.memory_space<vmem>>, %arg13: memref<16x144xbf16, #tpu.memory_space<vmem>>, %arg14: memref<16x1xf32, #tpu.memory_space<vmem>>, %arg15: memref<16x144xbf16, #tpu.memory_space<vmem>>, %arg16: memref<16x1xf32, #tpu.memory_space<vmem>>, %arg17: memref<1x16xbf16, #tpu.memory_space<vmem>>, %arg18: memref<512x2048xbf16, #tpu.memory_space<vmem>>, %arg19: memref<1x2048xf32, #tpu.memory_space<vmem>>) attributes {dimension_semantics = [], scalar_prefetch = 0 : i64, scratch_operands = 0 : i64, tpu.core_type = #tpu.core_type<tc>} {
    %c0 = arith.constant 0 : index
    %c0_0 = arith.constant 0 : index
    %0 = vector.load %arg1[%c0, %c0_0] : memref<8x128xf32, #tpu.memory_space<vmem>>, vector<8x128xf32>
    %c17_i32 = arith.constant 17 : i32
    %1 = tpu.dynamic_rotate %0 by %c17_i32 dim 1 : vector<8x128xf32>, i32 -> vector<8x128xf32>
    %c0_1 = arith.constant 0 : index
    %c0_2 = arith.constant 0 : index
    %2 = vector.load %arg2[%c0_1, %c0_2] : memref<9x128xf32, #tpu.memory_space<vmem>>, vector<1x128xf32>
    %3 = vector.shape_cast %2 : vector<1x128xf32> to vector<128xf32>
    %4 = vector.shape_cast %3 : vector<128xf32> to vector<1x128xf32>
    %5 = vector.broadcast %4 : vector<1x128xf32> to vector<8x128xf32>
    %6 = arith.mulf %1, %5 : vector<8x128xf32>
    %c16_i32 = arith.constant 16 : i32
    %7 = tpu.dynamic_rotate %0 by %c16_i32 dim 1 : vector<8x128xf32>, i32 -> vector<8x128xf32>
    %c1 = arith.constant 1 : index
    %c0_3 = arith.constant 0 : index
    %8 = vector.load %arg2[%c1, %c0_3] : memref<9x128xf32, #tpu.memory_space<vmem>>, vector<1x128xf32>
    %9 = vector.shape_cast %8 : vector<1x128xf32> to vector<128xf32>
    %10 = vector.shape_cast %9 : vector<128xf32> to vector<1x128xf32>
    %11 = vector.broadcast %10 : vector<1x128xf32> to vector<8x128xf32>
    %12 = arith.mulf %7, %11 : vector<8x128xf32>
    %c15_i32 = arith.constant 15 : i32
    %13 = tpu.dynamic_rotate %0 by %c15_i32 dim 1 : vector<8x128xf32>, i32 -> vector<8x128xf32>
    %c2 = arith.constant 2 : index
    %c0_4 = arith.constant 0 : index
    %14 = vector.load %arg2[%c2, %c0_4] : memref<9x128xf32, #tpu.memory_space<vmem>>, vector<1x128xf32>
    %15 = vector.shape_cast %14 : vector<1x128xf32> to vector<128xf32>
    %16 = vector.shape_cast %15 : vector<128xf32> to vector<1x128xf32>
    %17 = vector.broadcast %16 : vector<1x128xf32> to vector<8x128xf32>
    %18 = arith.mulf %13, %17 : vector<8x128xf32>
    %c1_i32 = arith.constant 1 : i32
    %19 = tpu.dynamic_rotate %0 by %c1_i32 dim 1 : vector<8x128xf32>, i32 -> vector<8x128xf32>
    %c3 = arith.constant 3 : index
    %c0_5 = arith.constant 0 : index
    %20 = vector.load %arg2[%c3, %c0_5] : memref<9x128xf32, #tpu.memory_space<vmem>>, vector<1x128xf32>
    %21 = vector.shape_cast %20 : vector<1x128xf32> to vector<128xf32>
    %22 = vector.shape_cast %21 : vector<128xf32> to vector<1x128xf32>
    %23 = vector.broadcast %22 : vector<1x128xf32> to vector<8x128xf32>
    %24 = arith.mulf %19, %23 : vector<8x128xf32>
    %c4 = arith.constant 4 : index
    %c0_6 = arith.constant 0 : index
    %25 = vector.load %arg2[%c4, %c0_6] : memref<9x128xf32, #tpu.memory_space<vmem>>, vector<1x128xf32>
    %26 = vector.shape_cast %25 : vector<1x128xf32> to vector<128xf32>
    %27 = vector.shape_cast %26 : vector<128xf32> to vector<1x128xf32>
    %28 = vector.broadcast %27 : vector<1x128xf32> to vector<8x128xf32>
    %29 = arith.mulf %0, %28 : vector<8x128xf32>
    %c127_i32 = arith.constant 127 : i32
    %30 = tpu.dynamic_rotate %0 by %c127_i32 dim 1 : vector<8x128xf32>, i32 -> vector<8x128xf32>
    %c5 = arith.constant 5 : index
    %c0_7 = arith.constant 0 : index
    %31 = vector.load %arg2[%c5, %c0_7] : memref<9x128xf32, #tpu.memory_space<vmem>>, vector<1x128xf32>
    %32 = vector.shape_cast %31 : vector<1x128xf32> to vector<128xf32>
    %33 = vector.shape_cast %32 : vector<128xf32> to vector<1x128xf32>
    %34 = vector.broadcast %33 : vector<1x128xf32> to vector<8x128xf32>
    %35 = arith.mulf %30, %34 : vector<8x128xf32>
    %c113_i32 = arith.constant 113 : i32
    %36 = tpu.dynamic_rotate %0 by %c113_i32 dim 1 : vector<8x128xf32>, i32 -> vector<8x128xf32>
    %c6 = arith.constant 6 : index
    %c0_8 = arith.constant 0 : index
    %37 = vector.load %arg2[%c6, %c0_8] : memref<9x128xf32, #tpu.memory_space<vmem>>, vector<1x128xf32>
    %38 = vector.shape_cast %37 : vector<1x128xf32> to vector<128xf32>
    %39 = vector.shape_cast %38 : vector<128xf32> to vector<1x128xf32>
    %40 = vector.broadcast %39 : vector<1x128xf32> to vector<8x128xf32>
    %41 = arith.mulf %36, %40 : vector<8x128xf32>
    %c112_i32 = arith.constant 112 : i32
    %42 = tpu.dynamic_rotate %0 by %c112_i32 dim 1 : vector<8x128xf32>, i32 -> vector<8x128xf32>
    %c7 = arith.constant 7 : index
    %c0_9 = arith.constant 0 : index
    %43 = vector.load %arg2[%c7, %c0_9] : memref<9x128xf32, #tpu.memory_space<vmem>>, vector<1x128xf32>
    %44 = vector.shape_cast %43 : vector<1x128xf32> to vector<128xf32>
    %45 = vector.shape_cast %44 : vector<128xf32> to vector<1x128xf32>
    %46 = vector.broadcast %45 : vector<1x128xf32> to vector<8x128xf32>
    %47 = arith.mulf %42, %46 : vector<8x128xf32>
    %c111_i32 = arith.constant 111 : i32
    %48 = tpu.dynamic_rotate %0 by %c111_i32 dim 1 : vector<8x128xf32>, i32 -> vector<8x128xf32>
    %c8 = arith.constant 8 : index
    %c0_10 = arith.constant 0 : index
    %49 = vector.load %arg2[%c8, %c0_10] : memref<9x128xf32, #tpu.memory_space<vmem>>, vector<1x128xf32>
    %50 = vector.shape_cast %49 : vector<1x128xf32> to vector<128xf32>
    %51 = vector.shape_cast %50 : vector<128xf32> to vector<1x128xf32>
    %52 = vector.broadcast %51 : vector<1x128xf32> to vector<8x128xf32>
    %53 = arith.mulf %48, %52 : vector<8x128xf32>
    %54 = tpu.concatenate %6, %12, %18, %24, %29, %35, %41, %47, %53 in 0 : vector<8x128xf32>, vector<8x128xf32>, vector<8x128xf32>, vector<8x128xf32>, vector<8x128xf32>, vector<8x128xf32>, vector<8x128xf32>, vector<8x128xf32>, vector<8x128xf32> -> vector<72x128xf32>
    %c0_11 = arith.constant 0 : index
    %c0_12 = arith.constant 0 : index
    %55 = vector.load %arg5[%c0_11, %c0_12] : memref<8x72xbf16, #tpu.memory_space<vmem>>, vector<8x72xbf16>
    %56 = arith.truncf %54 : vector<72x128xf32> to vector<72x128xbf16>
    %cst = arith.constant dense<0.000000e+00> : vector<8x128xf32>
    %57 = tpu.matmul %55, %56, %cst {dimension_numbers = #tpu.dot_dimension_numbers<[1], [0], [0], [1], [0, 0, 1, 1], [], []>} : vector<8x72xbf16>, vector<72x128xbf16>, vector<8x128xf32> -> vector<8x128xf32>
    %c0_13 = arith.constant 0 : index
    %c0_14 = arith.constant 0 : index
    %58 = vector.load %arg6[%c0_13, %c0_14] : memref<8x1xf32, #tpu.memory_space<vmem>>, vector<8x1xf32>
    %59 = vector.broadcast %58 : vector<8x1xf32> to vector<8x128xf32>
    %60 = arith.addf %57, %59 : vector<8x128xf32>
    %c0_15 = arith.constant 0 : index
    %c0_16 = arith.constant 0 : index
    %61 = vector.load %arg3[%c0_15, %c0_16] : memref<8x72xbf16, #tpu.memory_space<vmem>>, vector<8x72xbf16>
    %cst_17 = arith.constant 0.000000e+00 : f32
    %62 = vector.broadcast %cst_17 : f32 to vector<72x128xf32>
    %63 = arith.maximumf %54, %62 : vector<72x128xf32>
    %64 = arith.truncf %63 : vector<72x128xf32> to vector<72x128xbf16>
    %cst_18 = arith.constant dense<0.000000e+00> : vector<8x128xf32>
    %65 = tpu.matmul %61, %64, %cst_18 {dimension_numbers = #tpu.dot_dimension_numbers<[1], [0], [0], [1], [0, 0, 1, 1], [], []>} : vector<8x72xbf16>, vector<72x128xbf16>, vector<8x128xf32> -> vector<8x128xf32>
    %c0_19 = arith.constant 0 : index
    %c0_20 = arith.constant 0 : index
    %66 = vector.load %arg4[%c0_19, %c0_20] : memref<8x1xf32, #tpu.memory_space<vmem>>, vector<8x1xf32>
    %67 = vector.broadcast %66 : vector<8x1xf32> to vector<8x128xf32>
    %68 = arith.addf %65, %67 : vector<8x128xf32>
    %cst_21 = arith.constant 0.000000e+00 : f32
    %69 = vector.broadcast %cst_21 : f32 to vector<8x128xf32>
    %70 = arith.maximumf %68, %69 : vector<8x128xf32>
    %c17_i32_22 = arith.constant 17 : i32
    %71 = tpu.dynamic_rotate %70 by %c17_i32_22 dim 1 : vector<8x128xf32>, i32 -> vector<8x128xf32>
    %c0_23 = arith.constant 0 : index
    %c0_24 = arith.constant 0 : index
    %72 = vector.load %arg2[%c0_23, %c0_24] : memref<9x128xf32, #tpu.memory_space<vmem>>, vector<1x128xf32>
    %73 = vector.shape_cast %72 : vector<1x128xf32> to vector<128xf32>
    %74 = vector.shape_cast %73 : vector<128xf32> to vector<1x128xf32>
    %75 = vector.broadcast %74 : vector<1x128xf32> to vector<8x128xf32>
    %76 = arith.mulf %71, %75 : vector<8x128xf32>
    %c16_i32_25 = arith.constant 16 : i32
    %77 = tpu.dynamic_rotate %70 by %c16_i32_25 dim 1 : vector<8x128xf32>, i32 -> vector<8x128xf32>
    %c1_26 = arith.constant 1 : index
    %c0_27 = arith.constant 0 : index
    %78 = vector.load %arg2[%c1_26, %c0_27] : memref<9x128xf32, #tpu.memory_space<vmem>>, vector<1x128xf32>
    %79 = vector.shape_cast %78 : vector<1x128xf32> to vector<128xf32>
    %80 = vector.shape_cast %79 : vector<128xf32> to vector<1x128xf32>
    %81 = vector.broadcast %80 : vector<1x128xf32> to vector<8x128xf32>
    %82 = arith.mulf %77, %81 : vector<8x128xf32>
    %c15_i32_28 = arith.constant 15 : i32
    %83 = tpu.dynamic_rotate %70 by %c15_i32_28 dim 1 : vector<8x128xf32>, i32 -> vector<8x128xf32>
    %c2_29 = arith.constant 2 : index
    %c0_30 = arith.constant 0 : index
    %84 = vector.load %arg2[%c2_29, %c0_30] : memref<9x128xf32, #tpu.memory_space<vmem>>, vector<1x128xf32>
    %85 = vector.shape_cast %84 : vector<1x128xf32> to vector<128xf32>
    %86 = vector.shape_cast %85 : vector<128xf32> to vector<1x128xf32>
    %87 = vector.broadcast %86 : vector<1x128xf32> to vector<8x128xf32>
    %88 = arith.mulf %83, %87 : vector<8x128xf32>
    %c1_i32_31 = arith.constant 1 : i32
    %89 = tpu.dynamic_rotate %70 by %c1_i32_31 dim 1 : vector<8x128xf32>, i32 -> vector<8x128xf32>
    %c3_32 = arith.constant 3 : index
    %c0_33 = arith.constant 0 : index
    %90 = vector.load %arg2[%c3_32, %c0_33] : memref<9x128xf32, #tpu.memory_space<vmem>>, vector<1x128xf32>
    %91 = vector.shape_cast %90 : vector<1x128xf32> to vector<128xf32>
    %92 = vector.shape_cast %91 : vector<128xf32> to vector<1x128xf32>
    %93 = vector.broadcast %92 : vector<1x128xf32> to vector<8x128xf32>
    %94 = arith.mulf %89, %93 : vector<8x128xf32>
    %c4_34 = arith.constant 4 : index
    %c0_35 = arith.constant 0 : index
    %95 = vector.load %arg2[%c4_34, %c0_35] : memref<9x128xf32, #tpu.memory_space<vmem>>, vector<1x128xf32>
    %96 = vector.shape_cast %95 : vector<1x128xf32> to vector<128xf32>
    %97 = vector.shape_cast %96 : vector<128xf32> to vector<1x128xf32>
    %98 = vector.broadcast %97 : vector<1x128xf32> to vector<8x128xf32>
    %99 = arith.mulf %70, %98 : vector<8x128xf32>
    %c127_i32_36 = arith.constant 127 : i32
    %100 = tpu.dynamic_rotate %70 by %c127_i32_36 dim 1 : vector<8x128xf32>, i32 -> vector<8x128xf32>
    %c5_37 = arith.constant 5 : index
    %c0_38 = arith.constant 0 : index
    %101 = vector.load %arg2[%c5_37, %c0_38] : memref<9x128xf32, #tpu.memory_space<vmem>>, vector<1x128xf32>
    %102 = vector.shape_cast %101 : vector<1x128xf32> to vector<128xf32>
    %103 = vector.shape_cast %102 : vector<128xf32> to vector<1x128xf32>
    %104 = vector.broadcast %103 : vector<1x128xf32> to vector<8x128xf32>
    %105 = arith.mulf %100, %104 : vector<8x128xf32>
    %c113_i32_39 = arith.constant 113 : i32
    %106 = tpu.dynamic_rotate %70 by %c113_i32_39 dim 1 : vector<8x128xf32>, i32 -> vector<8x128xf32>
    %c6_40 = arith.constant 6 : index
    %c0_41 = arith.constant 0 : index
    %107 = vector.load %arg2[%c6_40, %c0_41] : memref<9x128xf32, #tpu.memory_space<vmem>>, vector<1x128xf32>
    %108 = vector.shape_cast %107 : vector<1x128xf32> to vector<128xf32>
    %109 = vector.shape_cast %108 : vector<128xf32> to vector<1x128xf32>
    %110 = vector.broadcast %109 : vector<1x128xf32> to vector<8x128xf32>
    %111 = arith.mulf %106, %110 : vector<8x128xf32>
    %c112_i32_42 = arith.constant 112 : i32
    %112 = tpu.dynamic_rotate %70 by %c112_i32_42 dim 1 : vector<8x128xf32>, i32 -> vector<8x128xf32>
    %c7_43 = arith.constant 7 : index
    %c0_44 = arith.constant 0 : index
    %113 = vector.load %arg2[%c7_43, %c0_44] : memref<9x128xf32, #tpu.memory_space<vmem>>, vector<1x128xf32>
    %114 = vector.shape_cast %113 : vector<1x128xf32> to vector<128xf32>
    %115 = vector.shape_cast %114 : vector<128xf32> to vector<1x128xf32>
    %116 = vector.broadcast %115 : vector<1x128xf32> to vector<8x128xf32>
    %117 = arith.mulf %112, %116 : vector<8x128xf32>
    %c111_i32_45 = arith.constant 111 : i32
    %118 = tpu.dynamic_rotate %70 by %c111_i32_45 dim 1 : vector<8x128xf32>, i32 -> vector<8x128xf32>
    %c8_46 = arith.constant 8 : index
    %c0_47 = arith.constant 0 : index
    %119 = vector.load %arg2[%c8_46, %c0_47] : memref<9x128xf32, #tpu.memory_space<vmem>>, vector<1x128xf32>
    %120 = vector.shape_cast %119 : vector<1x128xf32> to vector<128xf32>
    %121 = vector.shape_cast %120 : vector<128xf32> to vector<1x128xf32>
    %122 = vector.broadcast %121 : vector<1x128xf32> to vector<8x128xf32>
    %123 = arith.mulf %118, %122 : vector<8x128xf32>
    %124 = tpu.concatenate %76, %82, %88, %94, %99, %105, %111, %117, %123 in 0 : vector<8x128xf32>, vector<8x128xf32>, vector<8x128xf32>, vector<8x128xf32>, vector<8x128xf32>, vector<8x128xf32>, vector<8x128xf32>, vector<8x128xf32>, vector<8x128xf32> -> vector<72x128xf32>
    %c0_48 = arith.constant 0 : index
    %c0_49 = arith.constant 0 : index
    %125 = vector.load %arg7[%c0_48, %c0_49] : memref<8x72xbf16, #tpu.memory_space<vmem>>, vector<8x72xbf16>
    %126 = arith.truncf %124 : vector<72x128xf32> to vector<72x128xbf16>
    %cst_50 = arith.constant dense<0.000000e+00> : vector<8x128xf32>
    %127 = tpu.matmul %125, %126, %cst_50 {dimension_numbers = #tpu.dot_dimension_numbers<[1], [0], [0], [1], [0, 0, 1, 1], [], []>} : vector<8x72xbf16>, vector<72x128xbf16>, vector<8x128xf32> -> vector<8x128xf32>
    %c0_51 = arith.constant 0 : index
    %c0_52 = arith.constant 0 : index
    %128 = vector.load %arg8[%c0_51, %c0_52] : memref<8x1xf32, #tpu.memory_space<vmem>>, vector<8x1xf32>
    %129 = vector.broadcast %128 : vector<8x1xf32> to vector<8x128xf32>
    %130 = arith.addf %127, %129 : vector<8x128xf32>
    %131 = arith.addf %60, %130 : vector<8x128xf32>
    %132 = arith.truncf %131 : vector<8x128xf32> to vector<8x128xbf16>
    %c0_53 = arith.constant 0 : index
    %c0_54 = arith.constant 0 : index
    %133 = vector.load %arg9[%c0_53, %c0_54] : memref<128x512xbf16, #tpu.memory_space<vmem>>, vector<128x512xbf16>
    %cst_55 = arith.constant dense<0.000000e+00> : vector<8x512xf32>
    %134 = tpu.matmul %132, %133, %cst_55 {dimension_numbers = #tpu.dot_dimension_numbers<[1], [0], [0], [1], [0, 0, 1, 1], [], []>} : vector<8x128xbf16>, vector<128x512xbf16>, vector<8x512xf32> -> vector<8x512xf32>
    %c0_56 = arith.constant 0 : index
    %c0_57 = arith.constant 0 : index
    %135 = vector.load %arg0[%c0_56, %c0_57] : memref<8x512xf32, #tpu.memory_space<vmem>>, vector<8x512xf32>
    %136 = tpu.concatenate %135, %134 in 0 : vector<8x512xf32>, vector<8x512xf32> -> vector<16x512xf32>
    %c33_i32 = arith.constant 33 : i32
    %137 = tpu.dynamic_rotate %136 by %c33_i32 dim 1 : vector<16x512xf32>, i32 -> vector<16x512xf32>
    %c0_58 = arith.constant 0 : index
    %c0_59 = arith.constant 0 : index
    %138 = vector.load %arg10[%c0_58, %c0_59] : memref<9x512xf32, #tpu.memory_space<vmem>>, vector<1x512xf32>
    %139 = vector.shape_cast %138 : vector<1x512xf32> to vector<512xf32>
    %140 = vector.shape_cast %139 : vector<512xf32> to vector<1x512xf32>
    %141 = vector.broadcast %140 : vector<1x512xf32> to vector<16x512xf32>
    %142 = arith.mulf %137, %141 : vector<16x512xf32>
    %c32_i32 = arith.constant 32 : i32
    %143 = tpu.dynamic_rotate %136 by %c32_i32 dim 1 : vector<16x512xf32>, i32 -> vector<16x512xf32>
    %c1_60 = arith.constant 1 : index
    %c0_61 = arith.constant 0 : index
    %144 = vector.load %arg10[%c1_60, %c0_61] : memref<9x512xf32, #tpu.memory_space<vmem>>, vector<1x512xf32>
    %145 = vector.shape_cast %144 : vector<1x512xf32> to vector<512xf32>
    %146 = vector.shape_cast %145 : vector<512xf32> to vector<1x512xf32>
    %147 = vector.broadcast %146 : vector<1x512xf32> to vector<16x512xf32>
    %148 = arith.mulf %143, %147 : vector<16x512xf32>
    %c31_i32 = arith.constant 31 : i32
    %149 = tpu.dynamic_rotate %136 by %c31_i32 dim 1 : vector<16x512xf32>, i32 -> vector<16x512xf32>
    %c2_62 = arith.constant 2 : index
    %c0_63 = arith.constant 0 : index
    %150 = vector.load %arg10[%c2_62, %c0_63] : memref<9x512xf32, #tpu.memory_space<vmem>>, vector<1x512xf32>
    %151 = vector.shape_cast %150 : vector<1x512xf32> to vector<512xf32>
    %152 = vector.shape_cast %151 : vector<512xf32> to vector<1x512xf32>
    %153 = vector.broadcast %152 : vector<1x512xf32> to vector<16x512xf32>
    %154 = arith.mulf %149, %153 : vector<16x512xf32>
    %c1_i32_64 = arith.constant 1 : i32
    %155 = tpu.dynamic_rotate %136 by %c1_i32_64 dim 1 : vector<16x512xf32>, i32 -> vector<16x512xf32>
    %c3_65 = arith.constant 3 : index
    %c0_66 = arith.constant 0 : index
    %156 = vector.load %arg10[%c3_65, %c0_66] : memref<9x512xf32, #tpu.memory_space<vmem>>, vector<1x512xf32>
    %157 = vector.shape_cast %156 : vector<1x512xf32> to vector<512xf32>
    %158 = vector.shape_cast %157 : vector<512xf32> to vector<1x512xf32>
    %159 = vector.broadcast %158 : vector<1x512xf32> to vector<16x512xf32>
    %160 = arith.mulf %155, %159 : vector<16x512xf32>
    %c4_67 = arith.constant 4 : index
    %c0_68 = arith.constant 0 : index
    %161 = vector.load %arg10[%c4_67, %c0_68] : memref<9x512xf32, #tpu.memory_space<vmem>>, vector<1x512xf32>
    %162 = vector.shape_cast %161 : vector<1x512xf32> to vector<512xf32>
    %163 = vector.shape_cast %162 : vector<512xf32> to vector<1x512xf32>
    %164 = vector.broadcast %163 : vector<1x512xf32> to vector<16x512xf32>
    %165 = arith.mulf %136, %164 : vector<16x512xf32>
    %c511_i32 = arith.constant 511 : i32
    %166 = tpu.dynamic_rotate %136 by %c511_i32 dim 1 : vector<16x512xf32>, i32 -> vector<16x512xf32>
    %c5_69 = arith.constant 5 : index
    %c0_70 = arith.constant 0 : index
    %167 = vector.load %arg10[%c5_69, %c0_70] : memref<9x512xf32, #tpu.memory_space<vmem>>, vector<1x512xf32>
    %168 = vector.shape_cast %167 : vector<1x512xf32> to vector<512xf32>
    %169 = vector.shape_cast %168 : vector<512xf32> to vector<1x512xf32>
    %170 = vector.broadcast %169 : vector<1x512xf32> to vector<16x512xf32>
    %171 = arith.mulf %166, %170 : vector<16x512xf32>
    %c481_i32 = arith.constant 481 : i32
    %172 = tpu.dynamic_rotate %136 by %c481_i32 dim 1 : vector<16x512xf32>, i32 -> vector<16x512xf32>
    %c6_71 = arith.constant 6 : index
    %c0_72 = arith.constant 0 : index
    %173 = vector.load %arg10[%c6_71, %c0_72] : memref<9x512xf32, #tpu.memory_space<vmem>>, vector<1x512xf32>
    %174 = vector.shape_cast %173 : vector<1x512xf32> to vector<512xf32>
    %175 = vector.shape_cast %174 : vector<512xf32> to vector<1x512xf32>
    %176 = vector.broadcast %175 : vector<1x512xf32> to vector<16x512xf32>
    %177 = arith.mulf %172, %176 : vector<16x512xf32>
    %c480_i32 = arith.constant 480 : i32
    %178 = tpu.dynamic_rotate %136 by %c480_i32 dim 1 : vector<16x512xf32>, i32 -> vector<16x512xf32>
    %c7_73 = arith.constant 7 : index
    %c0_74 = arith.constant 0 : index
    %179 = vector.load %arg10[%c7_73, %c0_74] : memref<9x512xf32, #tpu.memory_space<vmem>>, vector<1x512xf32>
    %180 = vector.shape_cast %179 : vector<1x512xf32> to vector<512xf32>
    %181 = vector.shape_cast %180 : vector<512xf32> to vector<1x512xf32>
    %182 = vector.broadcast %181 : vector<1x512xf32> to vector<16x512xf32>
    %183 = arith.mulf %178, %182 : vector<16x512xf32>
    %c479_i32 = arith.constant 479 : i32
    %184 = tpu.dynamic_rotate %136 by %c479_i32 dim 1 : vector<16x512xf32>, i32 -> vector<16x512xf32>
    %c8_75 = arith.constant 8 : index
    %c0_76 = arith.constant 0 : index
    %185 = vector.load %arg10[%c8_75, %c0_76] : memref<9x512xf32, #tpu.memory_space<vmem>>, vector<1x512xf32>
    %186 = vector.shape_cast %185 : vector<1x512xf32> to vector<512xf32>
    %187 = vector.shape_cast %186 : vector<512xf32> to vector<1x512xf32>
    %188 = vector.broadcast %187 : vector<1x512xf32> to vector<16x512xf32>
    %189 = arith.mulf %184, %188 : vector<16x512xf32>
    %190 = tpu.concatenate %142, %148, %154, %160, %165, %171, %177, %183, %189 in 0 : vector<16x512xf32>, vector<16x512xf32>, vector<16x512xf32>, vector<16x512xf32>, vector<16x512xf32>, vector<16x512xf32>, vector<16x512xf32>, vector<16x512xf32>, vector<16x512xf32> -> vector<144x512xf32>
    %c0_77 = arith.constant 0 : index
    %c0_78 = arith.constant 0 : index
    %191 = vector.load %arg13[%c0_77, %c0_78] : memref<16x144xbf16, #tpu.memory_space<vmem>>, vector<16x144xbf16>
    %192 = arith.truncf %190 : vector<144x512xf32> to vector<144x512xbf16>
    %cst_79 = arith.constant dense<0.000000e+00> : vector<16x512xf32>
    %193 = tpu.matmul %191, %192, %cst_79 {dimension_numbers = #tpu.dot_dimension_numbers<[1], [0], [0], [1], [0, 0, 1, 1], [], []>} : vector<16x144xbf16>, vector<144x512xbf16>, vector<16x512xf32> -> vector<16x512xf32>
    %c0_80 = arith.constant 0 : index
    %c0_81 = arith.constant 0 : index
    %194 = vector.load %arg14[%c0_80, %c0_81] : memref<16x1xf32, #tpu.memory_space<vmem>>, vector<16x1xf32>
    %195 = vector.broadcast %194 : vector<16x1xf32> to vector<16x512xf32>
    %196 = arith.addf %193, %195 : vector<16x512xf32>
    %c0_82 = arith.constant 0 : index
    %c0_83 = arith.constant 0 : index
    %197 = vector.load %arg11[%c0_82, %c0_83] : memref<16x144xbf16, #tpu.memory_space<vmem>>, vector<16x144xbf16>
    %cst_84 = arith.constant 0.000000e+00 : f32
    %198 = vector.broadcast %cst_84 : f32 to vector<144x512xf32>
    %199 = arith.maximumf %190, %198 : vector<144x512xf32>
    %200 = arith.truncf %199 : vector<144x512xf32> to vector<144x512xbf16>
    %cst_85 = arith.constant dense<0.000000e+00> : vector<16x512xf32>
    %201 = tpu.matmul %197, %200, %cst_85 {dimension_numbers = #tpu.dot_dimension_numbers<[1], [0], [0], [1], [0, 0, 1, 1], [], []>} : vector<16x144xbf16>, vector<144x512xbf16>, vector<16x512xf32> -> vector<16x512xf32>
    %c0_86 = arith.constant 0 : index
    %c0_87 = arith.constant 0 : index
    %202 = vector.load %arg12[%c0_86, %c0_87] : memref<16x1xf32, #tpu.memory_space<vmem>>, vector<16x1xf32>
    %203 = vector.broadcast %202 : vector<16x1xf32> to vector<16x512xf32>
    %204 = arith.addf %201, %203 : vector<16x512xf32>
    %cst_88 = arith.constant 0.000000e+00 : f32
    %205 = vector.broadcast %cst_88 : f32 to vector<16x512xf32>
    %206 = arith.maximumf %204, %205 : vector<16x512xf32>
    %c33_i32_89 = arith.constant 33 : i32
    %207 = tpu.dynamic_rotate %206 by %c33_i32_89 dim 1 : vector<16x512xf32>, i32 -> vector<16x512xf32>
    %c0_90 = arith.constant 0 : index
    %c0_91 = arith.constant 0 : index
    %208 = vector.load %arg10[%c0_90, %c0_91] : memref<9x512xf32, #tpu.memory_space<vmem>>, vector<1x512xf32>
    %209 = vector.shape_cast %208 : vector<1x512xf32> to vector<512xf32>
    %210 = vector.shape_cast %209 : vector<512xf32> to vector<1x512xf32>
    %211 = vector.broadcast %210 : vector<1x512xf32> to vector<16x512xf32>
    %212 = arith.mulf %207, %211 : vector<16x512xf32>
    %c32_i32_92 = arith.constant 32 : i32
    %213 = tpu.dynamic_rotate %206 by %c32_i32_92 dim 1 : vector<16x512xf32>, i32 -> vector<16x512xf32>
    %c1_93 = arith.constant 1 : index
    %c0_94 = arith.constant 0 : index
    %214 = vector.load %arg10[%c1_93, %c0_94] : memref<9x512xf32, #tpu.memory_space<vmem>>, vector<1x512xf32>
    %215 = vector.shape_cast %214 : vector<1x512xf32> to vector<512xf32>
    %216 = vector.shape_cast %215 : vector<512xf32> to vector<1x512xf32>
    %217 = vector.broadcast %216 : vector<1x512xf32> to vector<16x512xf32>
    %218 = arith.mulf %213, %217 : vector<16x512xf32>
    %c31_i32_95 = arith.constant 31 : i32
    %219 = tpu.dynamic_rotate %206 by %c31_i32_95 dim 1 : vector<16x512xf32>, i32 -> vector<16x512xf32>
    %c2_96 = arith.constant 2 : index
    %c0_97 = arith.constant 0 : index
    %220 = vector.load %arg10[%c2_96, %c0_97] : memref<9x512xf32, #tpu.memory_space<vmem>>, vector<1x512xf32>
    %221 = vector.shape_cast %220 : vector<1x512xf32> to vector<512xf32>
    %222 = vector.shape_cast %221 : vector<512xf32> to vector<1x512xf32>
    %223 = vector.broadcast %222 : vector<1x512xf32> to vector<16x512xf32>
    %224 = arith.mulf %219, %223 : vector<16x512xf32>
    %c1_i32_98 = arith.constant 1 : i32
    %225 = tpu.dynamic_rotate %206 by %c1_i32_98 dim 1 : vector<16x512xf32>, i32 -> vector<16x512xf32>
    %c3_99 = arith.constant 3 : index
    %c0_100 = arith.constant 0 : index
    %226 = vector.load %arg10[%c3_99, %c0_100] : memref<9x512xf32, #tpu.memory_space<vmem>>, vector<1x512xf32>
    %227 = vector.shape_cast %226 : vector<1x512xf32> to vector<512xf32>
    %228 = vector.shape_cast %227 : vector<512xf32> to vector<1x512xf32>
    %229 = vector.broadcast %228 : vector<1x512xf32> to vector<16x512xf32>
    %230 = arith.mulf %225, %229 : vector<16x512xf32>
    %c4_101 = arith.constant 4 : index
    %c0_102 = arith.constant 0 : index
    %231 = vector.load %arg10[%c4_101, %c0_102] : memref<9x512xf32, #tpu.memory_space<vmem>>, vector<1x512xf32>
    %232 = vector.shape_cast %231 : vector<1x512xf32> to vector<512xf32>
    %233 = vector.shape_cast %232 : vector<512xf32> to vector<1x512xf32>
    %234 = vector.broadcast %233 : vector<1x512xf32> to vector<16x512xf32>
    %235 = arith.mulf %206, %234 : vector<16x512xf32>
    %c511_i32_103 = arith.constant 511 : i32
    %236 = tpu.dynamic_rotate %206 by %c511_i32_103 dim 1 : vector<16x512xf32>, i32 -> vector<16x512xf32>
    %c5_104 = arith.constant 5 : index
    %c0_105 = arith.constant 0 : index
    %237 = vector.load %arg10[%c5_104, %c0_105] : memref<9x512xf32, #tpu.memory_space<vmem>>, vector<1x512xf32>
    %238 = vector.shape_cast %237 : vector<1x512xf32> to vector<512xf32>
    %239 = vector.shape_cast %238 : vector<512xf32> to vector<1x512xf32>
    %240 = vector.broadcast %239 : vector<1x512xf32> to vector<16x512xf32>
    %241 = arith.mulf %236, %240 : vector<16x512xf32>
    %c481_i32_106 = arith.constant 481 : i32
    %242 = tpu.dynamic_rotate %206 by %c481_i32_106 dim 1 : vector<16x512xf32>, i32 -> vector<16x512xf32>
    %c6_107 = arith.constant 6 : index
    %c0_108 = arith.constant 0 : index
    %243 = vector.load %arg10[%c6_107, %c0_108] : memref<9x512xf32, #tpu.memory_space<vmem>>, vector<1x512xf32>
    %244 = vector.shape_cast %243 : vector<1x512xf32> to vector<512xf32>
    %245 = vector.shape_cast %244 : vector<512xf32> to vector<1x512xf32>
    %246 = vector.broadcast %245 : vector<1x512xf32> to vector<16x512xf32>
    %247 = arith.mulf %242, %246 : vector<16x512xf32>
    %c480_i32_109 = arith.constant 480 : i32
    %248 = tpu.dynamic_rotate %206 by %c480_i32_109 dim 1 : vector<16x512xf32>, i32 -> vector<16x512xf32>
    %c7_110 = arith.constant 7 : index
    %c0_111 = arith.constant 0 : index
    %249 = vector.load %arg10[%c7_110, %c0_111] : memref<9x512xf32, #tpu.memory_space<vmem>>, vector<1x512xf32>
    %250 = vector.shape_cast %249 : vector<1x512xf32> to vector<512xf32>
    %251 = vector.shape_cast %250 : vector<512xf32> to vector<1x512xf32>
    %252 = vector.broadcast %251 : vector<1x512xf32> to vector<16x512xf32>
    %253 = arith.mulf %248, %252 : vector<16x512xf32>
    %c479_i32_112 = arith.constant 479 : i32
    %254 = tpu.dynamic_rotate %206 by %c479_i32_112 dim 1 : vector<16x512xf32>, i32 -> vector<16x512xf32>
    %c8_113 = arith.constant 8 : index
    %c0_114 = arith.constant 0 : index
    %255 = vector.load %arg10[%c8_113, %c0_114] : memref<9x512xf32, #tpu.memory_space<vmem>>, vector<1x512xf32>
    %256 = vector.shape_cast %255 : vector<1x512xf32> to vector<512xf32>
    %257 = vector.shape_cast %256 : vector<512xf32> to vector<1x512xf32>
    %258 = vector.broadcast %257 : vector<1x512xf32> to vector<16x512xf32>
    %259 = arith.mulf %254, %258 : vector<16x512xf32>
    %260 = tpu.concatenate %212, %218, %224, %230, %235, %241, %247, %253, %259 in 0 : vector<16x512xf32>, vector<16x512xf32>, vector<16x512xf32>, vector<16x512xf32>, vector<16x512xf32>, vector<16x512xf32>, vector<16x512xf32>, vector<16x512xf32>, vector<16x512xf32> -> vector<144x512xf32>
    %c0_115 = arith.constant 0 : index
    %c0_116 = arith.constant 0 : index
    %261 = vector.load %arg15[%c0_115, %c0_116] : memref<16x144xbf16, #tpu.memory_space<vmem>>, vector<16x144xbf16>
    %262 = arith.truncf %260 : vector<144x512xf32> to vector<144x512xbf16>
    %cst_117 = arith.constant dense<0.000000e+00> : vector<16x512xf32>
    %263 = tpu.matmul %261, %262, %cst_117 {dimension_numbers = #tpu.dot_dimension_numbers<[1], [0], [0], [1], [0, 0, 1, 1], [], []>} : vector<16x144xbf16>, vector<144x512xbf16>, vector<16x512xf32> -> vector<16x512xf32>
    %c0_118 = arith.constant 0 : index
    %c0_119 = arith.constant 0 : index
    %264 = vector.load %arg16[%c0_118, %c0_119] : memref<16x1xf32, #tpu.memory_space<vmem>>, vector<16x1xf32>
    %265 = vector.broadcast %264 : vector<16x1xf32> to vector<16x512xf32>
    %266 = arith.addf %263, %265 : vector<16x512xf32>
    %267 = arith.addf %196, %266 : vector<16x512xf32>
    %c0_120 = arith.constant 0 : index
    %c0_121 = arith.constant 0 : index
    %268 = vector.load %arg17[%c0_120, %c0_121] : memref<1x16xbf16, #tpu.memory_space<vmem>>, vector<1x16xbf16>
    %269 = arith.truncf %267 : vector<16x512xf32> to vector<16x512xbf16>
    %cst_122 = arith.constant dense<0.000000e+00> : vector<1x512xf32>
    %270 = tpu.matmul %268, %269, %cst_122 {dimension_numbers = #tpu.dot_dimension_numbers<[1], [0], [0], [1], [0, 0, 1, 1], [], []>} : vector<1x16xbf16>, vector<16x512xbf16>, vector<1x512xf32> -> vector<1x512xf32>
    %271 = arith.truncf %270 : vector<1x512xf32> to vector<1x512xbf16>
    %c0_123 = arith.constant 0 : index
    %c0_124 = arith.constant 0 : index
    %272 = vector.load %arg18[%c0_123, %c0_124] : memref<512x2048xbf16, #tpu.memory_space<vmem>>, vector<512x2048xbf16>
    %cst_125 = arith.constant dense<0.000000e+00> : vector<1x2048xf32>
    %273 = tpu.matmul %271, %272, %cst_125 {dimension_numbers = #tpu.dot_dimension_numbers<[1], [0], [0], [1], [0, 0, 1, 1], [], []>} : vector<1x512xbf16>, vector<512x2048xbf16>, vector<1x2048xf32> -> vector<1x2048xf32>
    %cst_126 = arith.constant -0.125039071 : f32
    %274 = vector.broadcast %cst_126 : f32 to vector<1x2048xf32>
    %275 = arith.addf %273, %274 : vector<1x2048xf32>
    %276 = arith.negf %275 : vector<1x2048xf32>
    %277 = math.exp %276 : vector<1x2048xf32>
    %cst_127 = arith.constant 1.000000e+00 : f32
    %278 = vector.broadcast %cst_127 : f32 to vector<1x2048xf32>
    %279 = arith.addf %278, %277 : vector<1x2048xf32>
    %280 = arith.divf %278, %279 : vector<1x2048xf32>
    %c0_128 = arith.constant 0 : index
    %c0_129 = arith.constant 0 : index
    %281 = vector.load %arg19[%c0_128, %c0_129] : memref<1x2048xf32, #tpu.memory_space<vmem>>, vector<1x2048xf32>
    tpu.vector_store %arg19[%c0_128, %c0_129], %280 {strides = array<i32>} : memref<1x2048xf32, #tpu.memory_space<vmem>>, vector<1x2048xf32>,
    return
  }
}

</mosaic_0001>

<llo_original>
// kernel: squeeze.1
$region0: #{squeeze.1}
  %s0 = inlined_call_operand.hbm [shape: f32[1,8,8,16], index: 0, kind: input, shape index: {}]
  %s1 = inlined_call_operand.vmem [shape: f32[8,128], index: 1, kind: output, shape index: {}]
  $region1: #{squeeze.1} parent=0
    #allocation0 [shape = 'u8[32768]{0}', space=vmem, size = 0x8000, scoped, tag = 'operand span for operand 0']
    #allocation1 [shape = 's32[1]{0}', space=sflag, size = 0x4, scoped, tag = 'scoped memory for squeeze.1']
    %2 = vsyncpa [#allocation1], 0
    %4 = vsyncadd [#allocation1], 0
    %s6 = sshll.u32 %s0, 4
    %s7 = int_to_ptr.hbm [resolvable:$true] %s6
    %s8 = sshll.u32 [#allocation0], 4
    %s9 = int_to_ptr.vmem [resolvable:$true] %s8
    %11 = dma.hbm_to_vmem [thread:$0]  %s7, 1024, %s9, [#allocation1]
    %13 = dma.done [#allocation1], 1024
    %v14 = vld [vmem:[#allocation0] ss:$8 sm:$0xf]
    %v15 = vld [vmem:[#allocation0] ss:$8 sm:$0xf0]
    %vm16 = vcmask 1047556
    %v17 = vsel %vm16, %v15, %v14
    %vm18 = vcmask 130048
    %19 = vst.msk [vmem:[%s1] sm:$0xff] %vm18, %v17
    %s20 = scalar_lea.vmem [#allocation0], 7
    %v21 = vld [vmem:[%s20] ss:$8 sm:$0xf]
    %s22 = scalar_lea.vmem [#allocation0], 7
    %v23 = vld [vmem:[%s22] ss:$8 sm:$0xf0]
    %vm24 = vcmask 1047556
    %v25 = vsel %vm24, %v23, %v21
    %26 = vrot.lane.b32.xlu0 %v25, 112
    %v27 = vpop.permute.xlu0 %26
    %vm28 = vcmask 1048448
    %29 = vst.msk [vmem:[%s1] sm:$0xff] %vm28, %v27
    %s30 = scalar_lea.vmem [#allocation0], 6
    %v31 = vld [vmem:[%s30] ss:$8 sm:$0xf]
    %s32 = scalar_lea.vmem [#allocation0], 6
    %v33 = vld [vmem:[%s32] ss:$8 sm:$0xf0]
    %vm34 = vcmask 1047556
    %v35 = vsel %vm34, %v33, %v31
    %36 = vrot.lane.b32.xlu0 %v35, 96
    %v37 = vpop.permute.xlu0 %36
    %vm38 = vcmask 917248
    %39 = vst.msk [vmem:[%s1] sm:$0xff] %vm38, %v37
    %s40 = scalar_lea.vmem [#allocation0], 5
    %v41 = vld [vmem:[%s40] ss:$8 sm:$0xf]
    %s42 = scalar_lea.vmem [#allocation0], 5
    %v43 = vld [vmem:[%s42] ss:$8 sm:$0xf0]
    %vm44 = vcmask 1047556
    %v45 = vsel %vm44, %v43, %v41
    %46 = vrot.lane.b32.xlu0 %v45, 80
    %v47 = vpop.permute.xlu0 %46
    %vm48 = vcmask 786048
    %49 = vst.msk [vmem:[%s1] sm:$0xff] %vm48, %v47
    %s50 = scalar_lea.vmem [#allocation0], 4
    %v51 = vld [vmem:[%s50] ss:$8 sm:$0xf]
    %s52 = scalar_lea.vmem [#allocation0], 4
    %v53 = vld [vmem:[%s52] ss:$8 sm:$0xf0]
    %vm54 = vcmask 1047556
    %v55 = vsel %vm54, %v53, %v51
    %56 = vrot.lane.b32.xlu0 %v55, 64
    %v57 = vpop.permute.xlu0 %56
    %vm58 = vcmask 654848
    %59 = vst.msk [vmem:[%s1] sm:$0xff] %vm58, %v57
    %s60 = scalar_lea.vmem [#allocation0], 3
    %v61 = vld [vmem:[%s60] ss:$8 sm:$0xf]
    %s62 = scalar_lea.vmem [#allocation0], 3
    %v63 = vld [vmem:[%s62] ss:$8 sm:$0xf0]
    %vm64 = vcmask 1047556
    %v65 = vsel %vm64, %v63, %v61
    %66 = vrot.lane.b32.xlu0 %v65, 48
    %v67 = vpop.permute.xlu0 %66
    %vm68 = vcmask 523648
    %69 = vst.msk [vmem:[%s1] sm:$0xff] %vm68, %v67
    %s70 = scalar_lea.vmem [#allocation0], 2
    %v71 = vld [vmem:[%s70] ss:$8 sm:$0xf]
    %s72 = scalar_lea.vmem [#allocation0], 2
    %v73 = vld [vmem:[%s72] ss:$8 sm:$0xf0]
    %vm74 = vcmask 1047556
    %v75 = vsel %vm74, %v73, %v71
    %76 = vrot.lane.b32.xlu0 %v75, 32
    %v77 = vpop.permute.xlu0 %76
    %vm78 = vcmask 392448
    %79 = vst.msk [vmem:[%s1] sm:$0xff] %vm78, %v77
    %s80 = scalar_lea.vmem [#allocation0], 1
    %v81 = vld [vmem:[%s80] ss:$8 sm:$0xf]
    %s82 = scalar_lea.vmem [#allocation0], 1
    %v83 = vld [vmem:[%s82] ss:$8 sm:$0xf0]
    %vm84 = vcmask 1047556
    %v85 = vsel %vm84, %v83, %v81
    %86 = vrot.lane.b32.xlu0 %v85, 16
    %v87 = vpop.permute.xlu0 %86
    %vm88 = vcmask 261248
    %89 = vst.msk [vmem:[%s1] sm:$0xff] %vm88, %v87
    %90 = vsyncpa [#allocation1], 1

// kernel: forward.1
$region0: #{forward.1}
  #allocation0 [shape = 'u32[]', space=smem, size = 0x4, offset = 0x4, fixed_abs, tag = 'smem constant byte address 0x4 - core index']
  #allocation1 [shape = 'u32[72,128]{1,0:T(1,128)}', space=vmem, size = 0x9000, scoped, tag = 'internal scratch']
  %s0 = inlined_call_operand.vmem [shape: f32[8,512], index: 0, kind: input, shape index: {}]
  %s1 = inlined_call_operand.vmem [shape: f32[8,128], index: 1, kind: input, shape index: {}]
  %s2 = inlined_call_operand.hbm [shape: f32[9,128], index: 2, kind: input, shape index: {}]
  %s3 = inlined_call_operand.hbm [shape: bf16[8,72], index: 3, kind: input, shape index: {}]
  %s4 = inlined_call_operand.hbm [shape: f32[8,1], index: 4, kind: input, shape index: {}]
  %s5 = inlined_call_operand.hbm [shape: bf16[8,72], index: 5, kind: input, shape index: {}]
  %s6 = inlined_call_operand.hbm [shape: f32[8,1], index: 6, kind: input, shape index: {}]
  %s7 = inlined_call_operand.hbm [shape: bf16[8,72], index: 7, kind: input, shape index: {}]
  %s8 = inlined_call_operand.hbm [shape: f32[8,1], index: 8, kind: input, shape index: {}]
  %s9 = inlined_call_operand.hbm [shape: bf16[128,512], index: 9, kind: input, shape index: {}]
  %s10 = inlined_call_operand.hbm [shape: f32[9,512], index: 10, kind: input, shape index: {}]
  %s11 = inlined_call_operand.hbm [shape: bf16[16,144], index: 11, kind: input, shape index: {}]
  %s12 = inlined_call_operand.hbm [shape: f32[16,1], index: 12, kind: input, shape index: {}]
  %s13 = inlined_call_operand.hbm [shape: bf16[16,144], index: 13, kind: input, shape index: {}]
  %s14 = inlined_call_operand.hbm [shape: f32[16,1], index: 14, kind: input, shape index: {}]
  %s15 = inlined_call_operand.hbm [shape: bf16[16,144], index: 15, kind: input, shape index: {}]
  %s16 = inlined_call_operand.hbm [shape: f32[16,1], index: 16, kind: input, shape index: {}]
  %s17 = inlined_call_operand.hbm [shape: bf16[1,16], index: 17, kind: input, shape index: {}]
  %s18 = inlined_call_operand.hbm [shape: bf16[512,2048], index: 18, kind: input, shape index: {}]
  %s19 = inlined_call_operand.vmem [shape: f32[1,2048], index: 19, kind: output, shape index: {}]
  %s20 = sld [smem:[#allocation0]]
  $region154: #{forward.1} parent=0
    _
  %s22 = ssub.s32 1, %s20
  %s23 = scalar_select 0, %s22, %s20
  $region1: #{forward.1} parent=0
    #allocation2 [shape = 'u8[8192]{0}', space=vmem, size = 0x2000, scoped, tag = 'input window, operand 2, single buffered']
    #allocation3 [shape = 's32[1]{0}', space=sflag, size = 0x4, scoped, tag = 'scoped memory for forward.1']
    #allocation4 [shape = 'u8[2048]{0}', space=vmem, size = 0x800, scoped, tag = 'input window, operand 3, single buffered']
    #allocation5 [shape = 's32[1]{0}', space=sflag, size = 0x4, scoped, tag = 'scoped memory for forward.1']
    #allocation6 [shape = 'u8[4096]{0}', space=vmem, size = 0x1000, scoped, tag = 'input window, operand 4, single buffered']
    #allocation7 [shape = 'u8[2048]{0}', space=vmem, size = 0x800, scoped, tag = 'input window, operand 5, single buffered']
    #allocation8 [shape = 's32[1]{0}', space=sflag, size = 0x4, scoped, tag = 'scoped memory for forward.1']
    #allocation9 [shape = 'u8[4096]{0}', space=vmem, size = 0x1000, scoped, tag = 'input window, operand 6, single buffered']
    #allocation10 [shape = 'u8[2048]{0}', space=vmem, size = 0x800, scoped, tag = 'input window, operand 7, single buffered']
    #allocation11 [shape = 's32[1]{0}', space=sflag, size = 0x4, scoped, tag = 'scoped memory for forward.1']
    #allocation12 [shape = 'u8[4096]{0}', space=vmem, size = 0x1000, scoped, tag = 'input window, operand 8, single buffered']
    #allocation13 [shape = 'u8[131072]{0}', space=vmem, size = 0x20000, scoped, tag = 'input window, operand 9, single buffered']
    #allocation14 [shape = 's32[1]{0}', space=sflag, size = 0x4, scoped, tag = 'scoped memory for forward.1']
    #allocation15 [shape = 'u8[32768]{0}', space=vmem, size = 0x8000, scoped, tag = 'input window, operand 10, single buffered']
    #allocation16 [shape = 'u8[8192]{0}', space=vmem, size = 0x2000, scoped, tag = 'input window, operand 11, single buffered']
    #allocation17 [shape = 's32[1]{0}', space=sflag, size = 0x4, scoped, tag = 'scoped memory for forward.1']
    #allocation18 [shape = 'u8[8192]{0}', space=vmem, size = 0x2000, scoped, tag = 'input window, operand 12, single buffered']
    #allocation19 [shape = 'u8[8192]{0}', space=vmem, size = 0x2000, scoped, tag = 'input window, operand 13, single buffered']
    #allocation20 [shape = 's32[1]{0}', space=sflag, size = 0x4, scoped, tag = 'scoped memory for forward.1']
    #allocation21 [shape = 'u8[8192]{0}', space=vmem, size = 0x2000, scoped, tag = 'input window, operand 14, single buffered']
    #allocation22 [shape = 'u8[8192]{0}', space=vmem, size = 0x2000, scoped, tag = 'input window, operand 15, single buffered']
    #allocation23 [shape = 's32[1]{0}', space=sflag, size = 0x4, scoped, tag = 'scoped memory for forward.1']
    #allocation24 [shape = 'u8[8192]{0}', space=vmem, size = 0x2000, scoped, tag = 'input window, operand 16, single buffered']
    #allocation25 [shape = 'u8[512]{0}', space=vmem, size = 0x400, scoped, tag = 'input window, operand 17, single buffered']
    #allocation26 [shape = 's32[1]{0}', space=sflag, size = 0x4, scoped, tag = 'scoped memory for forward.1']
    #allocation27 [shape = 'u8[2097152]{0}', space=vmem, size = 0x200000, scoped, tag = 'input window, operand 18, single buffered']
    %24 = vsyncpa [#allocation3], 0
    %25 = vsyncpa [#allocation5], 0
    %26 = vsyncpa [#allocation8], 0
    %27 = vsyncpa [#allocation11], 0
    %28 = vsyncpa [#allocation14], 0
    %29 = vsyncpa [#allocation17], 0
    %30 = vsyncpa [#allocation20], 0
    %31 = vsyncpa [#allocation23], 0
    %32 = vsyncpa [#allocation26], 0
    // Predicated region
    $region2: #{forward.1} parent=1 // pred_check
      _
    $region3: #{forward.1} parent=1 // pred_check_branch
      %34 = sbr.rel (0) target = $region5
    $region4: #{forward.1} parent=1 // pred_region
      _
    $region5: #{forward.1} parent=1 // pred_fallthru
      _
    // Predicated region
    $region6: #{forward.1} parent=1 // pred_check
      _
    $region7: #{forward.1} parent=1 // pred_check_branch
      %36 = sbr.rel (0) target = $region9
    $region8: #{forward.1} parent=1 // pred_region
      _
    $region9: #{forward.1} parent=1 // pred_fallthru
      _
    // Predicated region
    $region10: #{forward.1} parent=1 // pred_check
      _
    $region11: #{forward.1} parent=1 // pred_check_branch
      %38 = sbr.rel (0) target = $region13
    $region12: #{forward.1} parent=1 // pred_region
      %40 = vsyncadd [#allocation3], 0
      %s41 = sshll.u32 %s2, 4
      %s42 = int_to_ptr.hbm [resolvable:$true] %s41
      %s43 = sshll.u32 [#allocation2], 4
      %s44 = int_to_ptr.vmem [resolvable:$true] %s43
      %49 = dma.hbm_to_vmem [thread:$0]  %s42, 256, %s44, [#allocation3], 128, 128, 8
    $region13: #{forward.1} parent=1 // pred_fallthru
      _
    // Predicated region
    $region14: #{forward.1} parent=1 // pred_check
      _
    $region15: #{forward.1} parent=1 // pred_check_branch
      %51 = sbr.rel (0) target = $region17
    $region16: #{forward.1} parent=1 // pred_region
      %53 = vsyncadd [#allocation5], 0
      %s55 = sshll.u32 %s3, 4
      %s56 = int_to_ptr.hbm [resolvable:$true] %s55
      %s57 = sshll.u32 [#allocation4], 4
      %s58 = int_to_ptr.vmem [resolvable:$true] %s57
      %60 = dma.hbm_to_vmem [thread:$0]  %s56, 64, %s58, [#allocation5]
    $region17: #{forward.1} parent=1 // pred_fallthru
      _
    // Predicated region
    $region18: #{forward.1} parent=1 // pred_check
      _
    $region19: #{forward.1} parent=1 // pred_check_branch
      %62 = sbr.rel (0) target = $region21
    $region20: #{forward.1} parent=1 // pred_region
      %64 = vsyncadd [#allocation5], 0
      %s66 = sshll.u32 %s4, 4
      %s67 = int_to_ptr.hbm [resolvable:$true] %s66
      %s68 = sshll.u32 [#allocation6], 4
      %s69 = int_to_ptr.vmem [resolvable:$true] %s68
      %71 = dma.hbm_to_vmem [thread:$0]  %s67, 128, %s69, [#allocation5]
    $region21: #{forward.1} parent=1 // pred_fallthru
      _
    // Predicated region
    $region22: #{forward.1} parent=1 // pred_check
      _
    $region23: #{forward.1} parent=1 // pred_check_branch
      %73 = sbr.rel (0) target = $region25
    $region24: #{forward.1} parent=1 // pred_region
      %75 = vsyncadd [#allocation8], 0
      %s77 = sshll.u32 %s5, 4
      %s78 = int_to_ptr.hbm [resolvable:$true] %s77
      %s79 = sshll.u32 [#allocation7], 4
      %s80 = int_to_ptr.vmem [resolvable:$true] %s79
      %82 = dma.hbm_to_vmem [thread:$0]  %s78, 64, %s80, [#allocation8]
    $region25: #{forward.1} parent=1 // pred_fallthru
      _
    // Predicated region
    $region26: #{forward.1} parent=1 // pred_check
      _
    $region27: #{forward.1} parent=1 // pred_check_branch
      %84 = sbr.rel (0) target = $region29
    $region28: #{forward.1} parent=1 // pred_region
      %86 = vsyncadd [#allocation8], 0
      %s88 = sshll.u32 %s6, 4
      %s89 = int_to_ptr.hbm [resolvable:$true] %s88
      %s90 = sshll.u32 [#allocation9], 4
      %s91 = int_to_ptr.vmem [resolvable:$true] %s90
      %93 = dma.hbm_to_vmem [thread:$0]  %s89, 128, %s91, [#allocation8]
    $region29: #{forward.1} parent=1 // pred_fallthru
      _
    // Predicated region
    $region30: #{forward.1} parent=1 // pred_check
      _
    $region31: #{forward.1} parent=1 // pred_check_branch
      %95 = sbr.rel (0) target = $region33
    $region32: #{forward.1} parent=1 // pred_region
      %97 = vsyncadd [#allocation11], 0
      %s99 = sshll.u32 %s7, 4
      %s100 = int_to_ptr.hbm [resolvable:$true] %s99
      %s101 = sshll.u32 [#allocation10], 4
      %s102 = int_to_ptr.vmem [resolvable:$true] %s101
      %104 = dma.hbm_to_vmem [thread:$0]  %s100, 64, %s102, [#allocation11]
    $region33: #{forward.1} parent=1 // pred_fallthru
      _
    // Predicated region
    $region34: #{forward.1} parent=1 // pred_check
      _
    $region35: #{forward.1} parent=1 // pred_check_branch
      %106 = sbr.rel (0) target = $region37
    $region36: #{forward.1} parent=1 // pred_region
      %108 = vsyncadd [#allocation11], 0
      %s110 = sshll.u32 %s8, 4
      %s111 = int_to_ptr.hbm [resolvable:$true] %s110
      %s112 = sshll.u32 [#allocation12], 4
      %s113 = int_to_ptr.vmem [resolvable:$true] %s112
      %115 = dma.hbm_to_vmem [thread:$0]  %s111, 128, %s113, [#allocation11]
    $region37: #{forward.1} parent=1 // pred_fallthru
      _
    // Predicated region
    $region38: #{forward.1} parent=1 // pred_check
      _
    $region39: #{forward.1} parent=1 // pred_check_branch
      %117 = sbr.rel (0) target = $region41
    $region40: #{forward.1} parent=1 // pred_region
      %119 = vsyncadd [#allocation14], 0
      %s120 = sshll.u32 %s9, 4
      %s121 = int_to_ptr.hbm [resolvable:$true] %s120
      %s122 = sshll.u32 [#allocation13], 4
      %s123 = int_to_ptr.vmem [resolvable:$true] %s122
      %128 = dma.hbm_to_vmem [thread:$0]  %s121, 4096, %s123, [#allocation14], 256, 256, 16
    $region41: #{forward.1} parent=1 // pred_fallthru
      _
    // Predicated region
    $region42: #{forward.1} parent=1 // pred_check
      _
    $region43: #{forward.1} parent=1 // pred_check_branch
      %130 = sbr.rel (0) target = $region45
    $region44: #{forward.1} parent=1 // pred_region
      %132 = vsyncadd [#allocation14], 0
      %s133 = sshll.u32 %s10, 4
      %s134 = int_to_ptr.hbm [resolvable:$true] %s133
      %s135 = sshll.u32 [#allocation15], 4
      %s136 = int_to_ptr.vmem [resolvable:$true] %s135
      %141 = dma.hbm_to_vmem [thread:$0]  %s134, 1024, %s136, [#allocation14], 512, 512, 32
    $region45: #{forward.1} parent=1 // pred_fallthru
      _
    // Predicated region
    $region46: #{forward.1} parent=1 // pred_check
      _
    $region47: #{forward.1} parent=1 // pred_check_branch
      %143 = sbr.rel (0) target = $region49
    $region48: #{forward.1} parent=1 // pred_region
      %145 = vsyncadd [#allocation17], 0
      %s146 = sshll.u32 %s11, 4
      %s147 = int_to_ptr.hbm [resolvable:$true] %s146
      %s148 = sshll.u32 [#allocation16], 4
      %s149 = int_to_ptr.vmem [resolvable:$true] %s148
      %154 = dma.hbm_to_vmem [thread:$0]  %s147, 256, %s149, [#allocation17], 128, 128, 8
    $region49: #{forward.1} parent=1 // pred_fallthru
      _
    // Predicated region
    $region50: #{forward.1} parent=1 // pred_check
      _
    $region51: #{forward.1} parent=1 // pred_check_branch
      %156 = sbr.rel (0) target = $region53
    $region52: #{forward.1} parent=1 // pred_region
      %158 = vsyncadd [#allocation17], 0
      %s159 = sshll.u32 %s12, 4
      %s160 = int_to_ptr.hbm [resolvable:$true] %s159
      %s161 = sshll.u32 [#allocation18], 4
      %s162 = int_to_ptr.vmem [resolvable:$true] %s161
      %167 = dma.hbm_to_vmem [thread:$0]  %s160, 256, %s162, [#allocation17], 128, 128, 8
    $region53: #{forward.1} parent=1 // pred_fallthru
      _
    // Predicated region
    $region54: #{forward.1} parent=1 // pred_check
      _
    $region55: #{forward.1} parent=1 // pred_check_branch
      %169 = sbr.rel (0) target = $region57
    $region56: #{forward.1} parent=1 // pred_region
      %171 = vsyncadd [#allocation20], 0
      %s172 = sshll.u32 %s13, 4
      %s173 = int_to_ptr.hbm [resolvable:$true] %s172
      %s174 = sshll.u32 [#allocation19], 4
      %s175 = int_to_ptr.vmem [resolvable:$true] %s174
      %180 = dma.hbm_to_vmem [thread:$0]  %s173, 256, %s175, [#allocation20], 128, 128, 8
    $region57: #{forward.1} parent=1 // pred_fallthru
      _
    // Predicated region
    $region58: #{forward.1} parent=1 // pred_check
      _
    $region59: #{forward.1} parent=1 // pred_check_branch
      %182 = sbr.rel (0) target = $region61
    $region60: #{forward.1} parent=1 // pred_region
      %184 = vsyncadd [#allocation20], 0
      %s185 = sshll.u32 %s14, 4
      %s186 = int_to_ptr.hbm [resolvable:$true] %s185
      %s187 = sshll.u32 [#allocation21], 4
      %s188 = int_to_ptr.vmem [resolvable:$true] %s187
      %193 = dma.hbm_to_vmem [thread:$0]  %s186, 256, %s188, [#allocation20], 128, 128, 8
    $region61: #{forward.1} parent=1 // pred_fallthru
      _
    // Predicated region
    $region62: #{forward.1} parent=1 // pred_check
      _
    $region63: #{forward.1} parent=1 // pred_check_branch
      %195 = sbr.rel (0) target = $region65
    $region64: #{forward.1} parent=1 // pred_region
      %197 = vsyncadd [#allocation23], 0
      %s198 = sshll.u32 %s15, 4
      %s199 = int_to_ptr.hbm [resolvable:$true] %s198
      %s200 = sshll.u32 [#allocation22], 4
      %s201 = int_to_ptr.vmem [resolvable:$true] %s200
      %206 = dma.hbm_to_vmem [thread:$0]  %s199, 256, %s201, [#allocation23], 128, 128, 8
    $region65: #{forward.1} parent=1 // pred_fallthru
      _
    // Predicated region
    $region66: #{forward.1} parent=1 // pred_check
      _
    $region67: #{forward.1} parent=1 // pred_check_branch
      %208 = sbr.rel (0) target = $region69
    $region68: #{forward.1} parent=1 // pred_region
      %210 = vsyncadd [#allocation23], 0
      %s211 = sshll.u32 %s16, 4
      %s212 = int_to_ptr.hbm [resolvable:$true] %s211
      %s213 = sshll.u32 [#allocation24], 4
      %s214 = int_to_ptr.vmem [resolvable:$true] %s213
      %219 = dma.hbm_to_vmem [thread:$0]  %s212, 256, %s214, [#allocation23], 128, 128, 8
    $region69: #{forward.1} parent=1 // pred_fallthru
      _
    // Predicated region
    $region70: #{forward.1} parent=1 // pred_check
      _
    $region71: #{forward.1} parent=1 // pred_check_branch
      %221 = sbr.rel (0) target = $region73
    $region72: #{forward.1} parent=1 // pred_region
      %223 = vsyncadd [#allocation26], 0
      %s225 = sshll.u32 %s17, 4
      %s226 = int_to_ptr.hbm [resolvable:$true] %s225
      %s227 = sshll.u32 [#allocation25], 4
      %s228 = int_to_ptr.vmem [resolvable:$true] %s227
      %230 = dma.hbm_to_vmem [thread:$0]  %s226, 16, %s228, [#allocation26]
    $region73: #{forward.1} parent=1 // pred_fallthru
      _
    // Predicated region
    $region74: #{forward.1} parent=1 // pred_check
      _
    $region75: #{forward.1} parent=1 // pred_check_branch
      %232 = sbr.rel (0) target = $region77
    $region76: #{forward.1} parent=1 // pred_region
      %234 = vsyncadd [#allocation26], 0
      %s235 = sshll.u32 %s18, 4
      %s236 = int_to_ptr.hbm [resolvable:$true] %s235
      %s237 = sshll.u32 [#allocation27], 4
      %s238 = int_to_ptr.vmem [resolvable:$true] %s237
      %243 = dma.hbm_to_vmem [thread:$0]  %s236, 65536, %s238, [#allocation26], 1024, 1024, 64
    $region77: #{forward.1} parent=1 // pred_fallthru
      _
    // Predicated region
    $region78: #{forward.1} parent=1 // pred_check
      _
    $region79: #{forward.1} parent=1 // pred_check_branch
      %245 = sbr.rel (0) target = $region81
    $region80: #{forward.1} parent=1 // pred_region
      %247 = dma.done [#allocation3], 256
    $region81: #{forward.1} parent=1 // pred_fallthru
      _
    // Predicated region
    $region82: #{forward.1} parent=1 // pred_check
      _
    $region83: #{forward.1} parent=1 // pred_check_branch
      %249 = sbr.rel (0) target = $region85
    $region84: #{forward.1} parent=1 // pred_region
      %251 = dma.done [#allocation5], 64
    $region85: #{forward.1} parent=1 // pred_fallthru
      _
    // Predicated region
    $region86: #{forward.1} parent=1 // pred_check
      _
    $region87: #{forward.1} parent=1 // pred_check_branch
      %253 = sbr.rel (0) target = $region89
    $region88: #{forward.1} parent=1 // pred_region
      %255 = dma.done [#allocation5], 128
    $region89: #{forward.1} parent=1 // pred_fallthru
      _
    // Predicated region
    $region90: #{forward.1} parent=1 // pred_check
      _
    $region91: #{forward.1} parent=1 // pred_check_branch
      %257 = sbr.rel (0) target = $region93
    $region92: #{forward.1} parent=1 // pred_region
      %259 = dma.done [#allocation8], 64
    $region93: #{forward.1} parent=1 // pred_fallthru
      _
    // Predicated region
    $region94: #{forward.1} parent=1 // pred_check
      _
    $region95: #{forward.1} parent=1 // pred_check_branch
      %261 = sbr.rel (0) target = $region97
    $region96: #{forward.1} parent=1 // pred_region
      %263 = dma.done [#allocation8], 128
    $region97: #{forward.1} parent=1 // pred_fallthru
      _
    // Predicated region
    $region98: #{forward.1} parent=1 // pred_check
      _
    $region99: #{forward.1} parent=1 // pred_check_branch
      %265 = sbr.rel (0) target = $region101
    $region100: #{forward.1} parent=1 // pred_region
      %267 = dma.done [#allocation11], 64
    $region101: #{forward.1} parent=1 // pred_fallthru
      _
    // Predicated region
    $region102: #{forward.1} parent=1 // pred_check
      _
    $region103: #{forward.1} parent=1 // pred_check_branch
      %269 = sbr.rel (0) target = $region105
    $region104: #{forward.1} parent=1 // pred_region
      %271 = dma.done [#allocation11], 128
    $region105: #{forward.1} parent=1 // pred_fallthru
      _
    // Predicated region
    $region106: #{forward.1} parent=1 // pred_check
      _
    $region107: #{forward.1} parent=1 // pred_check_branch
      %273 = sbr.rel (0) target = $region109
    $region108: #{forward.1} parent=1 // pred_region
      %275 = dma.done [#allocation14], 4096
    $region109: #{forward.1} parent=1 // pred_fallthru
      _
    // Predicated region
    $region110: #{forward.1} parent=1 // pred_check
      _
    $region111: #{forward.1} parent=1 // pred_check_branch
      %277 = sbr.rel (0) target = $region113
    $region112: #{forward.1} parent=1 // pred_region
      %279 = dma.done [#allocation14], 1024
    $region113: #{forward.1} parent=1 // pred_fallthru
      _
    // Predicated region
    $region114: #{forward.1} parent=1 // pred_check
      _
    $region115: #{forward.1} parent=1 // pred_check_branch
      %281 = sbr.rel (0) target = $region117
    $region116: #{forward.1} parent=1 // pred_region
      %283 = dma.done [#allocation17], 256
    $region117: #{forward.1} parent=1 // pred_fallthru
      _
    // Predicated region
    $region118: #{forward.1} parent=1 // pred_check
      _
    $region119: #{forward.1} parent=1 // pred_check_branch
      %285 = sbr.rel (0) target = $region121
    $region120: #{forward.1} parent=1 // pred_region
      %287 = dma.done [#allocation17], 256
    $region121: #{forward.1} parent=1 // pred_fallthru
      _
    // Predicated region
    $region122: #{forward.1} parent=1 // pred_check
      _
    $region123: #{forward.1} parent=1 // pred_check_branch
      %289 = sbr.rel (0) target = $region125
    $region124: #{forward.1} parent=1 // pred_region
      %291 = dma.done [#allocation20], 256
    $region125: #{forward.1} parent=1 // pred_fallthru
      _
    // Predicated region
    $region126: #{forward.1} parent=1 // pred_check
      _
    $region127: #{forward.1} parent=1 // pred_check_branch
      %293 = sbr.rel (0) target = $region129
    $region128: #{forward.1} parent=1 // pred_region
      %295 = dma.done [#allocation20], 256
    $region129: #{forward.1} parent=1 // pred_fallthru
      _
    // Predicated region
    $region130: #{forward.1} parent=1 // pred_check
      _
    $region131: #{forward.1} parent=1 // pred_check_branch
      %297 = sbr.rel (0) target = $region133
    $region132: #{forward.1} parent=1 // pred_region
      %299 = dma.done [#allocation23], 256
    $region133: #{forward.1} parent=1 // pred_fallthru
      _
    // Predicated region
    $region134: #{forward.1} parent=1 // pred_check
      _
    $region135: #{forward.1} parent=1 // pred_check_branch
      %301 = sbr.rel (0) target = $region137
    $region136: #{forward.1} parent=1 // pred_region
      %303 = dma.done [#allocation23], 256
    $region137: #{forward.1} parent=1 // pred_fallthru
      _
    // Predicated region
    $region138: #{forward.1} parent=1 // pred_check
      _
    $region139: #{forward.1} parent=1 // pred_check_branch
      %305 = sbr.rel (0) target = $region141
    $region140: #{forward.1} parent=1 // pred_region
      %307 = dma.done [#allocation26], 16
    $region141: #{forward.1} parent=1 // pred_fallthru
      _
    // Predicated region
    $region142: #{forward.1} parent=1 // pred_check
      _
    $region143: #{forward.1} parent=1 // pred_check_branch
      %309 = sbr.rel (0) target = $region145
    $region144: #{forward.1} parent=1 // pred_region
      %311 = dma.done [#allocation26], 65536
    $region145: #{forward.1} parent=1 // pred_fallthru
      _
    %v313 = vld [vmem:[%s1] sm:$0xff]
    %314 = vrot.lane.b32.xlu0 %v313, 17
    %v315 = vpop.permute.xlu0 %314
    %v316 = vld [vmem:[#allocation2] sm:$0x1]
    %v317 = vperm.slane %v316, 0
    %v318 = vmul.f32 %v315, %v317
    %319 = vrot.lane.b32.xlu0 %v313, 16
    %v320 = vpop.permute.xlu0 %319
    %v321 = vld [vmem:[#allocation2 + $0x1] sm:$0x1]
    %v322 = vperm.slane %v321, 0
    %v323 = vmul.f32 %v320, %v322
    %324 = vrot.lane.b32.xlu0 %v313, 15
    %v325 = vpop.permute.xlu0 %324
    %v326 = vld [vmem:[#allocation2 + $0x2] sm:$0x1]
    %v327 = vperm.slane %v326, 0
    %v328 = vmul.f32 %v325, %v327
    %329 = vrot.lane.b32.xlu0 %v313, 1
    %v330 = vpop.permute.xlu0 %329
    %v331 = vld [vmem:[#allocation2 + $0x3] sm:$0x1]
    %v332 = vperm.slane %v331, 0
    %v333 = vmul.f32 %v330, %v332
    %v334 = vld [vmem:[#allocation2 + $0x4] sm:$0x1]
    %v335 = vperm.slane %v334, 0
    %v336 = vmul.f32 %v313, %v335
    %337 = vrot.lane.b32.xlu0 %v313, 127
    %v338 = vpop.permute.xlu0 %337
    %v339 = vld [vmem:[#allocation2 + $0x5] sm:$0x1]
    %v340 = vperm.slane %v339, 0
    %v341 = vmul.f32 %v338, %v340
    %342 = vrot.lane.b32.xlu0 %v313, 113
    %v343 = vpop.permute.xlu0 %342
    %v344 = vld [vmem:[#allocation2 + $0x6] sm:$0x1]
    %v345 = vperm.slane %v344, 0
    %v346 = vmul.f32 %v343, %v345
    %347 = vrot.lane.b32.xlu0 %v313, 112
    %v348 = vpop.permute.xlu0 %347
    %v349 = vld [vmem:[#allocation2 + $0x7] sm:$0x1]
    %v350 = vperm.slane %v349, 0
    %v351 = vmul.f32 %v348, %v350
    %352 = vrot.lane.b32.xlu0 %v313, 111
    %v353 = vpop.permute.xlu0 %352
    %v354 = vld [vmem:[#allocation2 + $0x8] sm:$0x1]
    %v355 = vperm.slane %v354, 0
    %v356 = vmul.f32 %v353, %v355
    %v357 = vld [vmem:[#allocation7] sm:$0xf]
    %v358 = vpack.c.bf16 %v323, %v318
    %v359 = vpack.c.bf16 %v333, %v328
    %v360 = vpack.c.bf16 %v341, %v336
    %v361 = vpack.c.bf16 %v351, %v346
    %v362 = vpack.c.bf16 %v356, %v356
    %v363 = vld [vmem:[#allocation9] sm:$0xff]
    %365 = vset.pattern.permute.xlu0 0
    %366 = vperm.xlu0 %365, %v363
    %v367 = vpop.permute.xlu0 %366
    %vm369 = vcmask 588800
    %v371 = vsel %vm369, %v357, 0
    %vm373 = vcmask 1043456
    %v375 = vsel %vm373, %v362, 0
    %377 = vmatpush.bf16.msra.mxu0 0
    %378 = vmatpush.bf16.msra.mxu0 0
    %379 = vmatpush.bf16.msra.mxu0 0
    %380 = vmatpush.bf16.msra.mxu0 %v375
    %381 = vmatpush.bf16.msra.mxu0 %v361
    %382 = vmatpush.bf16.msra.mxu0 %v360
    %383 = vmatpush.bf16.msra.mxu0 %v359
    %384 = vmatpush.bf16.msra.mxu0 %v358
    %385 = vmatmul.bf16.gmra.mxu0 %v371
    %v386 = vpop.f32.mrf.mxu0
    %v387 = vadd.f32 %v367, %v386
    %v388 = vpop.f32.mrf.mxu0
    %389 = vdwg.mxu0
    %v390 = vld [vmem:[#allocation4] sm:$0xf]
    %v391 = vmax.f32 %v318, 0.0
    %v392 = vmax.f32 %v323, 0.0
    %v393 = vmax.f32 %v328, 0.0
    %v394 = vmax.f32 %v333, 0.0
    %v395 = vmax.f32 %v336, 0.0
    %v396 = vmax.f32 %v341, 0.0
    %v397 = vmax.f32 %v346, 0.0
    %v398 = vmax.f32 %v351, 0.0
    %v399 = vmax.f32 %v356, 0.0
    %v400 = vpack.c.bf16 %v392, %v391
    %v401 = vpack.c.bf16 %v394, %v393
    %v402 = vpack.c.bf16 %v396, %v395
    %v403 = vpack.c.bf16 %v398, %v397
    %v404 = vpack.c.bf16 %v399, %v399
    %v405 = vld [vmem:[#allocation6] sm:$0xff]
    %407 = vset.pattern.permute.xlu0 0
    %408 = vperm.xlu0 %407, %v405
    %v409 = vpop.permute.xlu0 %408
    %v412 = vsel %vm369, %v390, 0
    %v415 = vsel %vm373, %v404, 0
    %417 = vmatpush.bf16.msra.mxu0 0
    %418 = vmatpush.bf16.msra.mxu0 0
    %419 = vmatpush.bf16.msra.mxu0 0
    %420 = vmatpush.bf16.msra.mxu0 %v415
    %421 = vmatpush.bf16.msra.mxu0 %v403
    %422 = vmatpush.bf16.msra.mxu0 %v402
    %423 = vmatpush.bf16.msra.mxu0 %v401
    %424 = vmatpush.bf16.msra.mxu0 %v400
    %425 = vmatmul.bf16.gmra.mxu0 %v412
    %v426 = vpop.f32.mrf.mxu0
    %v427 = vadd.f32 %v409, %v426
    %v428 = vpop.f32.mrf.mxu0
    %429 = vdwg.mxu0
    %v430 = vmax.f32 %v427, 0.0
    %431 = vrot.lane.b32.xlu0 %v430, 17
    %v432 = vpop.permute.xlu0 %431
    %v433 = vmul.f32 %v432, %v317
    %434 = vrot.lane.b32.xlu0 %v430, 16
    %v435 = vpop.permute.xlu0 %434
    %v436 = vmul.f32 %v435, %v322
    %437 = vrot.lane.b32.xlu0 %v430, 15
    %v438 = vpop.permute.xlu0 %437
    %v439 = vmul.f32 %v438, %v327
    %440 = vrot.lane.b32.xlu0 %v430, 1
    %v441 = vpop.permute.xlu0 %440
    %v442 = vmul.f32 %v441, %v332
    %v443 = vmul.f32 %v430, %v335
    %444 = vrot.lane.b32.xlu0 %v430, 127
    %v445 = vpop.permute.xlu0 %444
    %v446 = vmul.f32 %v445, %v340
    %447 = vrot.lane.b32.xlu0 %v430, 113
    %v448 = vpop.permute.xlu0 %447
    %v449 = vmul.f32 %v448, %v345
    %450 = vrot.lane.b32.xlu0 %v430, 112
    %v451 = vpop.permute.xlu0 %450
    %v452 = vmul.f32 %v451, %v350
    %453 = vrot.lane.b32.xlu0 %v430, 111
    %v454 = vpop.permute.xlu0 %453
    %v455 = vmul.f32 %v454, %v355
    %v456 = vld [vmem:[#allocation10] sm:$0xf]
    %v457 = vpack.c.bf16 %v436, %v433
    %v458 = vpack.c.bf16 %v442, %v439
    %v459 = vpack.c.bf16 %v446, %v443
    %v460 = vpack.c.bf16 %v452, %v449
    %v461 = vpack.c.bf16 %v455, %v455
    %v462 = vld [vmem:[#allocation12] sm:$0xff]
    %464 = vset.pattern.permute.xlu0 0
    %465 = vperm.xlu0 %464, %v462
    %v466 = vpop.permute.xlu0 %465
    %v469 = vsel %vm369, %v456, 0
    %v472 = vsel %vm373, %v461, 0
    %474 = vmatpush.bf16.msra.mxu0 0
    %475 = vmatpush.bf16.msra.mxu0 0
    %476 = vmatpush.bf16.msra.mxu0 0
    %477 = vmatpush.bf16.msra.mxu0 %v472
    %478 = vmatpush.bf16.msra.mxu0 %v460
    %479 = vmatpush.bf16.msra.mxu0 %v459
    %480 = vmatpush.bf16.msra.mxu0 %v458
    %481 = vmatpush.bf16.msra.mxu0 %v457
    %482 = vmatmul.bf16.gmra.mxu0 %v469
    %v483 = vpop.f32.mrf.mxu0
    %v484 = vadd.f32 %v466, %v483
    %v485 = vpop.f32.mrf.mxu0
    %486 = vdwg.mxu0
    %v487 = vadd.f32 %v387, %v484
    %v488 = vpack.c.bf16 %v487, %v487
    %v489 = vld [vmem:[#allocation13] sm:$0xff]
    %v490 = vld [vmem:[#allocation13 + $0x8] sm:$0xff]
    %v491 = vld [vmem:[#allocation13 + $0x10] sm:$0xff]
    %v492 = vld [vmem:[#allocation13 + $0x18] sm:$0xff]
    %v493 = vld [vmem:[#allocation13 + $0x20] sm:$0xff]
    %v494 = vld [vmem:[#allocation13 + $0x28] sm:$0xff]
    %v495 = vld [vmem:[#allocation13 + $0x30] sm:$0xff]
    %v496 = vld [vmem:[#allocation13 + $0x38] sm:$0xff]
    %v497 = vld [vmem:[#allocation13 + $0x40] sm:$0xff]
    %v498 = vld [vmem:[#allocation13 + $0x48] sm:$0xff]
    %v499 = vld [vmem:[#allocation13 + $0x50] sm:$0xff]
    %v500 = vld [vmem:[#allocation13 + $0x58] sm:$0xff]
    %v501 = vld [vmem:[#allocation13 + $0x60] sm:$0xff]
    %v502 = vld [vmem:[#allocation13 + $0x68] sm:$0xff]
    %v503 = vld [vmem:[#allocation13 + $0x70] sm:$0xff]
    %v504 = vld [vmem:[#allocation13 + $0x78] sm:$0xff]
    %v505 = vld [vmem:[#allocation13 + $0x80] sm:$0xff]
    %v506 = vld [vmem:[#allocation13 + $0x88] sm:$0xff]
    %v507 = vld [vmem:[#allocation13 + $0x90] sm:$0xff]
    %v508 = vld [vmem:[#allocation13 + $0x98] sm:$0xff]
    %v509 = vld [vmem:[#allocation13 + $0xa0] sm:$0xff]
    %v510 = vld [vmem:[#allocation13 + $0xa8] sm:$0xff]
    %v511 = vld [vmem:[#allocation13 + $0xb0] sm:$0xff]
    %v512 = vld [vmem:[#allocation13 + $0xb8] sm:$0xff]
    %v513 = vld [vmem:[#allocation13 + $0xc0] sm:$0xff]
    %v514 = vld [vmem:[#allocation13 + $0xc8] sm:$0xff]
    %v515 = vld [vmem:[#allocation13 + $0xd0] sm:$0xff]
    %v516 = vld [vmem:[#allocation13 + $0xd8] sm:$0xff]
    %v517 = vld [vmem:[#allocation13 + $0xe0] sm:$0xff]
    %v518 = vld [vmem:[#allocation13 + $0xe8] sm:$0xff]
    %v519 = vld [vmem:[#allocation13 + $0xf0] sm:$0xff]
    %v520 = vld [vmem:[#allocation13 + $0xf8] sm:$0xff]
    %v553 = vunpack.c.l.b16 %v489
    %v554 = vunpack.c.h.b16 %v489
    %v555 = vunpack.c.l.b16 %v490
    %v556 = vunpack.c.h.b16 %v490
    %v557 = vunpack.c.l.b16 %v491
    %v558 = vunpack.c.h.b16 %v491
    %v559 = vunpack.c.l.b16 %v492
    %v560 = vunpack.c.h.b16 %v492
    %v561 = vunpack.c.l.b16 %v493
    %v562 = vunpack.c.h.b16 %v493
    %v563 = vunpack.c.l.b16 %v494
    %v564 = vunpack.c.h.b16 %v494
    %v565 = vunpack.c.l.b16 %v495
    %v566 = vunpack.c.h.b16 %v495
    %v567 = vunpack.c.l.b16 %v496
    %v568 = vunpack.c.h.b16 %v496
    %v569 = vunpack.c.l.b16 %v497
    %v570 = vunpack.c.h.b16 %v497
    %v571 = vunpack.c.l.b16 %v498
    %v572 = vunpack.c.h.b16 %v498
    %v573 = vunpack.c.l.b16 %v499
    %v574 = vunpack.c.h.b16 %v499
    %v575 = vunpack.c.l.b16 %v500
    %v576 = vunpack.c.h.b16 %v500
    %v577 = vunpack.c.l.b16 %v501
    %v578 = vunpack.c.h.b16 %v501
    %v579 = vunpack.c.l.b16 %v502
    %v580 = vunpack.c.h.b16 %v502
    %v581 = vunpack.c.l.b16 %v503
    %v582 = vunpack.c.h.b16 %v503
    %v583 = vunpack.c.l.b16 %v504
    %v584 = vunpack.c.h.b16 %v504
    %v585 = vunpack.c.l.b16 %v505
    %v586 = vunpack.c.h.b16 %v505
    %v587 = vunpack.c.l.b16 %v506
    %v588 = vunpack.c.h.b16 %v506
    %v589 = vunpack.c.l.b16 %v507
    %v590 = vunpack.c.h.b16 %v507
    %v591 = vunpack.c.l.b16 %v508
    %v592 = vunpack.c.h.b16 %v508
    %v593 = vunpack.c.l.b16 %v509
    %v594 = vunpack.c.h.b16 %v509
    %v595 = vunpack.c.l.b16 %v510
    %v596 = vunpack.c.h.b16 %v510
    %v597 = vunpack.c.l.b16 %v511
    %v598 = vunpack.c.h.b16 %v511
    %v599 = vunpack.c.l.b16 %v512
    %v600 = vunpack.c.h.b16 %v512
    %v601 = vunpack.c.l.b16 %v513
    %v602 = vunpack.c.h.b16 %v513
    %v603 = vunpack.c.l.b16 %v514
    %v604 = vunpack.c.h.b16 %v514
    %v605 = vunpack.c.l.b16 %v515
    %v606 = vunpack.c.h.b16 %v515
    %v607 = vunpack.c.l.b16 %v516
    %v608 = vunpack.c.h.b16 %v516
    %v609 = vunpack.c.l.b16 %v517
    %v610 = vunpack.c.h.b16 %v517
    %v611 = vunpack.c.l.b16 %v518
    %v612 = vunpack.c.h.b16 %v518
    %v613 = vunpack.c.l.b16 %v519
    %v614 = vunpack.c.h.b16 %v519
    %v615 = vunpack.c.l.b16 %v520
    %v616 = vunpack.c.h.b16 %v520
    %v617 = vpack.c.b16 %v557, %v553
    %v618 = vpack.c.b16 %v558, %v554
    %v619 = vpack.c.b16 %v559, %v555
    %v620 = vpack.c.b16 %v560, %v556
    %v621 = vpack.c.b16 %v565, %v561
    %v622 = vpack.c.b16 %v566, %v562
    %v623 = vpack.c.b16 %v567, %v563
    %v624 = vpack.c.b16 %v568, %v564
    %v625 = vpack.c.b16 %v573, %v569
    %v626 = vpack.c.b16 %v574, %v570
    %v627 = vpack.c.b16 %v575, %v571
    %v628 = vpack.c.b16 %v576, %v572
    %v629 = vpack.c.b16 %v581, %v577
    %v630 = vpack.c.b16 %v582, %v578
    %v631 = vpack.c.b16 %v583, %v579
    %v632 = vpack.c.b16 %v584, %v580
    %v633 = vpack.c.b16 %v589, %v585
    %v634 = vpack.c.b16 %v590, %v586
    %v635 = vpack.c.b16 %v591, %v587
    %v636 = vpack.c.b16 %v592, %v588
    %v637 = vpack.c.b16 %v597, %v593
    %v638 = vpack.c.b16 %v598, %v594
    %v639 = vpack.c.b16 %v599, %v595
    %v640 = vpack.c.b16 %v600, %v596
    %v641 = vpack.c.b16 %v605, %v601
    %v642 = vpack.c.b16 %v606, %v602
    %v643 = vpack.c.b16 %v607, %v603
    %v644 = vpack.c.b16 %v608, %v604
    %v645 = vpack.c.b16 %v613, %v609
    %v646 = vpack.c.b16 %v614, %v610
    %v647 = vpack.c.b16 %v615, %v611
    %v648 = vpack.c.b16 %v616, %v612
    %681 = vmatpush.bf16.msra.mxu0 %v645
    %682 = vmatpush.bf16.msra.mxu0 %v641
    %683 = vmatpush.bf16.msra.mxu0 %v637
    %684 = vmatpush.bf16.msra.mxu0 %v633
    %685 = vmatpush.bf16.msra.mxu0 %v629
    %686 = vmatpush.bf16.msra.mxu0 %v625
    %687 = vmatpush.bf16.msra.mxu0 %v621
    %688 = vmatpush.bf16.msra.mxu0 %v617
    %689 = vmatmul.bf16.gmra.mxu0 %v488
    %v690 = vpop.f32.mrf.mxu0
    %v691 = vadd.f32 0.0, %v690
    %v692 = vpop.f32.mrf.mxu0
    %693 = vdwg.mxu0
    %694 = vmatpush.bf16.msra.mxu0 %v646
    %695 = vmatpush.bf16.msra.mxu0 %v642
    %696 = vmatpush.bf16.msra.mxu0 %v638
    %697 = vmatpush.bf16.msra.mxu0 %v634
    %698 = vmatpush.bf16.msra.mxu0 %v630
    %699 = vmatpush.bf16.msra.mxu0 %v626
    %700 = vmatpush.bf16.msra.mxu0 %v622
    %701 = vmatpush.bf16.msra.mxu0 %v618
    %702 = vmatmul.bf16.gmra.mxu0 %v488
    %v703 = vpop.f32.mrf.mxu0
    %v704 = vadd.f32 0.0, %v703
    %v705 = vpop.f32.mrf.mxu0
    %706 = vdwg.mxu0
    %707 = vmatpush.bf16.msra.mxu0 %v647
    %708 = vmatpush.bf16.msra.mxu0 %v643
    %709 = vmatpush.bf16.msra.mxu0 %v639
    %710 = vmatpush.bf16.msra.mxu0 %v635
    %711 = vmatpush.bf16.msra.mxu0 %v631
    %712 = vmatpush.bf16.msra.mxu0 %v627
    %713 = vmatpush.bf16.msra.mxu0 %v623
    %714 = vmatpush.bf16.msra.mxu0 %v619
    %715 = vmatmul.bf16.gmra.mxu0 %v488
    %v716 = vpop.f32.mrf.mxu0
    %v717 = vadd.f32 0.0, %v716
    %v718 = vpop.f32.mrf.mxu0
    %719 = vdwg.mxu0
    %720 = vmatpush.bf16.msra.mxu0 %v648
    %721 = vmatpush.bf16.msra.mxu0 %v644
    %722 = vmatpush.bf16.msra.mxu0 %v640
    %723 = vmatpush.bf16.msra.mxu0 %v636
    %724 = vmatpush.bf16.msra.mxu0 %v632
    %725 = vmatpush.bf16.msra.mxu0 %v628
    %726 = vmatpush.bf16.msra.mxu0 %v624
    %727 = vmatpush.bf16.msra.mxu0 %v620
    %728 = vmatmul.bf16.gmra.mxu0 %v488
    %v729 = vpop.f32.mrf.mxu0
    %v730 = vadd.f32 0.0, %v729
    %v731 = vpop.f32.mrf.mxu0
    %732 = vdwg.mxu0
    %v733 = vld [vmem:[%s0] sm:$0xff]
    %v734 = vld [vmem:[%s0 + $0x8] sm:$0xff]
    %v735 = vld [vmem:[%s0 + $0x10] sm:$0xff]
    %v736 = vld [vmem:[%s0 + $0x18] sm:$0xff]
    %737 = vrot.lane.b32.xlu0 %v733, 33
    %v738 = vpop.permute.xlu0 %737
    %739 = vrot.lane.b32.xlu0 %v691, 33
    %v740 = vpop.permute.xlu0 %739
    %741 = vrot.lane.b32.xlu0 %v734, 33
    %v742 = vpop.permute.xlu0 %741
    %743 = vrot.lane.b32.xlu0 %v704, 33
    %v744 = vpop.permute.xlu0 %743
    %745 = vrot.lane.b32.xlu0 %v735, 33
    %v746 = vpop.permute.xlu0 %745
    %747 = vrot.lane.b32.xlu0 %v717, 33
    %v748 = vpop.permute.xlu0 %747
    %749 = vrot.lane.b32.xlu0 %v736, 33
    %v750 = vpop.permute.xlu0 %749
    %751 = vrot.lane.b32.xlu0 %v730, 33
    %v752 = vpop.permute.xlu0 %751
    %v753 = vlaneseq
    %v754 = vand.u32 %v753, 127
    %vm755 = vcmp.lt.s32.totalorder %v754, 33
    %v756 = vsel %vm755, %v746, %v750
    %v757 = vsel %vm755, %v748, %v752
    %v758 = vsel %vm755, %v742, %v746
    %v759 = vsel %vm755, %v744, %v748
    %v760 = vsel %vm755, %v738, %v742
    %v761 = vsel %vm755, %v740, %v744
    %v762 = vsel %vm755, %v750, %v738
    %v763 = vsel %vm755, %v752, %v740
    %v764 = vld [vmem:[#allocation15] ss:$8 sm:$0xf]
    %v766 = vperm.slane %v764, 0
    %v767 = vperm.slane %v764, 1
    %v768 = vperm.slane %v764, 2
    %v769 = vperm.slane %v764, 3
    %v774 = vmul.f32 %v762, %v766
    %v775 = vmul.f32 %v760, %v767
    %v776 = vmul.f32 %v758, %v768
    %v777 = vmul.f32 %v756, %v769
    %v778 = vmul.f32 %v763, %v766
    %v779 = vmul.f32 %v761, %v767
    %v780 = vmul.f32 %v759, %v768
    %v781 = vmul.f32 %v757, %v769
    %782 = vrot.lane.b32.xlu0 %v733, 32
    %v783 = vpop.permute.xlu0 %782
    %784 = vrot.lane.b32.xlu0 %v691, 32
    %v785 = vpop.permute.xlu0 %784
    %786 = vrot.lane.b32.xlu0 %v734, 32
    %v787 = vpop.permute.xlu0 %786
    %788 = vrot.lane.b32.xlu0 %v704, 32
    %v789 = vpop.permute.xlu0 %788
    %790 = vrot.lane.b32.xlu0 %v735, 32
    %v791 = vpop.permute.xlu0 %790
    %792 = vrot.lane.b32.xlu0 %v717, 32
    %v793 = vpop.permute.xlu0 %792
    %794 = vrot.lane.b32.xlu0 %v736, 32
    %v795 = vpop.permute.xlu0 %794
    %796 = vrot.lane.b32.xlu0 %v730, 32
    %v797 = vpop.permute.xlu0 %796
    %vm798 = vcmp.lt.s32.totalorder %v754, 32
    %v799 = vsel %vm798, %v791, %v795
    %v800 = vsel %vm798, %v793, %v797
    %v801 = vsel %vm798, %v787, %v791
    %v802 = vsel %vm798, %v789, %v793
    %v803 = vsel %vm798, %v783, %v787
    %v804 = vsel %vm798, %v785, %v789
    %v805 = vsel %vm798, %v795, %v783
    %v806 = vsel %vm798, %v797, %v785
    %s807 = scalar_lea.vmem [#allocation15], 1
    %v808 = vld [vmem:[%s807] ss:$8 sm:$0xf]
    %v810 = vperm.slane %v808, 0
    %v811 = vperm.slane %v808, 1
    %v812 = vperm.slane %v808, 2
    %v813 = vperm.slane %v808, 3
    %v818 = vmul.f32 %v805, %v810
    %v819 = vmul.f32 %v803, %v811
    %v820 = vmul.f32 %v801, %v812
    %v821 = vmul.f32 %v799, %v813
    %v822 = vmul.f32 %v806, %v810
    %v823 = vmul.f32 %v804, %v811
    %v824 = vmul.f32 %v802, %v812
    %v825 = vmul.f32 %v800, %v813
    %826 = vrot.lane.b32.xlu0 %v733, 31
    %v827 = vpop.permute.xlu0 %826
    %828 = vrot.lane.b32.xlu0 %v691, 31
    %v829 = vpop.permute.xlu0 %828
    %830 = vrot.lane.b32.xlu0 %v734, 31
    %v831 = vpop.permute.xlu0 %830
    %832 = vrot.lane.b32.xlu0 %v704, 31
    %v833 = vpop.permute.xlu0 %832
    %834 = vrot.lane.b32.xlu0 %v735, 31
    %v835 = vpop.permute.xlu0 %834
    %836 = vrot.lane.b32.xlu0 %v717, 31
    %v837 = vpop.permute.xlu0 %836
    %838 = vrot.lane.b32.xlu0 %v736, 31
    %v839 = vpop.permute.xlu0 %838
    %840 = vrot.lane.b32.xlu0 %v730, 31
    %v841 = vpop.permute.xlu0 %840
    %vm842 = vcmp.lt.s32.totalorder %v754, 31
    %v843 = vsel %vm842, %v835, %v839
    %v844 = vsel %vm842, %v837, %v841
    %v845 = vsel %vm842, %v831, %v835
    %v846 = vsel %vm842, %v833, %v837
    %v847 = vsel %vm842, %v827, %v831
    %v848 = vsel %vm842, %v829, %v833
    %v849 = vsel %vm842, %v839, %v827
    %v850 = vsel %vm842, %v841, %v829
    %s851 = scalar_lea.vmem [#allocation15], 2
    %v852 = vld [vmem:[%s851] ss:$8 sm:$0xf]
    %v854 = vperm.slane %v852, 0
    %v855 = vperm.slane %v852, 1
    %v856 = vperm.slane %v852, 2
    %v857 = vperm.slane %v852, 3
    %v862 = vmul.f32 %v849, %v854
    %v863 = vmul.f32 %v847, %v855
    %v864 = vmul.f32 %v845, %v856
    %v865 = vmul.f32 %v843, %v857
    %v866 = vmul.f32 %v850, %v854
    %v867 = vmul.f32 %v848, %v855
    %v868 = vmul.f32 %v846, %v856
    %v869 = vmul.f32 %v844, %v857
    %870 = vrot.lane.b32.xlu0 %v733, 1
    %v871 = vpop.permute.xlu0 %870
    %872 = vrot.lane.b32.xlu0 %v691, 1
    %v873 = vpop.permute.xlu0 %872
    %874 = vrot.lane.b32.xlu0 %v734, 1
    %v875 = vpop.permute.xlu0 %874
    %876 = vrot.lane.b32.xlu0 %v704, 1
    %v877 = vpop.permute.xlu0 %876
    %878 = vrot.lane.b32.xlu0 %v735, 1
    %v879 = vpop.permute.xlu0 %878
    %880 = vrot.lane.b32.xlu0 %v717, 1
    %v881 = vpop.permute.xlu0 %880
    %882 = vrot.lane.b32.xlu0 %v736, 1
    %v883 = vpop.permute.xlu0 %882
    %884 = vrot.lane.b32.xlu0 %v730, 1
    %v885 = vpop.permute.xlu0 %884
    %vm886 = vcmp.lt.s32.totalorder %v754, 1
    %v887 = vsel %vm886, %v879, %v883
    %v888 = vsel %vm886, %v881, %v885
    %v889 = vsel %vm886, %v875, %v879
    %v890 = vsel %vm886, %v877, %v881
    %v891 = vsel %vm886, %v871, %v875
    %v892 = vsel %vm886, %v873, %v877
    %v893 = vsel %vm886, %v883, %v871
    %v894 = vsel %vm886, %v885, %v873
    %s895 = scalar_lea.vmem [#allocation15], 3
    %v896 = vld [vmem:[%s895] ss:$8 sm:$0xf]
    %v898 = vperm.slane %v896, 0
    %v899 = vperm.slane %v896, 1
    %v900 = vperm.slane %v896, 2
    %v901 = vperm.slane %v896, 3
    %v906 = vmul.f32 %v893, %v898
    %v907 = vmul.f32 %v891, %v899
    %v908 = vmul.f32 %v889, %v900
    %v909 = vmul.f32 %v887, %v901
    %v910 = vmul.f32 %v894, %v898
    %v911 = vmul.f32 %v892, %v899
    %v912 = vmul.f32 %v890, %v900
    %v913 = vmul.f32 %v888, %v901
    %s914 = scalar_lea.vmem [#allocation15], 4
    %v915 = vld [vmem:[%s914] ss:$8 sm:$0xf]
    %v917 = vperm.slane %v915, 0
    %v918 = vperm.slane %v915, 1
    %v919 = vperm.slane %v915, 2
    %v920 = vperm.slane %v915, 3
    %v925 = vmul.f32 %v733, %v917
    %v926 = vmul.f32 %v734, %v918
    %v927 = vmul.f32 %v735, %v919
    %v928 = vmul.f32 %v736, %v920
    %v929 = vmul.f32 %v691, %v917
    %v930 = vmul.f32 %v704, %v918
    %v931 = vmul.f32 %v717, %v919
    %v932 = vmul.f32 %v730, %v920
    %933 = vrot.lane.b32.xlu0 %v733, 127
    %v934 = vpop.permute.xlu0 %933
    %935 = vrot.lane.b32.xlu0 %v691, 127
    %v936 = vpop.permute.xlu0 %935
    %937 = vrot.lane.b32.xlu0 %v734, 127
    %v938 = vpop.permute.xlu0 %937
    %939 = vrot.lane.b32.xlu0 %v704, 127
    %v940 = vpop.permute.xlu0 %939
    %941 = vrot.lane.b32.xlu0 %v735, 127
    %v942 = vpop.permute.xlu0 %941
    %943 = vrot.lane.b32.xlu0 %v717, 127
    %v944 = vpop.permute.xlu0 %943
    %945 = vrot.lane.b32.xlu0 %v736, 127
    %v946 = vpop.permute.xlu0 %945
    %947 = vrot.lane.b32.xlu0 %v730, 127
    %v948 = vpop.permute.xlu0 %947
    %vm949 = vcmp.lt.s32.totalorder %v754, 127
    %v950 = vsel %vm949, %v942, %v946
    %v951 = vsel %vm949, %v944, %v948
    %v952 = vsel %vm949, %v938, %v942
    %v953 = vsel %vm949, %v940, %v944
    %v954 = vsel %vm949, %v934, %v938
    %v955 = vsel %vm949, %v936, %v940
    %v956 = vsel %vm949, %v946, %v934
    %v957 = vsel %vm949, %v948, %v936
    %s958 = scalar_lea.vmem [#allocation15], 5
    %v959 = vld [vmem:[%s958] ss:$8 sm:$0xf]
    %v961 = vperm.slane %v959, 0
    %v962 = vperm.slane %v959, 1
    %v963 = vperm.slane %v959, 2
    %v964 = vperm.slane %v959, 3
    %v969 = vmul.f32 %v954, %v961
    %v970 = vmul.f32 %v952, %v962
    %v971 = vmul.f32 %v950, %v963
    %v972 = vmul.f32 %v956, %v964
    %v973 = vmul.f32 %v955, %v961
    %v974 = vmul.f32 %v953, %v962
    %v975 = vmul.f32 %v951, %v963
    %v976 = vmul.f32 %v957, %v964
    %977 = vrot.lane.b32.xlu0 %v733, 97
    %v978 = vpop.permute.xlu0 %977
    %979 = vrot.lane.b32.xlu0 %v691, 97
    %v980 = vpop.permute.xlu0 %979
    %981 = vrot.lane.b32.xlu0 %v734, 97
    %v982 = vpop.permute.xlu0 %981
    %983 = vrot.lane.b32.xlu0 %v704, 97
    %v984 = vpop.permute.xlu0 %983
    %985 = vrot.lane.b32.xlu0 %v735, 97
    %v986 = vpop.permute.xlu0 %985
    %987 = vrot.lane.b32.xlu0 %v717, 97
    %v988 = vpop.permute.xlu0 %987
    %989 = vrot.lane.b32.xlu0 %v736, 97
    %v990 = vpop.permute.xlu0 %989
    %991 = vrot.lane.b32.xlu0 %v730, 97
    %v992 = vpop.permute.xlu0 %991
    %vm993 = vcmp.lt.s32.totalorder %v754, 97
    %v994 = vsel %vm993, %v986, %v990
    %v995 = vsel %vm993, %v988, %v992
    %v996 = vsel %vm993, %v982, %v986
    %v997 = vsel %vm993, %v984, %v988
    %v998 = vsel %vm993, %v978, %v982
    %v999 = vsel %vm993, %v980, %v984
    %v1000 = vsel %vm993, %v990, %v978
    %v1001 = vsel %vm993, %v992, %v980
    %s1002 = scalar_lea.vmem [#allocation15], 6
    %v1003 = vld [vmem:[%s1002] ss:$8 sm:$0xf]
    %v1005 = vperm.slane %v1003, 0
    %v1006 = vperm.slane %v1003, 1
    %v1007 = vperm.slane %v1003, 2
    %v1008 = vperm.slane %v1003, 3
    %v1013 = vmul.f32 %v998, %v1005
    %v1014 = vmul.f32 %v996, %v1006
    %v1015 = vmul.f32 %v994, %v1007
    %v1016 = vmul.f32 %v1000, %v1008
    %v1017 = vmul.f32 %v999, %v1005
    %v1018 = vmul.f32 %v997, %v1006
    %v1019 = vmul.f32 %v995, %v1007
    %v1020 = vmul.f32 %v1001, %v1008
    %1021 = vrot.lane.b32.xlu0 %v733, 96
    %v1022 = vpop.permute.xlu0 %1021
    %1023 = vrot.lane.b32.xlu0 %v691, 96
    %v1024 = vpop.permute.xlu0 %1023
    %1025 = vrot.lane.b32.xlu0 %v734, 96
    %v1026 = vpop.permute.xlu0 %1025
    %1027 = vrot.lane.b32.xlu0 %v704, 96
    %v1028 = vpop.permute.xlu0 %1027
    %1029 = vrot.lane.b32.xlu0 %v735, 96
    %v1030 = vpop.permute.xlu0 %1029
    %1031 = vrot.lane.b32.xlu0 %v717, 96
    %v1032 = vpop.permute.xlu0 %1031
    %1033 = vrot.lane.b32.xlu0 %v736, 96
    %v1034 = vpop.permute.xlu0 %1033
    %1035 = vrot.lane.b32.xlu0 %v730, 96
    %v1036 = vpop.permute.xlu0 %1035
    %vm1037 = vcmp.lt.s32.totalorder %v754, 96
    %v1038 = vsel %vm1037, %v1030, %v1034
    %v1039 = vsel %vm1037, %v1032, %v1036
    %v1040 = vsel %vm1037, %v1026, %v1030
    %v1041 = vsel %vm1037, %v1028, %v1032
    %v1042 = vsel %vm1037, %v1022, %v1026
    %v1043 = vsel %vm1037, %v1024, %v1028
    %v1044 = vsel %vm1037, %v1034, %v1022
    %v1045 = vsel %vm1037, %v1036, %v1024
    %s1046 = scalar_lea.vmem [#allocation15], 7
    %v1047 = vld [vmem:[%s1046] ss:$8 sm:$0xf]
    %v1049 = vperm.slane %v1047, 0
    %v1050 = vperm.slane %v1047, 1
    %v1051 = vperm.slane %v1047, 2
    %v1052 = vperm.slane %v1047, 3
    %v1057 = vmul.f32 %v1042, %v1049
    %v1058 = vmul.f32 %v1040, %v1050
    %v1059 = vmul.f32 %v1038, %v1051
    %v1060 = vmul.f32 %v1044, %v1052
    %v1061 = vmul.f32 %v1043, %v1049
    %v1062 = vmul.f32 %v1041, %v1050
    %v1063 = vmul.f32 %v1039, %v1051
    %v1064 = vmul.f32 %v1045, %v1052
    %1065 = vrot.lane.b32.xlu0 %v733, 95
    %v1066 = vpop.permute.xlu0 %1065
    %1067 = vrot.lane.b32.xlu0 %v691, 95
    %v1068 = vpop.permute.xlu0 %1067
    %1069 = vrot.lane.b32.xlu0 %v734, 95
    %v1070 = vpop.permute.xlu0 %1069
    %1071 = vrot.lane.b32.xlu0 %v704, 95
    %v1072 = vpop.permute.xlu0 %1071
    %1073 = vrot.lane.b32.xlu0 %v735, 95
    %v1074 = vpop.permute.xlu0 %1073
    %1075 = vrot.lane.b32.xlu0 %v717, 95
    %v1076 = vpop.permute.xlu0 %1075
    %1077 = vrot.lane.b32.xlu0 %v736, 95
    %v1078 = vpop.permute.xlu0 %1077
    %1079 = vrot.lane.b32.xlu0 %v730, 95
    %v1080 = vpop.permute.xlu0 %1079
    %vm1081 = vcmp.lt.s32.totalorder %v754, 95
    %v1082 = vsel %vm1081, %v1074, %v1078
    %v1083 = vsel %vm1081, %v1076, %v1080
    %v1084 = vsel %vm1081, %v1070, %v1074
    %v1085 = vsel %vm1081, %v1072, %v1076
    %v1086 = vsel %vm1081, %v1066, %v1070
    %v1087 = vsel %vm1081, %v1068, %v1072
    %v1088 = vsel %vm1081, %v1078, %v1066
    %v1089 = vsel %vm1081, %v1080, %v1068
    %s1090 = scalar_lea.vmem [#allocation15], 32
    %v1091 = vld [vmem:[%s1090] ss:$8 sm:$0xf]
    %v1093 = vperm.slane %v1091, 0
    %v1094 = vperm.slane %v1091, 1
    %v1095 = vperm.slane %v1091, 2
    %v1096 = vperm.slane %v1091, 3
    %v1101 = vmul.f32 %v1086, %v1093
    %v1102 = vmul.f32 %v1084, %v1094
    %v1103 = vmul.f32 %v1082, %v1095
    %v1104 = vmul.f32 %v1088, %v1096
    %v1105 = vmul.f32 %v1087, %v1093
    %v1106 = vmul.f32 %v1085, %v1094
    %v1107 = vmul.f32 %v1083, %v1095
    %v1108 = vmul.f32 %v1089, %v1096
    %v1109 = vld [vmem:[#allocation19] sm:$0xff]
    %v1110 = vld [vmem:[#allocation19 + $0x8] sm:$0xff]
    %v1111 = vpack.c.bf16 %v778, %v774
    %v1112 = vpack.c.bf16 %v779, %v775
    %v1113 = vpack.c.bf16 %v780, %v776
    %v1114 = vpack.c.bf16 %v781, %v777
    %v1115 = vpack.c.bf16 %v822, %v818
    %v1116 = vpack.c.bf16 %v823, %v819
    %v1117 = vpack.c.bf16 %v824, %v820
    %v1118 = vpack.c.bf16 %v825, %v821
    %v1119 = vpack.c.bf16 %v866, %v862
    %v1120 = vpack.c.bf16 %v867, %v863
    %v1121 = vpack.c.bf16 %v868, %v864
    %v1122 = vpack.c.bf16 %v869, %v865
    %v1123 = vpack.c.bf16 %v910, %v906
    %v1124 = vpack.c.bf16 %v911, %v907
    %v1125 = vpack.c.bf16 %v912, %v908
    %v1126 = vpack.c.bf16 %v913, %v909
    %v1127 = vpack.c.bf16 %v929, %v925
    %v1128 = vpack.c.bf16 %v930, %v926
    %v1129 = vpack.c.bf16 %v931, %v927
    %v1130 = vpack.c.bf16 %v932, %v928
    %v1131 = vpack.c.bf16 %v973, %v969
    %v1132 = vpack.c.bf16 %v974, %v970
    %v1133 = vpack.c.bf16 %v975, %v971
    %v1134 = vpack.c.bf16 %v976, %v972
    %v1135 = vpack.c.bf16 %v1017, %v1013
    %v1136 = vpack.c.bf16 %v1018, %v1014
    %v1137 = vpack.c.bf16 %v1019, %v1015
    %v1138 = vpack.c.bf16 %v1020, %v1016
    %v1139 = vpack.c.bf16 %v1061, %v1057
    %v1140 = vpack.c.bf16 %v1062, %v1058
    %v1141 = vpack.c.bf16 %v1063, %v1059
    %v1142 = vpack.c.bf16 %v1064, %v1060
    %v1143 = vpack.c.bf16 %v1105, %v1101
    %v1144 = vpack.c.bf16 %v1106, %v1102
    %v1145 = vpack.c.bf16 %v1107, %v1103
    %v1146 = vpack.c.bf16 %v1108, %v1104
    %v1147 = vld [vmem:[#allocation21] sm:$0xff]
    %v1148 = vld [vmem:[#allocation21 + $0x8] sm:$0xff]
    %1150 = vset.pattern.permute.xlu0 0
    %1151 = vperm.xlu0 %1150, %v1147
    %v1152 = vpop.permute.xlu0 %1151
    %1155 = vset.pattern.permute.xlu0 0
    %1156 = vperm.xlu0 %1155, %v1148
    %v1157 = vpop.permute.xlu0 %1156
    %v1161 = vunpack.c.l.b16 %v1109
    %v1162 = vunpack.c.h.b16 %v1109
    %v1163 = vunpack.c.l.b16 %v1110
    %v1164 = vunpack.c.h.b16 %v1110
    %v1165 = vpack.c.b16 %v1163, %v1161
    %v1166 = vpack.c.b16 %v1164, %v1162
    %vm1168 = vcmask 130048
    %v1170 = vsel %vm1168, %v1166, 0
    %1172 = vmatpush.bf16.msra.mxu0 %v1139
    %1173 = vmatpush.bf16.msra.mxu0 %v1135
    %1174 = vmatpush.bf16.msra.mxu0 %v1131
    %1175 = vmatpush.bf16.msra.mxu0 %v1127
    %1176 = vmatpush.bf16.msra.mxu0 %v1123
    %1177 = vmatpush.bf16.msra.mxu0 %v1119
    %1178 = vmatpush.bf16.msra.mxu0 %v1115
    %1179 = vmatpush.bf16.msra.mxu0 %v1111
    %1180 = vmatmul.bf16.gmra.mxu0 %v1165
    %v1181 = vpop.f32.mrf.mxu0
    %v1182 = vadd.f32 %v1152, %v1181
    %v1183 = vpop.f32.mrf.mxu0
    %v1184 = vadd.f32 %v1157, %v1183
    %1185 = vdwg.mxu0
    %1186 = vmatpush.bf16.msra.mxu0 0
    %1187 = vmatpush.bf16.msra.mxu0 0
    %1188 = vmatpush.bf16.msra.mxu0 0
    %1189 = vmatpush.bf16.msra.mxu0 0
    %1190 = vmatpush.bf16.msra.mxu0 0
    %1191 = vmatpush.bf16.msra.mxu0 0
    %1192 = vmatpush.bf16.msra.mxu0 0
    %1193 = vmatpush.bf16.msra.mxu0 %v1143
    %1194 = vmatmul.bf16.gmra.mxu0 %v1170
    %v1195 = vpop.f32.mrf.mxu0
    %v1196 = vadd.f32 %v1182, %v1195
    %v1197 = vpop.f32.mrf.mxu0
    %v1198 = vadd.f32 %v1184, %v1197
    %1199 = vdwg.mxu0
    %1200 = vmatpush.bf16.msra.mxu0 %v1140
    %1201 = vmatpush.bf16.msra.mxu0 %v1136
    %1202 = vmatpush.bf16.msra.mxu0 %v1132
    %1203 = vmatpush.bf16.msra.mxu0 %v1128
    %1204 = vmatpush.bf16.msra.mxu0 %v1124
    %1205 = vmatpush.bf16.msra.mxu0 %v1120
    %1206 = vmatpush.bf16.msra.mxu0 %v1116
    %1207 = vmatpush.bf16.msra.mxu0 %v1112
    %1208 = vmatmul.bf16.gmra.mxu0 %v1165
    %v1209 = vpop.f32.mrf.mxu0
    %v1210 = vadd.f32 %v1152, %v1209
    %v1211 = vpop.f32.mrf.mxu0
    %v1212 = vadd.f32 %v1157, %v1211
    %1213 = vdwg.mxu0
    %1214 = vmatpush.bf16.msra.mxu0 0
    %1215 = vmatpush.bf16.msra.mxu0 0
    %1216 = vmatpush.bf16.msra.mxu0 0
    %1217 = vmatpush.bf16.msra.mxu0 0
    %1218 = vmatpush.bf16.msra.mxu0 0
    %1219 = vmatpush.bf16.msra.mxu0 0
    %1220 = vmatpush.bf16.msra.mxu0 0
    %1221 = vmatpush.bf16.msra.mxu0 %v1144
    %1222 = vmatmul.bf16.gmra.mxu0 %v1170
    %v1223 = vpop.f32.mrf.mxu0
    %v1224 = vadd.f32 %v1210, %v1223
    %v1225 = vpop.f32.mrf.mxu0
    %v1226 = vadd.f32 %v1212, %v1225
    %1227 = vdwg.mxu0
    %1228 = vmatpush.bf16.msra.mxu0 %v1141
    %1229 = vmatpush.bf16.msra.mxu0 %v1137
    %1230 = vmatpush.bf16.msra.mxu0 %v1133
    %1231 = vmatpush.bf16.msra.mxu0 %v1129
    %1232 = vmatpush.bf16.msra.mxu0 %v1125
    %1233 = vmatpush.bf16.msra.mxu0 %v1121
    %1234 = vmatpush.bf16.msra.mxu0 %v1117
    %1235 = vmatpush.bf16.msra.mxu0 %v1113
    %1236 = vmatmul.bf16.gmra.mxu0 %v1165
    %v1237 = vpop.f32.mrf.mxu0
    %v1238 = vadd.f32 %v1152, %v1237
    %v1239 = vpop.f32.mrf.mxu0
    %v1240 = vadd.f32 %v1157, %v1239
    %1241 = vdwg.mxu0
    %1242 = vmatpush.bf16.msra.mxu0 0
    %1243 = vmatpush.bf16.msra.mxu0 0
    %1244 = vmatpush.bf16.msra.mxu0 0
    %1245 = vmatpush.bf16.msra.mxu0 0
    %1246 = vmatpush.bf16.msra.mxu0 0
    %1247 = vmatpush.bf16.msra.mxu0 0
    %1248 = vmatpush.bf16.msra.mxu0 0
    %1249 = vmatpush.bf16.msra.mxu0 %v1145
    %1250 = vmatmul.bf16.gmra.mxu0 %v1170
    %v1251 = vpop.f32.mrf.mxu0
    %v1252 = vadd.f32 %v1238, %v1251
    %v1253 = vpop.f32.mrf.mxu0
    %v1254 = vadd.f32 %v1240, %v1253
    %1255 = vdwg.mxu0
    %1256 = vmatpush.bf16.msra.mxu0 %v1142
    %1257 = vmatpush.bf16.msra.mxu0 %v1138
    %1258 = vmatpush.bf16.msra.mxu0 %v1134
    %1259 = vmatpush.bf16.msra.mxu0 %v1130
    %1260 = vmatpush.bf16.msra.mxu0 %v1126
    %1261 = vmatpush.bf16.msra.mxu0 %v1122
    %1262 = vmatpush.bf16.msra.mxu0 %v1118
    %1263 = vmatpush.bf16.msra.mxu0 %v1114
    %1264 = vmatmul.bf16.gmra.mxu0 %v1165
    %v1265 = vpop.f32.mrf.mxu0
    %v1266 = vadd.f32 %v1152, %v1265
    %v1267 = vpop.f32.mrf.mxu0
    %v1268 = vadd.f32 %v1157, %v1267
    %1269 = vdwg.mxu0
    %1270 = vmatpush.bf16.msra.mxu0 0
    %1271 = vmatpush.bf16.msra.mxu0 0
    %1272 = vmatpush.bf16.msra.mxu0 0
    %1273 = vmatpush.bf16.msra.mxu0 0
    %1274 = vmatpush.bf16.msra.mxu0 0
    %1275 = vmatpush.bf16.msra.mxu0 0
    %1276 = vmatpush.bf16.msra.mxu0 0
    %1277 = vmatpush.bf16.msra.mxu0 %v1146
    %1278 = vmatmul.bf16.gmra.mxu0 %v1170
    %v1279 = vpop.f32.mrf.mxu0
    %v1280 = vadd.f32 %v1266, %v1279
    %v1281 = vpop.f32.mrf.mxu0
    %v1282 = vadd.f32 %v1268, %v1281
    %1283 = vdwg.mxu0
    %v1284 = vld [vmem:[#allocation16] sm:$0xff]
    %v1285 = vld [vmem:[#allocation16 + $0x8] sm:$0xff]
    %v1286 = vmax.f32 %v774, 0.0
    %v1287 = vmax.f32 %v775, 0.0
    %v1288 = vmax.f32 %v776, 0.0
    %v1289 = vmax.f32 %v777, 0.0
    %v1290 = vmax.f32 %v778, 0.0
    %v1291 = vmax.f32 %v779, 0.0
    %v1292 = vmax.f32 %v780, 0.0
    %v1293 = vmax.f32 %v781, 0.0
    %v1294 = vmax.f32 %v818, 0.0
    %v1295 = vmax.f32 %v819, 0.0
    %v1296 = vmax.f32 %v820, 0.0
    %v1297 = vmax.f32 %v821, 0.0
    %v1298 = vmax.f32 %v822, 0.0
    %v1299 = vmax.f32 %v823, 0.0
    %v1300 = vmax.f32 %v824, 0.0
    %v1301 = vmax.f32 %v825, 0.0
    %v1302 = vmax.f32 %v862, 0.0
    %v1303 = vmax.f32 %v863, 0.0
    %v1304 = vmax.f32 %v864, 0.0
    %v1305 = vmax.f32 %v865, 0.0
    %v1306 = vmax.f32 %v866, 0.0
    %v1307 = vmax.f32 %v867, 0.0
    %v1308 = vmax.f32 %v868, 0.0
    %v1309 = vmax.f32 %v869, 0.0
    %v1310 = vmax.f32 %v906, 0.0
    %v1311 = vmax.f32 %v907, 0.0
    %v1312 = vmax.f32 %v908, 0.0
    %v1313 = vmax.f32 %v909, 0.0
    %v1314 = vmax.f32 %v910, 0.0
    %v1315 = vmax.f32 %v911, 0.0
    %v1316 = vmax.f32 %v912, 0.0
    %v1317 = vmax.f32 %v913, 0.0
    %v1318 = vmax.f32 %v925, 0.0
    %v1319 = vmax.f32 %v926, 0.0
    %v1320 = vmax.f32 %v927, 0.0
    %v1321 = vmax.f32 %v928, 0.0
    %v1322 = vmax.f32 %v929, 0.0
    %v1323 = vmax.f32 %v930, 0.0
    %v1324 = vmax.f32 %v931, 0.0
    %v1325 = vmax.f32 %v932, 0.0
    %v1326 = vmax.f32 %v969, 0.0
    %v1327 = vmax.f32 %v970, 0.0
    %v1328 = vmax.f32 %v971, 0.0
    %v1329 = vmax.f32 %v972, 0.0
    %v1330 = vmax.f32 %v973, 0.0
    %v1331 = vmax.f32 %v974, 0.0
    %v1332 = vmax.f32 %v975, 0.0
    %v1333 = vmax.f32 %v976, 0.0
    %v1334 = vmax.f32 %v1013, 0.0
    %v1335 = vmax.f32 %v1014, 0.0
    %v1336 = vmax.f32 %v1015, 0.0
    %v1337 = vmax.f32 %v1016, 0.0
    %v1338 = vmax.f32 %v1017, 0.0
    %v1339 = vmax.f32 %v1018, 0.0
    %v1340 = vmax.f32 %v1019, 0.0
    %v1341 = vmax.f32 %v1020, 0.0
    %v1342 = vmax.f32 %v1057, 0.0
    %v1343 = vmax.f32 %v1058, 0.0
    %v1344 = vmax.f32 %v1059, 0.0
    %v1345 = vmax.f32 %v1060, 0.0
    %v1346 = vmax.f32 %v1061, 0.0
    %v1347 = vmax.f32 %v1062, 0.0
    %v1348 = vmax.f32 %v1063, 0.0
    %v1349 = vmax.f32 %v1064, 0.0
    %v1350 = vmax.f32 %v1101, 0.0
    %v1351 = vmax.f32 %v1102, 0.0
    %v1352 = vmax.f32 %v1103, 0.0
    %v1353 = vmax.f32 %v1104, 0.0
    %v1354 = vmax.f32 %v1105, 0.0
    %v1355 = vmax.f32 %v1106, 0.0
    %v1356 = vmax.f32 %v1107, 0.0
    %v1357 = vmax.f32 %v1108, 0.0
    %v1358 = vpack.c.bf16 %v1290, %v1286
    %v1359 = vpack.c.bf16 %v1291, %v1287
    %v1360 = vpack.c.bf16 %v1292, %v1288
    %v1361 = vpack.c.bf16 %v1293, %v1289
    %v1362 = vpack.c.bf16 %v1298, %v1294
    %v1363 = vpack.c.bf16 %v1299, %v1295
    %v1364 = vpack.c.bf16 %v1300, %v1296
    %v1365 = vpack.c.bf16 %v1301, %v1297
    %v1366 = vpack.c.bf16 %v1306, %v1302
    %v1367 = vpack.c.bf16 %v1307, %v1303
    %v1368 = vpack.c.bf16 %v1308, %v1304
    %v1369 = vpack.c.bf16 %v1309, %v1305
    %v1370 = vpack.c.bf16 %v1314, %v1310
    %v1371 = vpack.c.bf16 %v1315, %v1311
    %v1372 = vpack.c.bf16 %v1316, %v1312
    %v1373 = vpack.c.bf16 %v1317, %v1313
    %v1374 = vpack.c.bf16 %v1322, %v1318
    %v1375 = vpack.c.bf16 %v1323, %v1319
    %v1376 = vpack.c.bf16 %v1324, %v1320
    %v1377 = vpack.c.bf16 %v1325, %v1321
    %v1378 = vpack.c.bf16 %v1330, %v1326
    %v1379 = vpack.c.bf16 %v1331, %v1327
    %v1380 = vpack.c.bf16 %v1332, %v1328
    %v1381 = vpack.c.bf16 %v1333, %v1329
    %v1382 = vpack.c.bf16 %v1338, %v1334
    %v1383 = vpack.c.bf16 %v1339, %v1335
    %v1384 = vpack.c.bf16 %v1340, %v1336
    %v1385 = vpack.c.bf16 %v1341, %v1337
    %v1386 = vpack.c.bf16 %v1346, %v1342
    %v1387 = vpack.c.bf16 %v1347, %v1343
    %v1388 = vpack.c.bf16 %v1348, %v1344
    %v1389 = vpack.c.bf16 %v1349, %v1345
    %v1390 = vpack.c.bf16 %v1354, %v1350
    %v1391 = vpack.c.bf16 %v1355, %v1351
    %v1392 = vpack.c.bf16 %v1356, %v1352
    %v1393 = vpack.c.bf16 %v1357, %v1353
    %v1394 = vld [vmem:[#allocation18] sm:$0xff]
    %v1395 = vld [vmem:[#allocation18 + $0x8] sm:$0xff]
    %1397 = vset.pattern.permute.xlu0 0
    %1398 = vperm.xlu0 %1397, %v1394
    %v1399 = vpop.permute.xlu0 %1398
    %1402 = vset.pattern.permute.xlu0 0
    %1403 = vperm.xlu0 %1402, %v1395
    %v1404 = vpop.permute.xlu0 %1403
    %v1408 = vunpack.c.l.b16 %v1284
    %v1409 = vunpack.c.h.b16 %v1284
    %v1410 = vunpack.c.l.b16 %v1285
    %v1411 = vunpack.c.h.b16 %v1285
    %v1412 = vpack.c.b16 %v1410, %v1408
    %v1413 = vpack.c.b16 %v1411, %v1409
    %v1416 = vsel %vm1168, %v1413, 0
    %1418 = vmatpush.bf16.msra.mxu0 %v1386
    %1419 = vmatpush.bf16.msra.mxu0 %v1382
    %1420 = vmatpush.bf16.msra.mxu0 %v1378
    %1421 = vmatpush.bf16.msra.mxu0 %v1374
    %1422 = vmatpush.bf16.msra.mxu0 %v1370
    %1423 = vmatpush.bf16.msra.mxu0 %v1366
    %1424 = vmatpush.bf16.msra.mxu0 %v1362
    %1425 = vmatpush.bf16.msra.mxu0 %v1358
    %1426 = vmatmul.bf16.gmra.mxu0 %v1412
    %v1427 = vpop.f32.mrf.mxu0
    %v1428 = vadd.f32 %v1399, %v1427
    %v1429 = vpop.f32.mrf.mxu0
    %v1430 = vadd.f32 %v1404, %v1429
    %1431 = vdwg.mxu0
    %1432 = vmatpush.bf16.msra.mxu0 0
    %1433 = vmatpush.bf16.msra.mxu0 0
    %1434 = vmatpush.bf16.msra.mxu0 0
    %1435 = vmatpush.bf16.msra.mxu0 0
    %1436 = vmatpush.bf16.msra.mxu0 0
    %1437 = vmatpush.bf16.msra.mxu0 0
    %1438 = vmatpush.bf16.msra.mxu0 0
    %1439 = vmatpush.bf16.msra.mxu0 %v1390
    %1440 = vmatmul.bf16.gmra.mxu0 %v1416
    %v1441 = vpop.f32.mrf.mxu0
    %v1442 = vadd.f32 %v1428, %v1441
    %v1443 = vpop.f32.mrf.mxu0
    %v1444 = vadd.f32 %v1430, %v1443
    %1445 = vdwg.mxu0
    %1446 = vmatpush.bf16.msra.mxu0 %v1387
    %1447 = vmatpush.bf16.msra.mxu0 %v1383
    %1448 = vmatpush.bf16.msra.mxu0 %v1379
    %1449 = vmatpush.bf16.msra.mxu0 %v1375
    %1450 = vmatpush.bf16.msra.mxu0 %v1371
    %1451 = vmatpush.bf16.msra.mxu0 %v1367
    %1452 = vmatpush.bf16.msra.mxu0 %v1363
    %1453 = vmatpush.bf16.msra.mxu0 %v1359
    %1454 = vmatmul.bf16.gmra.mxu0 %v1412
    %v1455 = vpop.f32.mrf.mxu0
    %v1456 = vadd.f32 %v1399, %v1455
    %v1457 = vpop.f32.mrf.mxu0
    %v1458 = vadd.f32 %v1404, %v1457
    %1459 = vdwg.mxu0
    %1460 = vmatpush.bf16.msra.mxu0 0
    %1461 = vmatpush.bf16.msra.mxu0 0
    %1462 = vmatpush.bf16.msra.mxu0 0
    %1463 = vmatpush.bf16.msra.mxu0 0
    %1464 = vmatpush.bf16.msra.mxu0 0
    %1465 = vmatpush.bf16.msra.mxu0 0
    %1466 = vmatpush.bf16.msra.mxu0 0
    %1467 = vmatpush.bf16.msra.mxu0 %v1391
    %1468 = vmatmul.bf16.gmra.mxu0 %v1416
    %v1469 = vpop.f32.mrf.mxu0
    %v1470 = vadd.f32 %v1456, %v1469
    %v1471 = vpop.f32.mrf.mxu0
    %v1472 = vadd.f32 %v1458, %v1471
    %1473 = vdwg.mxu0
    %1474 = vmatpush.bf16.msra.mxu0 %v1388
    %1475 = vmatpush.bf16.msra.mxu0 %v1384
    %1476 = vmatpush.bf16.msra.mxu0 %v1380
    %1477 = vmatpush.bf16.msra.mxu0 %v1376
    %1478 = vmatpush.bf16.msra.mxu0 %v1372
    %1479 = vmatpush.bf16.msra.mxu0 %v1368
    %1480 = vmatpush.bf16.msra.mxu0 %v1364
    %1481 = vmatpush.bf16.msra.mxu0 %v1360
    %1482 = vmatmul.bf16.gmra.mxu0 %v1412
    %v1483 = vpop.f32.mrf.mxu0
    %v1484 = vadd.f32 %v1399, %v1483
    %v1485 = vpop.f32.mrf.mxu0
    %v1486 = vadd.f32 %v1404, %v1485
    %1487 = vdwg.mxu0
    %1488 = vmatpush.bf16.msra.mxu0 0
    %1489 = vmatpush.bf16.msra.mxu0 0
    %1490 = vmatpush.bf16.msra.mxu0 0
    %1491 = vmatpush.bf16.msra.mxu0 0
    %1492 = vmatpush.bf16.msra.mxu0 0
    %1493 = vmatpush.bf16.msra.mxu0 0
    %1494 = vmatpush.bf16.msra.mxu0 0
    %1495 = vmatpush.bf16.msra.mxu0 %v1392
    %1496 = vmatmul.bf16.gmra.mxu0 %v1416
    %v1497 = vpop.f32.mrf.mxu0
    %v1498 = vadd.f32 %v1484, %v1497
    %v1499 = vpop.f32.mrf.mxu0
    %v1500 = vadd.f32 %v1486, %v1499
    %1501 = vdwg.mxu0
    %1502 = vmatpush.bf16.msra.mxu0 %v1389
    %1503 = vmatpush.bf16.msra.mxu0 %v1385
    %1504 = vmatpush.bf16.msra.mxu0 %v1381
    %1505 = vmatpush.bf16.msra.mxu0 %v1377
    %1506 = vmatpush.bf16.msra.mxu0 %v1373
    %1507 = vmatpush.bf16.msra.mxu0 %v1369
    %1508 = vmatpush.bf16.msra.mxu0 %v1365
    %1509 = vmatpush.bf16.msra.mxu0 %v1361
    %1510 = vmatmul.bf16.gmra.mxu0 %v1412
    %v1511 = vpop.f32.mrf.mxu0
    %v1512 = vadd.f32 %v1399, %v1511
    %v1513 = vpop.f32.mrf.mxu0
    %v1514 = vadd.f32 %v1404, %v1513
    %1515 = vdwg.mxu0
    %1516 = vmatpush.bf16.msra.mxu0 0
    %1517 = vmatpush.bf16.msra.mxu0 0
    %1518 = vmatpush.bf16.msra.mxu0 0
    %1519 = vmatpush.bf16.msra.mxu0 0
    %1520 = vmatpush.bf16.msra.mxu0 0
    %1521 = vmatpush.bf16.msra.mxu0 0
    %1522 = vmatpush.bf16.msra.mxu0 0
    %1523 = vmatpush.bf16.msra.mxu0 %v1393
    %1524 = vmatmul.bf16.gmra.mxu0 %v1416
    %v1525 = vpop.f32.mrf.mxu0
    %v1526 = vadd.f32 %v1512, %v1525
    %v1527 = vpop.f32.mrf.mxu0
    %v1528 = vadd.f32 %v1514, %v1527
    %1529 = vdwg.mxu0
    %v1530 = vmax.f32 %v1442, 0.0
    %v1531 = vmax.f32 %v1470, 0.0
    %v1532 = vmax.f32 %v1498, 0.0
    %v1533 = vmax.f32 %v1526, 0.0
    %v1534 = vmax.f32 %v1444, 0.0
    %v1535 = vmax.f32 %v1472, 0.0
    %v1536 = vmax.f32 %v1500, 0.0
    %v1537 = vmax.f32 %v1528, 0.0
    %1538 = vrot.lane.b32.xlu0 %v1530, 33
    %v1539 = vpop.permute.xlu0 %1538
    %1540 = vrot.lane.b32.xlu0 %v1534, 33
    %v1541 = vpop.permute.xlu0 %1540
    %1542 = vrot.lane.b32.xlu0 %v1531, 33
    %v1543 = vpop.permute.xlu0 %1542
    %1544 = vrot.lane.b32.xlu0 %v1535, 33
    %v1545 = vpop.permute.xlu0 %1544
    %1546 = vrot.lane.b32.xlu0 %v1532, 33
    %v1547 = vpop.permute.xlu0 %1546
    %1548 = vrot.lane.b32.xlu0 %v1536, 33
    %v1549 = vpop.permute.xlu0 %1548
    %1550 = vrot.lane.b32.xlu0 %v1533, 33
    %v1551 = vpop.permute.xlu0 %1550
    %1552 = vrot.lane.b32.xlu0 %v1537, 33
    %v1553 = vpop.permute.xlu0 %1552
    %v1554 = vsel %vm755, %v1547, %v1551
    %v1555 = vsel %vm755, %v1549, %v1553
    %v1556 = vsel %vm755, %v1543, %v1547
    %v1557 = vsel %vm755, %v1545, %v1549
    %v1558 = vsel %vm755, %v1539, %v1543
    %v1559 = vsel %vm755, %v1541, %v1545
    %v1560 = vsel %vm755, %v1551, %v1539
    %v1561 = vsel %vm755, %v1553, %v1541
    %v1562 = vmul.f32 %v1560, %v766
    %v1563 = vmul.f32 %v1558, %v767
    %v1564 = vmul.f32 %v1556, %v768
    %v1565 = vmul.f32 %v1554, %v769
    %v1566 = vmul.f32 %v1561, %v766
    %v1567 = vmul.f32 %v1559, %v767
    %v1568 = vmul.f32 %v1557, %v768
    %v1569 = vmul.f32 %v1555, %v769
    %1570 = vrot.lane.b32.xlu0 %v1530, 32
    %v1571 = vpop.permute.xlu0 %1570
    %1572 = vrot.lane.b32.xlu0 %v1534, 32
    %v1573 = vpop.permute.xlu0 %1572
    %1574 = vrot.lane.b32.xlu0 %v1531, 32
    %v1575 = vpop.permute.xlu0 %1574
    %1576 = vrot.lane.b32.xlu0 %v1535, 32
    %v1577 = vpop.permute.xlu0 %1576
    %1578 = vrot.lane.b32.xlu0 %v1532, 32
    %v1579 = vpop.permute.xlu0 %1578
    %1580 = vrot.lane.b32.xlu0 %v1536, 32
    %v1581 = vpop.permute.xlu0 %1580
    %1582 = vrot.lane.b32.xlu0 %v1533, 32
    %v1583 = vpop.permute.xlu0 %1582
    %1584 = vrot.lane.b32.xlu0 %v1537, 32
    %v1585 = vpop.permute.xlu0 %1584
    %v1586 = vsel %vm798, %v1579, %v1583
    %v1587 = vsel %vm798, %v1581, %v1585
    %v1588 = vsel %vm798, %v1575, %v1579
    %v1589 = vsel %vm798, %v1577, %v1581
    %v1590 = vsel %vm798, %v1571, %v1575
    %v1591 = vsel %vm798, %v1573, %v1577
    %v1592 = vsel %vm798, %v1583, %v1571
    %v1593 = vsel %vm798, %v1585, %v1573
    %v1594 = vmul.f32 %v1592, %v810
    %v1595 = vmul.f32 %v1590, %v811
    %v1596 = vmul.f32 %v1588, %v812
    %v1597 = vmul.f32 %v1586, %v813
    %v1598 = vmul.f32 %v1593, %v810
    %v1599 = vmul.f32 %v1591, %v811
    %v1600 = vmul.f32 %v1589, %v812
    %v1601 = vmul.f32 %v1587, %v813
    %1602 = vrot.lane.b32.xlu0 %v1530, 31
    %v1603 = vpop.permute.xlu0 %1602
    %1604 = vrot.lane.b32.xlu0 %v1534, 31
    %v1605 = vpop.permute.xlu0 %1604
    %1606 = vrot.lane.b32.xlu0 %v1531, 31
    %v1607 = vpop.permute.xlu0 %1606
    %1608 = vrot.lane.b32.xlu0 %v1535, 31
    %v1609 = vpop.permute.xlu0 %1608
    %1610 = vrot.lane.b32.xlu0 %v1532, 31
    %v1611 = vpop.permute.xlu0 %1610
    %1612 = vrot.lane.b32.xlu0 %v1536, 31
    %v1613 = vpop.permute.xlu0 %1612
    %1614 = vrot.lane.b32.xlu0 %v1533, 31
    %v1615 = vpop.permute.xlu0 %1614
    %1616 = vrot.lane.b32.xlu0 %v1537, 31
    %v1617 = vpop.permute.xlu0 %1616
    %v1618 = vsel %vm842, %v1611, %v1615
    %v1619 = vsel %vm842, %v1613, %v1617
    %v1620 = vsel %vm842, %v1607, %v1611
    %v1621 = vsel %vm842, %v1609, %v1613
    %v1622 = vsel %vm842, %v1603, %v1607
    %v1623 = vsel %vm842, %v1605, %v1609
    %v1624 = vsel %vm842, %v1615, %v1603
    %v1625 = vsel %vm842, %v1617, %v1605
    %v1626 = vmul.f32 %v1624, %v854
    %v1627 = vmul.f32 %v1622, %v855
    %v1628 = vmul.f32 %v1620, %v856
    %v1629 = vmul.f32 %v1618, %v857
    %v1630 = vmul.f32 %v1625, %v854
    %v1631 = vmul.f32 %v1623, %v855
    %v1632 = vmul.f32 %v1621, %v856
    %v1633 = vmul.f32 %v1619, %v857
    %1634 = vrot.lane.b32.xlu0 %v1530, 1
    %v1635 = vpop.permute.xlu0 %1634
    %1636 = vrot.lane.b32.xlu0 %v1534, 1
    %v1637 = vpop.permute.xlu0 %1636
    %1638 = vrot.lane.b32.xlu0 %v1531, 1
    %v1639 = vpop.permute.xlu0 %1638
    %1640 = vrot.lane.b32.xlu0 %v1535, 1
    %v1641 = vpop.permute.xlu0 %1640
    %1642 = vrot.lane.b32.xlu0 %v1532, 1
    %v1643 = vpop.permute.xlu0 %1642
    %1644 = vrot.lane.b32.xlu0 %v1536, 1
    %v1645 = vpop.permute.xlu0 %1644
    %1646 = vrot.lane.b32.xlu0 %v1533, 1
    %v1647 = vpop.permute.xlu0 %1646
    %1648 = vrot.lane.b32.xlu0 %v1537, 1
    %v1649 = vpop.permute.xlu0 %1648
    %v1650 = vsel %vm886, %v1643, %v1647
    %v1651 = vsel %vm886, %v1645, %v1649
    %v1652 = vsel %vm886, %v1639, %v1643
    %v1653 = vsel %vm886, %v1641, %v1645
    %v1654 = vsel %vm886, %v1635, %v1639
    %v1655 = vsel %vm886, %v1637, %v1641
    %v1656 = vsel %vm886, %v1647, %v1635
    %v1657 = vsel %vm886, %v1649, %v1637
    %v1658 = vmul.f32 %v1656, %v898
    %v1659 = vmul.f32 %v1654, %v899
    %v1660 = vmul.f32 %v1652, %v900
    %v1661 = vmul.f32 %v1650, %v901
    %v1662 = vmul.f32 %v1657, %v898
    %v1663 = vmul.f32 %v1655, %v899
    %v1664 = vmul.f32 %v1653, %v900
    %v1665 = vmul.f32 %v1651, %v901
    %v1666 = vmul.f32 %v1530, %v917
    %v1667 = vmul.f32 %v1531, %v918
    %v1668 = vmul.f32 %v1532, %v919
    %v1669 = vmul.f32 %v1533, %v920
    %v1670 = vmul.f32 %v1534, %v917
    %v1671 = vmul.f32 %v1535, %v918
    %v1672 = vmul.f32 %v1536, %v919
    %v1673 = vmul.f32 %v1537, %v920
    %1674 = vrot.lane.b32.xlu0 %v1530, 127
    %v1675 = vpop.permute.xlu0 %1674
    %1676 = vrot.lane.b32.xlu0 %v1534, 127
    %v1677 = vpop.permute.xlu0 %1676
    %1678 = vrot.lane.b32.xlu0 %v1531, 127
    %v1679 = vpop.permute.xlu0 %1678
    %1680 = vrot.lane.b32.xlu0 %v1535, 127
    %v1681 = vpop.permute.xlu0 %1680
    %1682 = vrot.lane.b32.xlu0 %v1532, 127
    %v1683 = vpop.permute.xlu0 %1682
    %1684 = vrot.lane.b32.xlu0 %v1536, 127
    %v1685 = vpop.permute.xlu0 %1684
    %1686 = vrot.lane.b32.xlu0 %v1533, 127
    %v1687 = vpop.permute.xlu0 %1686
    %1688 = vrot.lane.b32.xlu0 %v1537, 127
    %v1689 = vpop.permute.xlu0 %1688
    %v1690 = vsel %vm949, %v1683, %v1687
    %v1691 = vsel %vm949, %v1685, %v1689
    %v1692 = vsel %vm949, %v1679, %v1683
    %v1693 = vsel %vm949, %v1681, %v1685
    %v1694 = vsel %vm949, %v1675, %v1679
    %v1695 = vsel %vm949, %v1677, %v1681
    %v1696 = vsel %vm949, %v1687, %v1675
    %v1697 = vsel %vm949, %v1689, %v1677
    %v1698 = vmul.f32 %v1694, %v961
    %v1699 = vmul.f32 %v1692, %v962
    %v1700 = vmul.f32 %v1690, %v963
    %v1701 = vmul.f32 %v1696, %v964
    %v1702 = vmul.f32 %v1695, %v961
    %v1703 = vmul.f32 %v1693, %v962
    %v1704 = vmul.f32 %v1691, %v963
    %v1705 = vmul.f32 %v1697, %v964
    %1706 = vrot.lane.b32.xlu0 %v1530, 97
    %v1707 = vpop.permute.xlu0 %1706
    %1708 = vrot.lane.b32.xlu0 %v1534, 97
    %v1709 = vpop.permute.xlu0 %1708
    %1710 = vrot.lane.b32.xlu0 %v1531, 97
    %v1711 = vpop.permute.xlu0 %1710
    %1712 = vrot.lane.b32.xlu0 %v1535, 97
    %v1713 = vpop.permute.xlu0 %1712
    %1714 = vrot.lane.b32.xlu0 %v1532, 97
    %v1715 = vpop.permute.xlu0 %1714
    %1716 = vrot.lane.b32.xlu0 %v1536, 97
    %v1717 = vpop.permute.xlu0 %1716
    %1718 = vrot.lane.b32.xlu0 %v1533, 97
    %v1719 = vpop.permute.xlu0 %1718
    %1720 = vrot.lane.b32.xlu0 %v1537, 97
    %v1721 = vpop.permute.xlu0 %1720
    %v1722 = vsel %vm993, %v1715, %v1719
    %v1723 = vsel %vm993, %v1717, %v1721
    %v1724 = vsel %vm993, %v1711, %v1715
    %v1725 = vsel %vm993, %v1713, %v1717
    %v1726 = vsel %vm993, %v1707, %v1711
    %v1727 = vsel %vm993, %v1709, %v1713
    %v1728 = vsel %vm993, %v1719, %v1707
    %v1729 = vsel %vm993, %v1721, %v1709
    %v1730 = vmul.f32 %v1726, %v1005
    %v1731 = vmul.f32 %v1724, %v1006
    %v1732 = vmul.f32 %v1722, %v1007
    %v1733 = vmul.f32 %v1728, %v1008
    %v1734 = vmul.f32 %v1727, %v1005
    %v1735 = vmul.f32 %v1725, %v1006
    %v1736 = vmul.f32 %v1723, %v1007
    %v1737 = vmul.f32 %v1729, %v1008
    %1738 = vrot.lane.b32.xlu0 %v1530, 96
    %v1739 = vpop.permute.xlu0 %1738
    %1740 = vrot.lane.b32.xlu0 %v1534, 96
    %v1741 = vpop.permute.xlu0 %1740
    %1742 = vrot.lane.b32.xlu0 %v1531, 96
    %v1743 = vpop.permute.xlu0 %1742
    %1744 = vrot.lane.b32.xlu0 %v1535, 96
    %v1745 = vpop.permute.xlu0 %1744
    %1746 = vrot.lane.b32.xlu0 %v1532, 96
    %v1747 = vpop.permute.xlu0 %1746
    %1748 = vrot.lane.b32.xlu0 %v1536, 96
    %v1749 = vpop.permute.xlu0 %1748
    %1750 = vrot.lane.b32.xlu0 %v1533, 96
    %v1751 = vpop.permute.xlu0 %1750
    %1752 = vrot.lane.b32.xlu0 %v1537, 96
    %v1753 = vpop.permute.xlu0 %1752
    %v1754 = vsel %vm1037, %v1747, %v1751
    %v1755 = vsel %vm1037, %v1749, %v1753
    %v1756 = vsel %vm1037, %v1743, %v1747
    %v1757 = vsel %vm1037, %v1745, %v1749
    %v1758 = vsel %vm1037, %v1739, %v1743
    %v1759 = vsel %vm1037, %v1741, %v1745
    %v1760 = vsel %vm1037, %v1751, %v1739
    %v1761 = vsel %vm1037, %v1753, %v1741
    %v1762 = vmul.f32 %v1758, %v1049
    %v1763 = vmul.f32 %v1756, %v1050
    %v1764 = vmul.f32 %v1754, %v1051
    %v1765 = vmul.f32 %v1760, %v1052
    %v1766 = vmul.f32 %v1759, %v1049
    %v1767 = vmul.f32 %v1757, %v1050
    %v1768 = vmul.f32 %v1755, %v1051
    %v1769 = vmul.f32 %v1761, %v1052
    %1770 = vrot.lane.b32.xlu0 %v1530, 95
    %v1771 = vpop.permute.xlu0 %1770
    %1772 = vrot.lane.b32.xlu0 %v1534, 95
    %v1773 = vpop.permute.xlu0 %1772
    %1774 = vrot.lane.b32.xlu0 %v1531, 95
    %v1775 = vpop.permute.xlu0 %1774
    %1776 = vrot.lane.b32.xlu0 %v1535, 95
    %v1777 = vpop.permute.xlu0 %1776
    %1778 = vrot.lane.b32.xlu0 %v1532, 95
    %v1779 = vpop.permute.xlu0 %1778
    %1780 = vrot.lane.b32.xlu0 %v1536, 95
    %v1781 = vpop.permute.xlu0 %1780
    %1782 = vrot.lane.b32.xlu0 %v1533, 95
    %v1783 = vpop.permute.xlu0 %1782
    %1784 = vrot.lane.b32.xlu0 %v1537, 95
    %v1785 = vpop.permute.xlu0 %1784
    %v1786 = vsel %vm1081, %v1779, %v1783
    %v1787 = vsel %vm1081, %v1781, %v1785
    %v1788 = vsel %vm1081, %v1775, %v1779
    %v1789 = vsel %vm1081, %v1777, %v1781
    %v1790 = vsel %vm1081, %v1771, %v1775
    %v1791 = vsel %vm1081, %v1773, %v1777
    %v1792 = vsel %vm1081, %v1783, %v1771
    %v1793 = vsel %vm1081, %v1785, %v1773
    %v1794 = vmul.f32 %v1790, %v1093
    %v1795 = vmul.f32 %v1788, %v1094
    %v1796 = vmul.f32 %v1786, %v1095
    %v1797 = vmul.f32 %v1792, %v1096
    %v1798 = vmul.f32 %v1791, %v1093
    %v1799 = vmul.f32 %v1789, %v1094
    %v1800 = vmul.f32 %v1787, %v1095
    %v1801 = vmul.f32 %v1793, %v1096
    %v1802 = vld [vmem:[#allocation22] sm:$0xff]
    %v1803 = vld [vmem:[#allocation22 + $0x8] sm:$0xff]
    %v1804 = vpack.c.bf16 %v1566, %v1562
    %v1805 = vpack.c.bf16 %v1567, %v1563
    %v1806 = vpack.c.bf16 %v1568, %v1564
    %v1807 = vpack.c.bf16 %v1569, %v1565
    %v1808 = vpack.c.bf16 %v1598, %v1594
    %v1809 = vpack.c.bf16 %v1599, %v1595
    %v1810 = vpack.c.bf16 %v1600, %v1596
    %v1811 = vpack.c.bf16 %v1601, %v1597
    %v1812 = vpack.c.bf16 %v1630, %v1626
    %v1813 = vpack.c.bf16 %v1631, %v1627
    %v1814 = vpack.c.bf16 %v1632, %v1628
    %v1815 = vpack.c.bf16 %v1633, %v1629
    %v1816 = vpack.c.bf16 %v1662, %v1658
    %v1817 = vpack.c.bf16 %v1663, %v1659
    %v1818 = vpack.c.bf16 %v1664, %v1660
    %v1819 = vpack.c.bf16 %v1665, %v1661
    %v1820 = vpack.c.bf16 %v1670, %v1666
    %v1821 = vpack.c.bf16 %v1671, %v1667
    %v1822 = vpack.c.bf16 %v1672, %v1668
    %v1823 = vpack.c.bf16 %v1673, %v1669
    %v1824 = vpack.c.bf16 %v1702, %v1698
    %v1825 = vpack.c.bf16 %v1703, %v1699
    %v1826 = vpack.c.bf16 %v1704, %v1700
    %v1827 = vpack.c.bf16 %v1705, %v1701
    %v1828 = vpack.c.bf16 %v1734, %v1730
    %v1829 = vpack.c.bf16 %v1735, %v1731
    %v1830 = vpack.c.bf16 %v1736, %v1732
    %v1831 = vpack.c.bf16 %v1737, %v1733
    %v1832 = vpack.c.bf16 %v1766, %v1762
    %v1833 = vpack.c.bf16 %v1767, %v1763
    %v1834 = vpack.c.bf16 %v1768, %v1764
    %v1835 = vpack.c.bf16 %v1769, %v1765
    %v1836 = vpack.c.bf16 %v1798, %v1794
    %v1837 = vpack.c.bf16 %v1799, %v1795
    %v1838 = vpack.c.bf16 %v1800, %v1796
    %v1839 = vpack.c.bf16 %v1801, %v1797
    %v1840 = vld [vmem:[#allocation24] sm:$0xff]
    %v1841 = vld [vmem:[#allocation24 + $0x8] sm:$0xff]
    %1843 = vset.pattern.permute.xlu0 0
    %1844 = vperm.xlu0 %1843, %v1840
    %v1845 = vpop.permute.xlu0 %1844
    %1848 = vset.pattern.permute.xlu0 0
    %1849 = vperm.xlu0 %1848, %v1841
    %v1850 = vpop.permute.xlu0 %1849
    %v1854 = vunpack.c.l.b16 %v1802
    %v1855 = vunpack.c.h.b16 %v1802
    %v1856 = vunpack.c.l.b16 %v1803
    %v1857 = vunpack.c.h.b16 %v1803
    %v1858 = vpack.c.b16 %v1856, %v1854
    %v1859 = vpack.c.b16 %v1857, %v1855
    %v1862 = vsel %vm1168, %v1859, 0
    %1864 = vmatpush.bf16.msra.mxu0 %v1832
    %1865 = vmatpush.bf16.msra.mxu0 %v1828
    %1866 = vmatpush.bf16.msra.mxu0 %v1824
    %1867 = vmatpush.bf16.msra.mxu0 %v1820
    %1868 = vmatpush.bf16.msra.mxu0 %v1816
    %1869 = vmatpush.bf16.msra.mxu0 %v1812
    %1870 = vmatpush.bf16.msra.mxu0 %v1808
    %1871 = vmatpush.bf16.msra.mxu0 %v1804
    %1872 = vmatmul.bf16.gmra.mxu0 %v1858
    %v1873 = vpop.f32.mrf.mxu0
    %v1874 = vadd.f32 %v1845, %v1873
    %v1875 = vpop.f32.mrf.mxu0
    %v1876 = vadd.f32 %v1850, %v1875
    %1877 = vdwg.mxu0
    %1878 = vmatpush.bf16.msra.mxu0 0
    %1879 = vmatpush.bf16.msra.mxu0 0
    %1880 = vmatpush.bf16.msra.mxu0 0
    %1881 = vmatpush.bf16.msra.mxu0 0
    %1882 = vmatpush.bf16.msra.mxu0 0
    %1883 = vmatpush.bf16.msra.mxu0 0
    %1884 = vmatpush.bf16.msra.mxu0 0
    %1885 = vmatpush.bf16.msra.mxu0 %v1836
    %1886 = vmatmul.bf16.gmra.mxu0 %v1862
    %v1887 = vpop.f32.mrf.mxu0
    %v1888 = vadd.f32 %v1874, %v1887
    %v1889 = vpop.f32.mrf.mxu0
    %v1890 = vadd.f32 %v1876, %v1889
    %1891 = vdwg.mxu0
    %1892 = vmatpush.bf16.msra.mxu0 %v1833
    %1893 = vmatpush.bf16.msra.mxu0 %v1829
    %1894 = vmatpush.bf16.msra.mxu0 %v1825
    %1895 = vmatpush.bf16.msra.mxu0 %v1821
    %1896 = vmatpush.bf16.msra.mxu0 %v1817
    %1897 = vmatpush.bf16.msra.mxu0 %v1813
    %1898 = vmatpush.bf16.msra.mxu0 %v1809
    %1899 = vmatpush.bf16.msra.mxu0 %v1805
    %1900 = vmatmul.bf16.gmra.mxu0 %v1858
    %v1901 = vpop.f32.mrf.mxu0
    %v1902 = vadd.f32 %v1845, %v1901
    %v1903 = vpop.f32.mrf.mxu0
    %v1904 = vadd.f32 %v1850, %v1903
    %1905 = vdwg.mxu0
    %1906 = vmatpush.bf16.msra.mxu0 0
    %1907 = vmatpush.bf16.msra.mxu0 0
    %1908 = vmatpush.bf16.msra.mxu0 0
    %1909 = vmatpush.bf16.msra.mxu0 0
    %1910 = vmatpush.bf16.msra.mxu0 0
    %1911 = vmatpush.bf16.msra.mxu0 0
    %1912 = vmatpush.bf16.msra.mxu0 0
    %1913 = vmatpush.bf16.msra.mxu0 %v1837
    %1914 = vmatmul.bf16.gmra.mxu0 %v1862
    %v1915 = vpop.f32.mrf.mxu0
    %v1916 = vadd.f32 %v1902, %v1915
    %v1917 = vpop.f32.mrf.mxu0
    %v1918 = vadd.f32 %v1904, %v1917
    %1919 = vdwg.mxu0
    %1920 = vmatpush.bf16.msra.mxu0 %v1834
    %1921 = vmatpush.bf16.msra.mxu0 %v1830
    %1922 = vmatpush.bf16.msra.mxu0 %v1826
    %1923 = vmatpush.bf16.msra.mxu0 %v1822
    %1924 = vmatpush.bf16.msra.mxu0 %v1818
    %1925 = vmatpush.bf16.msra.mxu0 %v1814
    %1926 = vmatpush.bf16.msra.mxu0 %v1810
    %1927 = vmatpush.bf16.msra.mxu0 %v1806
    %1928 = vmatmul.bf16.gmra.mxu0 %v1858
    %v1929 = vpop.f32.mrf.mxu0
    %v1930 = vadd.f32 %v1845, %v1929
    %v1931 = vpop.f32.mrf.mxu0
    %v1932 = vadd.f32 %v1850, %v1931
    %1933 = vdwg.mxu0
    %1934 = vmatpush.bf16.msra.mxu0 0
    %1935 = vmatpush.bf16.msra.mxu0 0
    %1936 = vmatpush.bf16.msra.mxu0 0
    %1937 = vmatpush.bf16.msra.mxu0 0
    %1938 = vmatpush.bf16.msra.mxu0 0
    %1939 = vmatpush.bf16.msra.mxu0 0
    %1940 = vmatpush.bf16.msra.mxu0 0
    %1941 = vmatpush.bf16.msra.mxu0 %v1838
    %1942 = vmatmul.bf16.gmra.mxu0 %v1862
    %v1943 = vpop.f32.mrf.mxu0
    %v1944 = vadd.f32 %v1930, %v1943
    %v1945 = vpop.f32.mrf.mxu0
    %v1946 = vadd.f32 %v1932, %v1945
    %1947 = vdwg.mxu0
    %1948 = vmatpush.bf16.msra.mxu0 %v1835
    %1949 = vmatpush.bf16.msra.mxu0 %v1831
    %1950 = vmatpush.bf16.msra.mxu0 %v1827
    %1951 = vmatpush.bf16.msra.mxu0 %v1823
    %1952 = vmatpush.bf16.msra.mxu0 %v1819
    %1953 = vmatpush.bf16.msra.mxu0 %v1815
    %1954 = vmatpush.bf16.msra.mxu0 %v1811
    %1955 = vmatpush.bf16.msra.mxu0 %v1807
    %1956 = vmatmul.bf16.gmra.mxu0 %v1858
    %v1957 = vpop.f32.mrf.mxu0
    %v1958 = vadd.f32 %v1845, %v1957
    %v1959 = vpop.f32.mrf.mxu0
    %v1960 = vadd.f32 %v1850, %v1959
    %1961 = vdwg.mxu0
    %1962 = vmatpush.bf16.msra.mxu0 0
    %1963 = vmatpush.bf16.msra.mxu0 0
    %1964 = vmatpush.bf16.msra.mxu0 0
    %1965 = vmatpush.bf16.msra.mxu0 0
    %1966 = vmatpush.bf16.msra.mxu0 0
    %1967 = vmatpush.bf16.msra.mxu0 0
    %1968 = vmatpush.bf16.msra.mxu0 0
    %1969 = vmatpush.bf16.msra.mxu0 %v1839
    %1970 = vmatmul.bf16.gmra.mxu0 %v1862
    %v1971 = vpop.f32.mrf.mxu0
    %v1972 = vadd.f32 %v1958, %v1971
    %v1973 = vpop.f32.mrf.mxu0
    %v1974 = vadd.f32 %v1960, %v1973
    %1975 = vdwg.mxu0
    %v1976 = vadd.f32 %v1196, %v1888
    %v1977 = vadd.f32 %v1224, %v1916
    %v1978 = vadd.f32 %v1252, %v1944
    %v1979 = vadd.f32 %v1280, %v1972
    %v1980 = vadd.f32 %v1198, %v1890
    %v1981 = vadd.f32 %v1226, %v1918
    %v1982 = vadd.f32 %v1254, %v1946
    %v1983 = vadd.f32 %v1282, %v1974
    %v1984 = vld [vmem:[#allocation25] sm:$0x1]
    %v1985 = vpack.c.bf16 %v1980, %v1976
    %v1986 = vpack.c.bf16 %v1981, %v1977
    %v1987 = vpack.c.bf16 %v1982, %v1978
    %v1988 = vpack.c.bf16 %v1983, %v1979
    %v1990 = vsel %vm1168, %v1984, 0
    %1992 = vmatpush.bf16.msra.mxu0 0
    %1993 = vmatpush.bf16.msra.mxu0 0
    %1994 = vmatpush.bf16.msra.mxu0 0
    %1995 = vmatpush.bf16.msra.mxu0 0
    %1996 = vmatpush.bf16.msra.mxu0 0
    %1997 = vmatpush.bf16.msra.mxu0 0
    %1998 = vmatpush.bf16.msra.mxu0 0
    %1999 = vmatpush.bf16.msra.mxu0 %v1985
    %2000 = vmatmul.bf16.gmra.mxu0 %v1990
    %v2001 = vpop.f32.mrf.mxu0
    %v2002 = vadd.f32 0.0, %v2001
    %v2003 = vpop.f32.mrf.mxu0
    %2004 = vdwg.mxu0
    %2005 = vmatpush.bf16.msra.mxu0 0
    %2006 = vmatpush.bf16.msra.mxu0 0
    %2007 = vmatpush.bf16.msra.mxu0 0
    %2008 = vmatpush.bf16.msra.mxu0 0
    %2009 = vmatpush.bf16.msra.mxu0 0
    %2010 = vmatpush.bf16.msra.mxu0 0
    %2011 = vmatpush.bf16.msra.mxu0 0
    %2012 = vmatpush.bf16.msra.mxu0 %v1986
    %2013 = vmatmul.bf16.gmra.mxu0 %v1990
    %v2014 = vpop.f32.mrf.mxu0
    %v2015 = vadd.f32 0.0, %v2014
    %v2016 = vpop.f32.mrf.mxu0
    %2017 = vdwg.mxu0
    %2018 = vmatpush.bf16.msra.mxu0 0
    %2019 = vmatpush.bf16.msra.mxu0 0
    %2020 = vmatpush.bf16.msra.mxu0 0
    %2021 = vmatpush.bf16.msra.mxu0 0
    %2022 = vmatpush.bf16.msra.mxu0 0
    %2023 = vmatpush.bf16.msra.mxu0 0
    %2024 = vmatpush.bf16.msra.mxu0 0
    %2025 = vmatpush.bf16.msra.mxu0 %v1987
    %2026 = vmatmul.bf16.gmra.mxu0 %v1990
    %v2027 = vpop.f32.mrf.mxu0
    %v2028 = vadd.f32 0.0, %v2027
    %v2029 = vpop.f32.mrf.mxu0
    %2030 = vdwg.mxu0
    %2031 = vmatpush.bf16.msra.mxu0 0
    %2032 = vmatpush.bf16.msra.mxu0 0
    %2033 = vmatpush.bf16.msra.mxu0 0
    %2034 = vmatpush.bf16.msra.mxu0 0
    %2035 = vmatpush.bf16.msra.mxu0 0
    %2036 = vmatpush.bf16.msra.mxu0 0
    %2037 = vmatpush.bf16.msra.mxu0 0
    %2038 = vmatpush.bf16.msra.mxu0 %v1988
    %2039 = vmatmul.bf16.gmra.mxu0 %v1990
    %v2040 = vpop.f32.mrf.mxu0
    %v2041 = vadd.f32 0.0, %v2040
    %v2042 = vpop.f32.mrf.mxu0
    %2043 = vdwg.mxu0
    %v2044 = vpack.c.bf16 %v2002, %v2002
    %v2045 = vpack.c.bf16 %v2015, %v2015
    %v2046 = vpack.c.bf16 %v2028, %v2028
    %v2047 = vpack.c.bf16 %v2041, %v2041
    %v2048 = vld [vmem:[#allocation27] sm:$0xff]
    %v2049 = vld [vmem:[#allocation27 + $0x8] sm:$0xff]
    %v2050 = vld [vmem:[#allocation27 + $0x10] sm:$0xff]
    %v2051 = vld [vmem:[#allocation27 + $0x18] sm:$0xff]
    %v2052 = vld [vmem:[#allocation27 + $0x20] sm:$0xff]
    %v2053 = vld [vmem:[#allocation27 + $0x28] sm:$0xff]
    %v2054 = vld [vmem:[#allocation27 + $0x30] sm:$0xff]
    %v2055 = vld [vmem:[#allocation27 + $0x38] sm:$0xff]
    %v2056 = vld [vmem:[#allocation27 + $0x40] sm:$0xff]
    %v2057 = vld [vmem:[#allocation27 + $0x48] sm:$0xff]
    %v2058 = vld [vmem:[#allocation27 + $0x50] sm:$0xff]
    %v2059 = vld [vmem:[#allocation27 + $0x58] sm:$0xff]
    %v2060 = vld [vmem:[#allocation27 + $0x60] sm:$0xff]
    %v2061 = vld [vmem:[#allocation27 + $0x68] sm:$0xff]
    %v2062 = vld [vmem:[#allocation27 + $0x70] sm:$0xff]
    %v2063 = vld [vmem:[#allocation27 + $0x78] sm:$0xff]
    %v2064 = vld [vmem:[#allocation27 + $0x80] sm:$0xff]
    %v2065 = vld [vmem:[#allocation27 + $0x88] sm:$0xff]
    %v2066 = vld [vmem:[#allocation27 + $0x90] sm:$0xff]
    %v2067 = vld [vmem:[#allocation27 + $0x98] sm:$0xff]
    %v2068 = vld [vmem:[#allocation27 + $0xa0] sm:$0xff]
    %v2069 = vld [vmem:[#allocation27 + $0xa8] sm:$0xff]
    %v2070 = vld [vmem:[#allocation27 + $0xb0] sm:$0xff]
    %v2071 = vld [vmem:[#allocation27 + $0xb8] sm:$0xff]
    %v2072 = vld [vmem:[#allocation27 + $0xc0] sm:$0xff]
    %v2073 = vld [vmem:[#allocation27 + $0xc8] sm:$0xff]
    %v2074 = vld [vmem:[#allocation27 + $0xd0] sm:$0xff]
    %v2075 = vld [vmem:[#allocation27 + $0xd8] sm:$0xff]
    %v2076 = vld [vmem:[#allocation27 + $0xe0] sm:$0xff]
    %v2077 = vld [vmem:[#allocation27 + $0xe8] sm:$0xff]
    %v2078 = vld [vmem:[#allocation27 + $0xf0] sm:$0xff]
    %v2079 = vld [vmem:[#allocation27 + $0xf8] sm:$0xff]
    %v2080 = vld [vmem:[#allocation27 + $0x100] sm:$0xff]
    %v2081 = vld [vmem:[#allocation27 + $0x108] sm:$0xff]
    %v2082 = vld [vmem:[#allocation27 + $0x110] sm:$0xff]
    %v2083 = vld [vmem:[#allocation27 + $0x118] sm:$0xff]
    %v2084 = vld [vmem:[#allocation27 + $0x120] sm:$0xff]
    %v2085 = vld [vmem:[#allocation27 + $0x128] sm:$0xff]
    %v2086 = vld [vmem:[#allocation27 + $0x130] sm:$0xff]
    %v2087 = vld [vmem:[#allocation27 + $0x138] sm:$0xff]
    %v2088 = vld [vmem:[#allocation27 + $0x140] sm:$0xff]
    %v2089 = vld [vmem:[#allocation27 + $0x148] sm:$0xff]
    %v2090 = vld [vmem:[#allocation27 + $0x150] sm:$0xff]
    %v2091 = vld [vmem:[#allocation27 + $0x158] sm:$0xff]
    %v2092 = vld [vmem:[#allocation27 + $0x160] sm:$0xff]
    %v2093 = vld [vmem:[#allocation27 + $0x168] sm:$0xff]
    %v2094 = vld [vmem:[#allocation27 + $0x170] sm:$0xff]
    %v2095 = vld [vmem:[#allocation27 + $0x178] sm:$0xff]
    %v2096 = vld [vmem:[#allocation27 + $0x180] sm:$0xff]
    %v2097 = vld [vmem:[#allocation27 + $0x188] sm:$0xff]
    %v2098 = vld [vmem:[#allocation27 + $0x190] sm:$0xff]
    %v2099 = vld [vmem:[#allocation27 + $0x198] sm:$0xff]
    %v2100 = vld [vmem:[#allocation27 + $0x1a0] sm:$0xff]
    %v2101 = vld [vmem:[#allocation27 + $0x1a8] sm:$0xff]
    %v2102 = vld [vmem:[#allocation27 + $0x1b0] sm:$0xff]
    %v2103 = vld [vmem:[#allocation27 + $0x1b8] sm:$0xff]
    %v2104 = vld [vmem:[#allocation27 + $0x1c0] sm:$0xff]
    %v2105 = vld [vmem:[#allocation27 + $0x1c8] sm:$0xff]
    %v2106 = vld [vmem:[#allocation27 + $0x1d0] sm:$0xff]
    %v2107 = vld [vmem:[#allocation27 + $0x1d8] sm:$0xff]
    %v2108 = vld [vmem:[#allocation27 + $0x1e0] sm:$0xff]
    %v2109 = vld [vmem:[#allocation27 + $0x1e8] sm:$0xff]
    %v2110 = vld [vmem:[#allocation27 + $0x1f0] sm:$0xff]
    %v2111 = vld [vmem:[#allocation27 + $0x1f8] sm:$0xff]
    %v2112 = vld [vmem:[#allocation27 + $0x200] sm:$0xff]
    %v2113 = vld [vmem:[#allocation27 + $0x208] sm:$0xff]
    %v2114 = vld [vmem:[#allocation27 + $0x210] sm:$0xff]
    %v2115 = vld [vmem:[#allocation27 + $0x218] sm:$0xff]
    %v2116 = vld [vmem:[#allocation27 + $0x220] sm:$0xff]
    %v2117 = vld [vmem:[#allocation27 + $0x228] sm:$0xff]
    %v2118 = vld [vmem:[#allocation27 + $0x230] sm:$0xff]
    %v2119 = vld [vmem:[#allocation27 + $0x238] sm:$0xff]
    %v2120 = vld [vmem:[#allocation27 + $0x240] sm:$0xff]
    %v2121 = vld [vmem:[#allocation27 + $0x248] sm:$0xff]
    %v2122 = vld [vmem:[#allocation27 + $0x250] sm:$0xff]
    %v2123 = vld [vmem:[#allocation27 + $0x258] sm:$0xff]
    %v2124 = vld [vmem:[#allocation27 + $0x260] sm:$0xff]
    %v2125 = vld [vmem:[#allocation27 + $0x268] sm:$0xff]
    %v2126 = vld [vmem:[#allocation27 + $0x270] sm:$0xff]
    %v2127 = vld [vmem:[#allocation27 + $0x278] sm:$0xff]
    %v2128 = vld [vmem:[#allocation27 + $0x280] sm:$0xff]
    %v2129 = vld [vmem:[#allocation27 + $0x288] sm:$0xff]
    %v2130 = vld [vmem:[#allocation27 + $0x290] sm:$0xff]
    %v2131 = vld [vmem:[#allocation27 + $0x298] sm:$0xff]
    %v2132 = vld [vmem:[#allocation27 + $0x2a0] sm:$0xff]
    %v2133 = vld [vmem:[#allocation27 + $0x2a8] sm:$0xff]
    %v2134 = vld [vmem:[#allocation27 + $0x2b0] sm:$0xff]
    %v2135 = vld [vmem:[#allocation27 + $0x2b8] sm:$0xff]
    %v2136 = vld [vmem:[#allocation27 + $0x2c0] sm:$0xff]
    %v2137 = vld [vmem:[#allocation27 + $0x2c8] sm:$0xff]
    %v2138 = vld [vmem:[#allocation27 + $0x2d0] sm:$0xff]
    %v2139 = vld [vmem:[#allocation27 + $0x2d8] sm:$0xff]
    %v2140 = vld [vmem:[#allocation27 + $0x2e0] sm:$0xff]
    %v2141 = vld [vmem:[#allocation27 + $0x2e8] sm:$0xff]
    %v2142 = vld [vmem:[#allocation27 + $0x2f0] sm:$0xff]
    %v2143 = vld [vmem:[#allocation27 + $0x2f8] sm:$0xff]
    %v2144 = vld [vmem:[#allocation27 + $0x300] sm:$0xff]
    %v2145 = vld [vmem:[#allocation27 + $0x308] sm:$0xff]
    %v2146 = vld [vmem:[#allocation27 + $0x310] sm:$0xff]
    %v2147 = vld [vmem:[#allocation27 + $0x318] sm:$0xff]
    %v2148 = vld [vmem:[#allocation27 + $0x320] sm:$0xff]
    %v2149 = vld [vmem:[#allocation27 + $0x328] sm:$0xff]
    %v2150 = vld [vmem:[#allocation27 + $0x330] sm:$0xff]
    %v2151 = vld [vmem:[#allocation27 + $0x338] sm:$0xff]
    %v2152 = vld [vmem:[#allocation27 + $0x340] sm:$0xff]
    %v2153 = vld [vmem:[#allocation27 + $0x348] sm:$0xff]
    %v2154 = vld [vmem:[#allocation27 + $0x350] sm:$0xff]
    %v2155 = vld [vmem:[#allocation27 + $0x358] sm:$0xff]
    %v2156 = vld [vmem:[#allocation27 + $0x360] sm:$0xff]
    %v2157 = vld [vmem:[#allocation27 + $0x368] sm:$0xff]
    %v2158 = vld [vmem:[#allocation27 + $0x370] sm:$0xff]
    %v2159 = vld [vmem:[#allocation27 + $0x378] sm:$0xff]
    %v2160 = vld [vmem:[#allocation27 + $0x380] sm:$0xff]
    %v2161 = vld [vmem:[#allocation27 + $0x388] sm:$0xff]
    %v2162 = vld [vmem:[#allocation27 + $0x390] sm:$0xff]
    %v2163 = vld [vmem:[#allocation27 + $0x398] sm:$0xff]
    %v2164 = vld [vmem:[#allocation27 + $0x3a0] sm:$0xff]
    %v2165 = vld [vmem:[#allocation27 + $0x3a8] sm:$0xff]
    %v2166 = vld [vmem:[#allocation27 + $0x3b0] sm:$0xff]
    %v2167 = vld [vmem:[#allocation27 + $0x3b8] sm:$0xff]
    %v2168 = vld [vmem:[#allocation27 + $0x3c0] sm:$0xff]
    %v2169 = vld [vmem:[#allocation27 + $0x3c8] sm:$0xff]
    %v2170 = vld [vmem:[#allocation27 + $0x3d0] sm:$0xff]
    %v2171 = vld [vmem:[#allocation27 + $0x3d8] sm:$0xff]
    %v2172 = vld [vmem:[#allocation27 + $0x3e0] sm:$0xff]
    %v2173 = vld [vmem:[#allocation27 + $0x3e8] sm:$0xff]
    %v2174 = vld [vmem:[#allocation27 + $0x3f0] sm:$0xff]
    %v2175 = vld [vmem:[#allocation27 + $0x3f8] sm:$0xff]
    %v2176 = vld [vmem:[#allocation27 + $0x400] sm:$0xff]
    %v2177 = vld [vmem:[#allocation27 + $0x408] sm:$0xff]
    %v2178 = vld [vmem:[#allocation27 + $0x410] sm:$0xff]
    %v2179 = vld [vmem:[#allocation27 + $0x418] sm:$0xff]
    %v2180 = vld [vmem:[#allocation27 + $0x420] sm:$0xff]
    %v2181 = vld [vmem:[#allocation27 + $0x428] sm:$0xff]
    %v2182 = vld [vmem:[#allocation27 + $0x430] sm:$0xff]
    %v2183 = vld [vmem:[#allocation27 + $0x438] sm:$0xff]
    %v2184 = vld [vmem:[#allocation27 + $0x440] sm:$0xff]
    %v2185 = vld [vmem:[#allocation27 + $0x448] sm:$0xff]
    %v2186 = vld [vmem:[#allocation27 + $0x450] sm:$0xff]
    %v2187 = vld [vmem:[#allocation27 + $0x458] sm:$0xff]
    %v2188 = vld [vmem:[#allocation27 + $0x460] sm:$0xff]
    %v2189 = vld [vmem:[#allocation27 + $0x468] sm:$0xff]
    %v2190 = vld [vmem:[#allocation27 + $0x470] sm:$0xff]
    %v2191 = vld [vmem:[#allocation27 + $0x478] sm:$0xff]
    %v2192 = vld [vmem:[#allocation27 + $0x480] sm:$0xff]
    %v2193 = vld [vmem:[#allocation27 + $0x488] sm:$0xff]
    %v2194 = vld [vmem:[#allocation27 + $0x490] sm:$0xff]
    %v2195 = vld [vmem:[#allocation27 + $0x498] sm:$0xff]
    %v2196 = vld [vmem:[#allocation27 + $0x4a0] sm:$0xff]
    %v2197 = vld [vmem:[#allocation27 + $0x4a8] sm:$0xff]
    %v2198 = vld [vmem:[#allocation27 + $0x4b0] sm:$0xff]
    %v2199 = vld [vmem:[#allocation27 + $0x4b8] sm:$0xff]
    %v2200 = vld [vmem:[#allocation27 + $0x4c0] sm:$0xff]
    %v2201 = vld [vmem:[#allocation27 + $0x4c8] sm:$0xff]
    %v2202 = vld [vmem:[#allocation27 + $0x4d0] sm:$0xff]
    %v2203 = vld [vmem:[#allocation27 + $0x4d8] sm:$0xff]
    %v2204 = vld [vmem:[#allocation27 + $0x4e0] sm:$0xff]
    %v2205 = vld [vmem:[#allocation27 + $0x4e8] sm:$0xff]
    %v2206 = vld [vmem:[#allocation27 + $0x4f0] sm:$0xff]
    %v2207 = vld [vmem:[#allocation27 + $0x4f8] sm:$0xff]
    %v2208 = vld [vmem:[#allocation27 + $0x500] sm:$0xff]
    %v2209 = vld [vmem:[#allocation27 + $0x508] sm:$0xff]
    %v2210 = vld [vmem:[#allocation27 + $0x510] sm:$0xff]
    %v2211 = vld [vmem:[#allocation27 + $0x518] sm:$0xff]
    %v2212 = vld [vmem:[#allocation27 + $0x520] sm:$0xff]
    %v2213 = vld [vmem:[#allocation27 + $0x528] sm:$0xff]
    %v2214 = vld [vmem:[#allocation27 + $0x530] sm:$0xff]
    %v2215 = vld [vmem:[#allocation27 + $0x538] sm:$0xff]
    %v2216 = vld [vmem:[#allocation27 + $0x540] sm:$0xff]
    %v2217 = vld [vmem:[#allocation27 + $0x548] sm:$0xff]
    %v2218 = vld [vmem:[#allocation27 + $0x550] sm:$0xff]
    %v2219 = vld [vmem:[#allocation27 + $0x558] sm:$0xff]
    %v2220 = vld [vmem:[#allocation27 + $0x560] sm:$0xff]
    %v2221 = vld [vmem:[#allocation27 + $0x568] sm:$0xff]
    %v2222 = vld [vmem:[#allocation27 + $0x570] sm:$0xff]
    %v2223 = vld [vmem:[#allocation27 + $0x578] sm:$0xff]
    %v2224 = vld [vmem:[#allocation27 + $0x580] sm:$0xff]
    %v2225 = vld [vmem:[#allocation27 + $0x588] sm:$0xff]
    %v2226 = vld [vmem:[#allocation27 + $0x590] sm:$0xff]
    %v2227 = vld [vmem:[#allocation27 + $0x598] sm:$0xff]
    %v2228 = vld [vmem:[#allocation27 + $0x5a0] sm:$0xff]
    %v2229 = vld [vmem:[#allocation27 + $0x5a8] sm:$0xff]
    %v2230 = vld [vmem:[#allocation27 + $0x5b0] sm:$0xff]
    %v2231 = vld [vmem:[#allocation27 + $0x5b8] sm:$0xff]
    %v2232 = vld [vmem:[#allocation27 + $0x5c0] sm:$0xff]
    %v2233 = vld [vmem:[#allocation27 + $0x5c8] sm:$0xff]
    %v2234 = vld [vmem:[#allocation27 + $0x5d0] sm:$0xff]
    %v2235 = vld [vmem:[#allocation27 + $0x5d8] sm:$0xff]
    %v2236 = vld [vmem:[#allocation27 + $0x5e0] sm:$0xff]
    %v2237 = vld [vmem:[#allocation27 + $0x5e8] sm:$0xff]
    %v2238 = vld [vmem:[#allocation27 + $0x5f0] sm:$0xff]
    %v2239 = vld [vmem:[#allocation27 + $0x5f8] sm:$0xff]
    %v2240 = vld [vmem:[#allocation27 + $0x600] sm:$0xff]
    %v2241 = vld [vmem:[#allocation27 + $0x608] sm:$0xff]
    %v2242 = vld [vmem:[#allocation27 + $0x610] sm:$0xff]
    %v2243 = vld [vmem:[#allocation27 + $0x618] sm:$0xff]
    %v2244 = vld [vmem:[#allocation27 + $0x620] sm:$0xff]
    %v2245 = vld [vmem:[#allocation27 + $0x628] sm:$0xff]
    %v2246 = vld [vmem:[#allocation27 + $0x630] sm:$0xff]
    %v2247 = vld [vmem:[#allocation27 + $0x638] sm:$0xff]
    %v2248 = vld [vmem:[#allocation27 + $0x640] sm:$0xff]
    %v2249 = vld [vmem:[#allocation27 + $0x648] sm:$0xff]
    %v2250 = vld [vmem:[#allocation27 + $0x650] sm:$0xff]
    %v2251 = vld [vmem:[#allocation27 + $0x658] sm:$0xff]
    %v2252 = vld [vmem:[#allocation27 + $0x660] sm:$0xff]
    %v2253 = vld [vmem:[#allocation27 + $0x668] sm:$0xff]
    %v2254 = vld [vmem:[#allocation27 + $0x670] sm:$0xff]
    %v2255 = vld [vmem:[#allocation27 + $0x678] sm:$0xff]
    %v2256 = vld [vmem:[#allocation27 + $0x680] sm:$0xff]
    %v2257 = vld [vmem:[#allocation27 + $0x688] sm:$0xff]
    %v2258 = vld [vmem:[#allocation27 + $0x690] sm:$0xff]
    %v2259 = vld [vmem:[#allocation27 + $0x698] sm:$0xff]
    %v2260 = vld [vmem:[#allocation27 + $0x6a0] sm:$0xff]
    %v2261 = vld [vmem:[#allocation27 + $0x6a8] sm:$0xff]
    %v2262 = vld [vmem:[#allocation27 + $0x6b0] sm:$0xff]
    %v2263 = vld [vmem:[#allocation27 + $0x6b8] sm:$0xff]
    %v2264 = vld [vmem:[#allocation27 + $0x6c0] sm:$0xff]
    %v2265 = vld [vmem:[#allocation27 + $0x6c8] sm:$0xff]
    %v2266 = vld [vmem:[#allocation27 + $0x6d0] sm:$0xff]
    %v2267 = vld [vmem:[#allocation27 + $0x6d8] sm:$0xff]
    %v2268 = vld [vmem:[#allocation27 + $0x6e0] sm:$0xff]
    %v2269 = vld [vmem:[#allocation27 + $0x6e8] sm:$0xff]
    %v2270 = vld [vmem:[#allocation27 + $0x6f0] sm:$0xff]
    %v2271 = vld [vmem:[#allocation27 + $0x6f8] sm:$0xff]
    %v2272 = vld [vmem:[#allocation27 + $0x700] sm:$0xff]
    %v2273 = vld [vmem:[#allocation27 + $0x708] sm:$0xff]
    %v2274 = vld [vmem:[#allocation27 + $0x710] sm:$0xff]
    %v2275 = vld [vmem:[#allocation27 + $0x718] sm:$0xff]
    %v2276 = vld [vmem:[#allocation27 + $0x720] sm:$0xff]
    %v2277 = vld [vmem:[#allocation27 + $0x728] sm:$0xff]
    %v2278 = vld [vmem:[#allocation27 + $0x730] sm:$0xff]
    %v2279 = vld [vmem:[#allocation27 + $0x738] sm:$0xff]
    %v2280 = vld [vmem:[#allocation27 + $0x740] sm:$0xff]
    %v2281 = vld [vmem:[#allocation27 + $0x748] sm:$0xff]
    %v2282 = vld [vmem:[#allocation27 + $0x750] sm:$0xff]
    %v2283 = vld [vmem:[#allocation27 + $0x758] sm:$0xff]
    %v2284 = vld [vmem:[#allocation27 + $0x760] sm:$0xff]
    %v2285 = vld [vmem:[#allocation27 + $0x768] sm:$0xff]
    %v2286 = vld [vmem:[#allocation27 + $0x770] sm:$0xff]
    %v2287 = vld [vmem:[#allocation27 + $0x778] sm:$0xff]
    %v2288 = vld [vmem:[#allocation27 + $0x780] sm:$0xff]
    %v2289 = vld [vmem:[#allocation27 + $0x788] sm:$0xff]
    %v2290 = vld [vmem:[#allocation27 + $0x790] sm:$0xff]
    %v2291 = vld [vmem:[#allocation27 + $0x798] sm:$0xff]
    %v2292 = vld [vmem:[#allocation27 + $0x7a0] sm:$0xff]
    %v2293 = vld [vmem:[#allocation27 + $0x7a8] sm:$0xff]
    %v2294 = vld [vmem:[#allocation27 + $0x7b0] sm:$0xff]
    %v2295 = vld [vmem:[#allocation27 + $0x7b8] sm:$0xff]
    %v2296 = vld [vmem:[#allocation27 + $0x7c0] sm:$0xff]
    %v2297 = vld [vmem:[#allocation27 + $0x7c8] sm:$0xff]
    %v2298 = vld [vmem:[#allocation27 + $0x7d0] sm:$0xff]
    %v2299 = vld [vmem:[#allocation27 + $0x7d8] sm:$0xff]
    %v2300 = vld [vmem:[#allocation27 + $0x7e0] sm:$0xff]
    %v2301 = vld [vmem:[#allocation27 + $0x7e8] sm:$0xff]
    %v2302 = vld [vmem:[#allocation27 + $0x7f0] sm:$0xff]
    %v2303 = vld [vmem:[#allocation27 + $0x7f8] sm:$0xff]
    %v2304 = vld [vmem:[#allocation27 + $0x800] sm:$0xff]
    %v2305 = vld [vmem:[#allocation27 + $0x808] sm:$0xff]
    %v2306 = vld [vmem:[#allocation27 + $0x810] sm:$0xff]
    %v2307 = vld [vmem:[#allocation27 + $0x818] sm:$0xff]
    %v2308 = vld [vmem:[#allocation27 + $0x820] sm:$0xff]
    %v2309 = vld [vmem:[#allocation27 + $0x828] sm:$0xff]
    %v2310 = vld [vmem:[#allocation27 + $0x830] sm:$0xff]
    %v2311 = vld [vmem:[#allocation27 + $0x838] sm:$0xff]
    %v2312 = vld [vmem:[#allocation27 + $0x840] sm:$0xff]
    %v2313 = vld [vmem:[#allocation27 + $0x848] sm:$0xff]
    %v2314 = vld [vmem:[#allocation27 + $0x850] sm:$0xff]
    %v2315 = vld [vmem:[#allocation27 + $0x858] sm:$0xff]
    %v2316 = vld [vmem:[#allocation27 + $0x860] sm:$0xff]
    %v2317 = vld [vmem:[#allocation27 + $0x868] sm:$0xff]
    %v2318 = vld [vmem:[#allocation27 + $0x870] sm:$0xff]
    %v2319 = vld [vmem:[#allocation27 + $0x878] sm:$0xff]
    %v2320 = vld [vmem:[#allocation27 + $0x880] sm:$0xff]
    %v2321 = vld [vmem:[#allocation27 + $0x888] sm:$0xff]
    %v2322 = vld [vmem:[#allocation27 + $0x890] sm:$0xff]
    %v2323 = vld [vmem:[#allocation27 + $0x898] sm:$0xff]
    %v2324 = vld [vmem:[#allocation27 + $0x8a0] sm:$0xff]
    %v2325 = vld [vmem:[#allocation27 + $0x8a8] sm:$0xff]
    %v2326 = vld [vmem:[#allocation27 + $0x8b0] sm:$0xff]
    %v2327 = vld [vmem:[#allocation27 + $0x8b8] sm:$0xff]
    %v2328 = vld [vmem:[#allocation27 + $0x8c0] sm:$0xff]
    %v2329 = vld [vmem:[#allocation27 + $0x8c8] sm:$0xff]
    %v2330 = vld [vmem:[#allocation27 + $0x8d0] sm:$0xff]
    %v2331 = vld [vmem:[#allocation27 + $0x8d8] sm:$0xff]
    %v2332 = vld [vmem:[#allocation27 + $0x8e0] sm:$0xff]
    %v2333 = vld [vmem:[#allocation27 + $0x8e8] sm:$0xff]
    %v2334 = vld [vmem:[#allocation27 + $0x8f0] sm:$0xff]
    %v2335 = vld [vmem:[#allocation27 + $0x8f8] sm:$0xff]
    %v2336 = vld [vmem:[#allocation27 + $0x900] sm:$0xff]
    %v2337 = vld [vmem:[#allocation27 + $0x908] sm:$0xff]
    %v2338 = vld [vmem:[#allocation27 + $0x910] sm:$0xff]
    %v2339 = vld [vmem:[#allocation27 + $0x918] sm:$0xff]
    %v2340 = vld [vmem:[#allocation27 + $0x920] sm:$0xff]
    %v2341 = vld [vmem:[#allocation27 + $0x928] sm:$0xff]
    %v2342 = vld [vmem:[#allocation27 + $0x930] sm:$0xff]
    %v2343 = vld [vmem:[#allocation27 + $0x938] sm:$0xff]
    %v2344 = vld [vmem:[#allocation27 + $0x940] sm:$0xff]
    %v2345 = vld [vmem:[#allocation27 + $0x948] sm:$0xff]
    %v2346 = vld [vmem:[#allocation27 + $0x950] sm:$0xff]
    %v2347 = vld [vmem:[#allocation27 + $0x958] sm:$0xff]
    %v2348 = vld [vmem:[#allocation27 + $0x960] sm:$0xff]
    %v2349 = vld [vmem:[#allocation27 + $0x968] sm:$0xff]
    %v2350 = vld [vmem:[#allocation27 + $0x970] sm:$0xff]
    %v2351 = vld [vmem:[#allocation27 + $0x978] sm:$0xff]
    %v2352 = vld [vmem:[#allocation27 + $0x980] sm:$0xff]
    %v2353 = vld [vmem:[#allocation27 + $0x988] sm:$0xff]
    %v2354 = vld [vmem:[#allocation27 + $0x990] sm:$0xff]
    %v2355 = vld [vmem:[#allocation27 + $0x998] sm:$0xff]
    %v2356 = vld [vmem:[#allocation27 + $0x9a0] sm:$0xff]
    %v2357 = vld [vmem:[#allocation27 + $0x9a8] sm:$0xff]
    %v2358 = vld [vmem:[#allocation27 + $0x9b0] sm:$0xff]
    %v2359 = vld [vmem:[#allocation27 + $0x9b8] sm:$0xff]
    %v2360 = vld [vmem:[#allocation27 + $0x9c0] sm:$0xff]
    %v2361 = vld [vmem:[#allocation27 + $0x9c8] sm:$0xff]
    %v2362 = vld [vmem:[#allocation27 + $0x9d0] sm:$0xff]
    %v2363 = vld [vmem:[#allocation27 + $0x9d8] sm:$0xff]
    %v2364 = vld [vmem:[#allocation27 + $0x9e0] sm:$0xff]
    %v2365 = vld [vmem:[#allocation27 + $0x9e8] sm:$0xff]
    %v2366 = vld [vmem:[#allocation27 + $0x9f0] sm:$0xff]
    %v2367 = vld [vmem:[#allocation27 + $0x9f8] sm:$0xff]
    %v2368 = vld [vmem:[#allocation27 + $0xa00] sm:$0xff]
    %v2369 = vld [vmem:[#allocation27 + $0xa08] sm:$0xff]
    %v2370 = vld [vmem:[#allocation27 + $0xa10] sm:$0xff]
    %v2371 = vld [vmem:[#allocation27 + $0xa18] sm:$0xff]
    %v2372 = vld [vmem:[#allocation27 + $0xa20] sm:$0xff]
    %v2373 = vld [vmem:[#allocation27 + $0xa28] sm:$0xff]
    %v2374 = vld [vmem:[#allocation27 + $0xa30] sm:$0xff]
    %v2375 = vld [vmem:[#allocation27 + $0xa38] sm:$0xff]
    %v2376 = vld [vmem:[#allocation27 + $0xa40] sm:$0xff]
    %v2377 = vld [vmem:[#allocation27 + $0xa48] sm:$0xff]
    %v2378 = vld [vmem:[#allocation27 + $0xa50] sm:$0xff]
    %v2379 = vld [vmem:[#allocation27 + $0xa58] sm:$0xff]
    %v2380 = vld [vmem:[#allocation27 + $0xa60] sm:$0xff]
    %v2381 = vld [vmem:[#allocation27 + $0xa68] sm:$0xff]
    %v2382 = vld [vmem:[#allocation27 + $0xa70] sm:$0xff]
    %v2383 = vld [vmem:[#allocation27 + $0xa78] sm:$0xff]
    %v2384 = vld [vmem:[#allocation27 + $0xa80] sm:$0xff]
    %v2385 = vld [vmem:[#allocation27 + $0xa88] sm:$0xff]
    %v2386 = vld [vmem:[#allocation27 + $0xa90] sm:$0xff]
    %v2387 = vld [vmem:[#allocation27 + $0xa98] sm:$0xff]
    %v2388 = vld [vmem:[#allocation27 + $0xaa0] sm:$0xff]
    %v2389 = vld [vmem:[#allocation27 + $0xaa8] sm:$0xff]
    %v2390 = vld [vmem:[#allocation27 + $0xab0] sm:$0xff]
    %v2391 = vld [vmem:[#allocation27 + $0xab8] sm:$0xff]
    %v2392 = vld [vmem:[#allocation27 + $0xac0] sm:$0xff]
    %v2393 = vld [vmem:[#allocation27 + $0xac8] sm:$0xff]
    %v2394 = vld [vmem:[#allocation27 + $0xad0] sm:$0xff]
    %v2395 = vld [vmem:[#allocation27 + $0xad8] sm:$0xff]
    %v2396 = vld [vmem:[#allocation27 + $0xae0] sm:$0xff]
    %v2397 = vld [vmem:[#allocation27 + $0xae8] sm:$0xff]
    %v2398 = vld [vmem:[#allocation27 + $0xaf0] sm:$0xff]
    %v2399 = vld [vmem:[#allocation27 + $0xaf8] sm:$0xff]
    %v2400 = vld [vmem:[#allocation27 + $0xb00] sm:$0xff]
    %v2401 = vld [vmem:[#allocation27 + $0xb08] sm:$0xff]
    %v2402 = vld [vmem:[#allocation27 + $0xb10] sm:$0xff]
    %v2403 = vld [vmem:[#allocation27 + $0xb18] sm:$0xff]
    %v2404 = vld [vmem:[#allocation27 + $0xb20] sm:$0xff]
    %v2405 = vld [vmem:[#allocation27 + $0xb28] sm:$0xff]
    %v2406 = vld [vmem:[#allocation27 + $0xb30] sm:$0xff]
    %v2407 = vld [vmem:[#allocation27 + $0xb38] sm:$0xff]
    %v2408 = vld [vmem:[#allocation27 + $0xb40] sm:$0xff]
    %v2409 = vld [vmem:[#allocation27 + $0xb48] sm:$0xff]
    %v2410 = vld [vmem:[#allocation27 + $0xb50] sm:$0xff]
    %v2411 = vld [vmem:[#allocation27 + $0xb58] sm:$0xff]
    %v2412 = vld [vmem:[#allocation27 + $0xb60] sm:$0xff]
    %v2413 = vld [vmem:[#allocation27 + $0xb68] sm:$0xff]
    %v2414 = vld [vmem:[#allocation27 + $0xb70] sm:$0xff]
    %v2415 = vld [vmem:[#allocation27 + $0xb78] sm:$0xff]
    %v2416 = vld [vmem:[#allocation27 + $0xb80] sm:$0xff]
    %v2417 = vld [vmem:[#allocation27 + $0xb88] sm:$0xff]
    %v2418 = vld [vmem:[#allocation27 + $0xb90] sm:$0xff]
    %v2419 = vld [vmem:[#allocation27 + $0xb98] sm:$0xff]
    %v2420 = vld [vmem:[#allocation27 + $0xba0] sm:$0xff]
    %v2421 = vld [vmem:[#allocation27 + $0xba8] sm:$0xff]
    %v2422 = vld [vmem:[#allocation27 + $0xbb0] sm:$0xff]
    %v2423 = vld [vmem:[#allocation27 + $0xbb8] sm:$0xff]
    %v2424 = vld [vmem:[#allocation27 + $0xbc0] sm:$0xff]
    %v2425 = vld [vmem:[#allocation27 + $0xbc8] sm:$0xff]
    %v2426 = vld [vmem:[#allocation27 + $0xbd0] sm:$0xff]
    %v2427 = vld [vmem:[#allocation27 + $0xbd8] sm:$0xff]
    %v2428 = vld [vmem:[#allocation27 + $0xbe0] sm:$0xff]
    %v2429 = vld [vmem:[#allocation27 + $0xbe8] sm:$0xff]
    %v2430 = vld [vmem:[#allocation27 + $0xbf0] sm:$0xff]
    %v2431 = vld [vmem:[#allocation27 + $0xbf8] sm:$0xff]
    %v2432 = vld [vmem:[#allocation27 + $0xc00] sm:$0xff]
    %v2433 = vld [vmem:[#allocation27 + $0xc08] sm:$0xff]
    %v2434 = vld [vmem:[#allocation27 + $0xc10] sm:$0xff]
    %v2435 = vld [vmem:[#allocation27 + $0xc18] sm:$0xff]
    %v2436 = vld [vmem:[#allocation27 + $0xc20] sm:$0xff]
    %v2437 = vld [vmem:[#allocation27 + $0xc28] sm:$0xff]
    %v2438 = vld [vmem:[#allocation27 + $0xc30] sm:$0xff]
    %v2439 = vld [vmem:[#allocation27 + $0xc38] sm:$0xff]
    %v2440 = vld [vmem:[#allocation27 + $0xc40] sm:$0xff]
    %v2441 = vld [vmem:[#allocation27 + $0xc48] sm:$0xff]
    %v2442 = vld [vmem:[#allocation27 + $0xc50] sm:$0xff]
    %v2443 = vld [vmem:[#allocation27 + $0xc58] sm:$0xff]
    %v2444 = vld [vmem:[#allocation27 + $0xc60] sm:$0xff]
    %v2445 = vld [vmem:[#allocation27 + $0xc68] sm:$0xff]
    %v2446 = vld [vmem:[#allocation27 + $0xc70] sm:$0xff]
    %v2447 = vld [vmem:[#allocation27 + $0xc78] sm:$0xff]
    %v2448 = vld [vmem:[#allocation27 + $0xc80] sm:$0xff]
    %v2449 = vld [vmem:[#allocation27 + $0xc88] sm:$0xff]
    %v2450 = vld [vmem:[#allocation27 + $0xc90] sm:$0xff]
    %v2451 = vld [vmem:[#allocation27 + $0xc98] sm:$0xff]
    %v2452 = vld [vmem:[#allocation27 + $0xca0] sm:$0xff]
    %v2453 = vld [vmem:[#allocation27 + $0xca8] sm:$0xff]
    %v2454 = vld [vmem:[#allocation27 + $0xcb0] sm:$0xff]
    %v2455 = vld [vmem:[#allocation27 + $0xcb8] sm:$0xff]
    %v2456 = vld [vmem:[#allocation27 + $0xcc0] sm:$0xff]
    %v2457 = vld [vmem:[#allocation27 + $0xcc8] sm:$0xff]
    %v2458 = vld [vmem:[#allocation27 + $0xcd0] sm:$0xff]
    %v2459 = vld [vmem:[#allocation27 + $0xcd8] sm:$0xff]
    %v2460 = vld [vmem:[#allocation27 + $0xce0] sm:$0xff]
    %v2461 = vld [vmem:[#allocation27 + $0xce8] sm:$0xff]
    %v2462 = vld [vmem:[#allocation27 + $0xcf0] sm:$0xff]
    %v2463 = vld [vmem:[#allocation27 + $0xcf8] sm:$0xff]
    %v2464 = vld [vmem:[#allocation27 + $0xd00] sm:$0xff]
    %v2465 = vld [vmem:[#allocation27 + $0xd08] sm:$0xff]
    %v2466 = vld [vmem:[#allocation27 + $0xd10] sm:$0xff]
    %v2467 = vld [vmem:[#allocation27 + $0xd18] sm:$0xff]
    %v2468 = vld [vmem:[#allocation27 + $0xd20] sm:$0xff]
    %v2469 = vld [vmem:[#allocation27 + $0xd28] sm:$0xff]
    %v2470 = vld [vmem:[#allocation27 + $0xd30] sm:$0xff]
    %v2471 = vld [vmem:[#allocation27 + $0xd38] sm:$0xff]
    %v2472 = vld [vmem:[#allocation27 + $0xd40] sm:$0xff]
    %v2473 = vld [vmem:[#allocation27 + $0xd48] sm:$0xff]
    %v2474 = vld [vmem:[#allocation27 + $0xd50] sm:$0xff]
    %v2475 = vld [vmem:[#allocation27 + $0xd58] sm:$0xff]
    %v2476 = vld [vmem:[#allocation27 + $0xd60] sm:$0xff]
    %v2477 = vld [vmem:[#allocation27 + $0xd68] sm:$0xff]
    %v2478 = vld [vmem:[#allocation27 + $0xd70] sm:$0xff]
    %v2479 = vld [vmem:[#allocation27 + $0xd78] sm:$0xff]
    %v2480 = vld [vmem:[#allocation27 + $0xd80] sm:$0xff]
    %v2481 = vld [vmem:[#allocation27 + $0xd88] sm:$0xff]
    %v2482 = vld [vmem:[#allocation27 + $0xd90] sm:$0xff]
    %v2483 = vld [vmem:[#allocation27 + $0xd98] sm:$0xff]
    %v2484 = vld [vmem:[#allocation27 + $0xda0] sm:$0xff]
    %v2485 = vld [vmem:[#allocation27 + $0xda8] sm:$0xff]
    %v2486 = vld [vmem:[#allocation27 + $0xdb0] sm:$0xff]
    %v2487 = vld [vmem:[#allocation27 + $0xdb8] sm:$0xff]
    %v2488 = vld [vmem:[#allocation27 + $0xdc0] sm:$0xff]
    %v2489 = vld [vmem:[#allocation27 + $0xdc8] sm:$0xff]
    %v2490 = vld [vmem:[#allocation27 + $0xdd0] sm:$0xff]
    %v2491 = vld [vmem:[#allocation27 + $0xdd8] sm:$0xff]
    %v2492 = vld [vmem:[#allocation27 + $0xde0] sm:$0xff]
    %v2493 = vld [vmem:[#allocation27 + $0xde8] sm:$0xff]
    %v2494 = vld [vmem:[#allocation27 + $0xdf0] sm:$0xff]
    %v2495 = vld [vmem:[#allocation27 + $0xdf8] sm:$0xff]
    %v2496 = vld [vmem:[#allocation27 + $0xe00] sm:$0xff]
    %v2497 = vld [vmem:[#allocation27 + $0xe08] sm:$0xff]
    %v2498 = vld [vmem:[#allocation27 + $0xe10] sm:$0xff]
    %v2499 = vld [vmem:[#allocation27 + $0xe18] sm:$0xff]
    %v2500 = vld [vmem:[#allocation27 + $0xe20] sm:$0xff]
    %v2501 = vld [vmem:[#allocation27 + $0xe28] sm:$0xff]
    %v2502 = vld [vmem:[#allocation27 + $0xe30] sm:$0xff]
    %v2503 = vld [vmem:[#allocation27 + $0xe38] sm:$0xff]
    %v2504 = vld [vmem:[#allocation27 + $0xe40] sm:$0xff]
    %v2505 = vld [vmem:[#allocation27 + $0xe48] sm:$0xff]
    %v2506 = vld [vmem:[#allocation27 + $0xe50] sm:$0xff]
    %v2507 = vld [vmem:[#allocation27 + $0xe58] sm:$0xff]
    %v2508 = vld [vmem:[#allocation27 + $0xe60] sm:$0xff]
    %v2509 = vld [vmem:[#allocation27 + $0xe68] sm:$0xff]
    %v2510 = vld [vmem:[#allocation27 + $0xe70] sm:$0xff]
    %v2511 = vld [vmem:[#allocation27 + $0xe78] sm:$0xff]
    %v2512 = vld [vmem:[#allocation27 + $0xe80] sm:$0xff]
    %v2513 = vld [vmem:[#allocation27 + $0xe88] sm:$0xff]
    %v2514 = vld [vmem:[#allocation27 + $0xe90] sm:$0xff]
    %v2515 = vld [vmem:[#allocation27 + $0xe98] sm:$0xff]
    %v2516 = vld [vmem:[#allocation27 + $0xea0] sm:$0xff]
    %v2517 = vld [vmem:[#allocation27 + $0xea8] sm:$0xff]
    %v2518 = vld [vmem:[#allocation27 + $0xeb0] sm:$0xff]
    %v2519 = vld [vmem:[#allocation27 + $0xeb8] sm:$0xff]
    %v2520 = vld [vmem:[#allocation27 + $0xec0] sm:$0xff]
    %v2521 = vld [vmem:[#allocation27 + $0xec8] sm:$0xff]
    %v2522 = vld [vmem:[#allocation27 + $0xed0] sm:$0xff]
    %v2523 = vld [vmem:[#allocation27 + $0xed8] sm:$0xff]
    %v2524 = vld [vmem:[#allocation27 + $0xee0] sm:$0xff]
    %v2525 = vld [vmem:[#allocation27 + $0xee8] sm:$0xff]
    %v2526 = vld [vmem:[#allocation27 + $0xef0] sm:$0xff]
    %v2527 = vld [vmem:[#allocation27 + $0xef8] sm:$0xff]
    %v2528 = vld [vmem:[#allocation27 + $0xf00] sm:$0xff]
    %v2529 = vld [vmem:[#allocation27 + $0xf08] sm:$0xff]
    %v2530 = vld [vmem:[#allocation27 + $0xf10] sm:$0xff]
    %v2531 = vld [vmem:[#allocation27 + $0xf18] sm:$0xff]
    %v2532 = vld [vmem:[#allocation27 + $0xf20] sm:$0xff]
    %v2533 = vld [vmem:[#allocation27 + $0xf28] sm:$0xff]
    %v2534 = vld [vmem:[#allocation27 + $0xf30] sm:$0xff]
    %v2535 = vld [vmem:[#allocation27 + $0xf38] sm:$0xff]
    %v2536 = vld [vmem:[#allocation27 + $0xf40] sm:$0xff]
    %v2537 = vld [vmem:[#allocation27 + $0xf48] sm:$0xff]
    %v2538 = vld [vmem:[#allocation27 + $0xf50] sm:$0xff]
    %v2539 = vld [vmem:[#allocation27 + $0xf58] sm:$0xff]
    %v2540 = vld [vmem:[#allocation27 + $0xf60] sm:$0xff]
    %v2541 = vld [vmem:[#allocation27 + $0xf68] sm:$0xff]
    %v2542 = vld [vmem:[#allocation27 + $0xf70] sm:$0xff]
    %v2543 = vld [vmem:[#allocation27 + $0xf78] sm:$0xff]
    %v2544 = vld [vmem:[#allocation27 + $0xf80] sm:$0xff]
    %v2545 = vld [vmem:[#allocation27 + $0xf88] sm:$0xff]
    %v2546 = vld [vmem:[#allocation27 + $0xf90] sm:$0xff]
    %v2547 = vld [vmem:[#allocation27 + $0xf98] sm:$0xff]
    %v2548 = vld [vmem:[#allocation27 + $0xfa0] sm:$0xff]
    %v2549 = vld [vmem:[#allocation27 + $0xfa8] sm:$0xff]
    %v2550 = vld [vmem:[#allocation27 + $0xfb0] sm:$0xff]
    %v2551 = vld [vmem:[#allocation27 + $0xfb8] sm:$0xff]
    %v2552 = vld [vmem:[#allocation27 + $0xfc0] sm:$0xff]
    %v2553 = vld [vmem:[#allocation27 + $0xfc8] sm:$0xff]
    %v2554 = vld [vmem:[#allocation27 + $0xfd0] sm:$0xff]
    %v2555 = vld [vmem:[#allocation27 + $0xfd8] sm:$0xff]
    %v2556 = vld [vmem:[#allocation27 + $0xfe0] sm:$0xff]
    %v2557 = vld [vmem:[#allocation27 + $0xfe8] sm:$0xff]
    %v2558 = vld [vmem:[#allocation27 + $0xff0] sm:$0xff]
    %v2559 = vld [vmem:[#allocation27 + $0xff8] sm:$0xff]
    %v3072 = vunpack.c.l.b16 %v2048
    %v3073 = vunpack.c.h.b16 %v2048
    %v3074 = vunpack.c.l.b16 %v2049
    %v3075 = vunpack.c.h.b16 %v2049
    %v3076 = vunpack.c.l.b16 %v2050
    %v3077 = vunpack.c.h.b16 %v2050
    %v3078 = vunpack.c.l.b16 %v2051
    %v3079 = vunpack.c.h.b16 %v2051
    %v3080 = vunpack.c.l.b16 %v2052
    %v3081 = vunpack.c.h.b16 %v2052
    %v3082 = vunpack.c.l.b16 %v2053
    %v3083 = vunpack.c.h.b16 %v2053
    %v3084 = vunpack.c.l.b16 %v2054
    %v3085 = vunpack.c.h.b16 %v2054
    %v3086 = vunpack.c.l.b16 %v2055
    %v3087 = vunpack.c.h.b16 %v2055
    %v3088 = vunpack.c.l.b16 %v2056
    %v3089 = vunpack.c.h.b16 %v2056
    %v3090 = vunpack.c.l.b16 %v2057
    %v3091 = vunpack.c.h.b16 %v2057
    %v3092 = vunpack.c.l.b16 %v2058
    %v3093 = vunpack.c.h.b16 %v2058
    %v3094 = vunpack.c.l.b16 %v2059
    %v3095 = vunpack.c.h.b16 %v2059
    %v3096 = vunpack.c.l.b16 %v2060
    %v3097 = vunpack.c.h.b16 %v2060
    %v3098 = vunpack.c.l.b16 %v2061
    %v3099 = vunpack.c.h.b16 %v2061
    %v3100 = vunpack.c.l.b16 %v2062
    %v3101 = vunpack.c.h.b16 %v2062
    %v3102 = vunpack.c.l.b16 %v2063
    %v3103 = vunpack.c.h.b16 %v2063
    %v3104 = vunpack.c.l.b16 %v2064
    %v3105 = vunpack.c.h.b16 %v2064
    %v3106 = vunpack.c.l.b16 %v2065
    %v3107 = vunpack.c.h.b16 %v2065
    %v3108 = vunpack.c.l.b16 %v2066
    %v3109 = vunpack.c.h.b16 %v2066
    %v3110 = vunpack.c.l.b16 %v2067
    %v3111 = vunpack.c.h.b16 %v2067
    %v3112 = vunpack.c.l.b16 %v2068
    %v3113 = vunpack.c.h.b16 %v2068
    %v3114 = vunpack.c.l.b16 %v2069
    %v3115 = vunpack.c.h.b16 %v2069
    %v3116 = vunpack.c.l.b16 %v2070
    %v3117 = vunpack.c.h.b16 %v2070
    %v3118 = vunpack.c.l.b16 %v2071
    %v3119 = vunpack.c.h.b16 %v2071
    %v3120 = vunpack.c.l.b16 %v2072
    %v3121 = vunpack.c.h.b16 %v2072
    %v3122 = vunpack.c.l.b16 %v2073
    %v3123 = vunpack.c.h.b16 %v2073
    %v3124 = vunpack.c.l.b16 %v2074
    %v3125 = vunpack.c.h.b16 %v2074
    %v3126 = vunpack.c.l.b16 %v2075
    %v3127 = vunpack.c.h.b16 %v2075
    %v3128 = vunpack.c.l.b16 %v2076
    %v3129 = vunpack.c.h.b16 %v2076
    %v3130 = vunpack.c.l.b16 %v2077
    %v3131 = vunpack.c.h.b16 %v2077
    %v3132 = vunpack.c.l.b16 %v2078
    %v3133 = vunpack.c.h.b16 %v2078
    %v3134 = vunpack.c.l.b16 %v2079
    %v3135 = vunpack.c.h.b16 %v2079
    %v3136 = vunpack.c.l.b16 %v2080
    %v3137 = vunpack.c.h.b16 %v2080
    %v3138 = vunpack.c.l.b16 %v2081
    %v3139 = vunpack.c.h.b16 %v2081
    %v3140 = vunpack.c.l.b16 %v2082
    %v3141 = vunpack.c.h.b16 %v2082
    %v3142 = vunpack.c.l.b16 %v2083
    %v3143 = vunpack.c.h.b16 %v2083
    %v3144 = vunpack.c.l.b16 %v2084
    %v3145 = vunpack.c.h.b16 %v2084
    %v3146 = vunpack.c.l.b16 %v2085
    %v3147 = vunpack.c.h.b16 %v2085
    %v3148 = vunpack.c.l.b16 %v2086
    %v3149 = vunpack.c.h.b16 %v2086
    %v3150 = vunpack.c.l.b16 %v2087
    %v3151 = vunpack.c.h.b16 %v2087
    %v3152 = vunpack.c.l.b16 %v2088
    %v3153 = vunpack.c.h.b16 %v2088
    %v3154 = vunpack.c.l.b16 %v2089
    %v3155 = vunpack.c.h.b16 %v2089
    %v3156 = vunpack.c.l.b16 %v2090
    %v3157 = vunpack.c.h.b16 %v2090
    %v3158 = vunpack.c.l.b16 %v2091
    %v3159 = vunpack.c.h.b16 %v2091
    %v3160 = vunpack.c.l.b16 %v2092
    %v3161 = vunpack.c.h.b16 %v2092
    %v3162 = vunpack.c.l.b16 %v2093
    %v3163 = vunpack.c.h.b16 %v2093
    %v3164 = vunpack.c.l.b16 %v2094
    %v3165 = vunpack.c.h.b16 %v2094
    %v3166 = vunpack.c.l.b16 %v2095
    %v3167 = vunpack.c.h.b16 %v2095
    %v3168 = vunpack.c.l.b16 %v2096
    %v3169 = vunpack.c.h.b16 %v2096
    %v3170 = vunpack.c.l.b16 %v2097
    %v3171 = vunpack.c.h.b16 %v2097
    %v3172 = vunpack.c.l.b16 %v2098
    %v3173 = vunpack.c.h.b16 %v2098
    %v3174 = vunpack.c.l.b16 %v2099
    %v3175 = vunpack.c.h.b16 %v2099
    %v3176 = vunpack.c.l.b16 %v2100
    %v3177 = vunpack.c.h.b16 %v2100
    %v3178 = vunpack.c.l.b16 %v2101
    %v3179 = vunpack.c.h.b16 %v2101
    %v3180 = vunpack.c.l.b16 %v2102
    %v3181 = vunpack.c.h.b16 %v2102
    %v3182 = vunpack.c.l.b16 %v2103
    %v3183 = vunpack.c.h.b16 %v2103
    %v3184 = vunpack.c.l.b16 %v2104
    %v3185 = vunpack.c.h.b16 %v2104
    %v3186 = vunpack.c.l.b16 %v2105
    %v3187 = vunpack.c.h.b16 %v2105
    %v3188 = vunpack.c.l.b16 %v2106
    %v3189 = vunpack.c.h.b16 %v2106
    %v3190 = vunpack.c.l.b16 %v2107
    %v3191 = vunpack.c.h.b16 %v2107
    %v3192 = vunpack.c.l.b16 %v2108
    %v3193 = vunpack.c.h.b16 %v2108
    %v3194 = vunpack.c.l.b16 %v2109
    %v3195 = vunpack.c.h.b16 %v2109
    %v3196 = vunpack.c.l.b16 %v2110
    %v3197 = vunpack.c.h.b16 %v2110
    %v3198 = vunpack.c.l.b16 %v2111
    %v3199 = vunpack.c.h.b16 %v2111
    %v3200 = vunpack.c.l.b16 %v2112
    %v3201 = vunpack.c.h.b16 %v2112
    %v3202 = vunpack.c.l.b16 %v2113
    %v3203 = vunpack.c.h.b16 %v2113
    %v3204 = vunpack.c.l.b16 %v2114
    %v3205 = vunpack.c.h.b16 %v2114
    %v3206 = vunpack.c.l.b16 %v2115
    %v3207 = vunpack.c.h.b16 %v2115
    %v3208 = vunpack.c.l.b16 %v2116
    %v3209 = vunpack.c.h.b16 %v2116
    %v3210 = vunpack.c.l.b16 %v2117
    %v3211 = vunpack.c.h.b16 %v2117
    %v3212 = vunpack.c.l.b16 %v2118
    %v3213 = vunpack.c.h.b16 %v2118
    %v3214 = vunpack.c.l.b16 %v2119
    %v3215 = vunpack.c.h.b16 %v2119
    %v3216 = vunpack.c.l.b16 %v2120
    %v3217 = vunpack.c.h.b16 %v2120
    %v3218 = vunpack.c.l.b16 %v2121
    %v3219 = vunpack.c.h.b16 %v2121
    %v3220 = vunpack.c.l.b16 %v2122
    %v3221 = vunpack.c.h.b16 %v2122
    %v3222 = vunpack.c.l.b16 %v2123
    %v3223 = vunpack.c.h.b16 %v2123
    %v3224 = vunpack.c.l.b16 %v2124
    %v3225 = vunpack.c.h.b16 %v2124
    %v3226 = vunpack.c.l.b16 %v2125
    %v3227 = vunpack.c.h.b16 %v2125
    %v3228 = vunpack.c.l.b16 %v2126
    %v3229 = vunpack.c.h.b16 %v2126
    %v3230 = vunpack.c.l.b16 %v2127
    %v3231 = vunpack.c.h.b16 %v2127
    %v3232 = vunpack.c.l.b16 %v2128
    %v3233 = vunpack.c.h.b16 %v2128
    %v3234 = vunpack.c.l.b16 %v2129
    %v3235 = vunpack.c.h.b16 %v2129
    %v3236 = vunpack.c.l.b16 %v2130
    %v3237 = vunpack.c.h.b16 %v2130
    %v3238 = vunpack.c.l.b16 %v2131
    %v3239 = vunpack.c.h.b16 %v2131
    %v3240 = vunpack.c.l.b16 %v2132
    %v3241 = vunpack.c.h.b16 %v2132
    %v3242 = vunpack.c.l.b16 %v2133
    %v3243 = vunpack.c.h.b16 %v2133
    %v3244 = vunpack.c.l.b16 %v2134
    %v3245 = vunpack.c.h.b16 %v2134
    %v3246 = vunpack.c.l.b16 %v2135
    %v3247 = vunpack.c.h.b16 %v2135
    %v3248 = vunpack.c.l.b16 %v2136
    %v3249 = vunpack.c.h.b16 %v2136
    %v3250 = vunpack.c.l.b16 %v2137
    %v3251 = vunpack.c.h.b16 %v2137
    %v3252 = vunpack.c.l.b16 %v2138
    %v3253 = vunpack.c.h.b16 %v2138
    %v3254 = vunpack.c.l.b16 %v2139
    %v3255 = vunpack.c.h.b16 %v2139
    %v3256 = vunpack.c.l.b16 %v2140
    %v3257 = vunpack.c.h.b16 %v2140
    %v3258 = vunpack.c.l.b16 %v2141
    %v3259 = vunpack.c.h.b16 %v2141
    %v3260 = vunpack.c.l.b16 %v2142
    %v3261 = vunpack.c.h.b16 %v2142
    %v3262 = vunpack.c.l.b16 %v2143
    %v3263 = vunpack.c.h.b16 %v2143
    %v3264 = vunpack.c.l.b16 %v2144
    %v3265 = vunpack.c.h.b16 %v2144
    %v3266 = vunpack.c.l.b16 %v2145
    %v3267 = vunpack.c.h.b16 %v2145
    %v3268 = vunpack.c.l.b16 %v2146
    %v3269 = vunpack.c.h.b16 %v2146
    %v3270 = vunpack.c.l.b16 %v2147
    %v3271 = vunpack.c.h.b16 %v2147
    %v3272 = vunpack.c.l.b16 %v2148
    %v3273 = vunpack.c.h.b16 %v2148
    %v3274 = vunpack.c.l.b16 %v2149
    %v3275 = vunpack.c.h.b16 %v2149
    %v3276 = vunpack.c.l.b16 %v2150
    %v3277 = vunpack.c.h.b16 %v2150
    %v3278 = vunpack.c.l.b16 %v2151
    %v3279 = vunpack.c.h.b16 %v2151
    %v3280 = vunpack.c.l.b16 %v2152
    %v3281 = vunpack.c.h.b16 %v2152
    %v3282 = vunpack.c.l.b16 %v2153
    %v3283 = vunpack.c.h.b16 %v2153
    %v3284 = vunpack.c.l.b16 %v2154
    %v3285 = vunpack.c.h.b16 %v2154
    %v3286 = vunpack.c.l.b16 %v2155
    %v3287 = vunpack.c.h.b16 %v2155
    %v3288 = vunpack.c.l.b16 %v2156
    %v3289 = vunpack.c.h.b16 %v2156
    %v3290 = vunpack.c.l.b16 %v2157
    %v3291 = vunpack.c.h.b16 %v2157
    %v3292 = vunpack.c.l.b16 %v2158
    %v3293 = vunpack.c.h.b16 %v2158
    %v3294 = vunpack.c.l.b16 %v2159
    %v3295 = vunpack.c.h.b16 %v2159
    %v3296 = vunpack.c.l.b16 %v2160
    %v3297 = vunpack.c.h.b16 %v2160
    %v3298 = vunpack.c.l.b16 %v2161
    %v3299 = vunpack.c.h.b16 %v2161
    %v3300 = vunpack.c.l.b16 %v2162
    %v3301 = vunpack.c.h.b16 %v2162
    %v3302 = vunpack.c.l.b16 %v2163
    %v3303 = vunpack.c.h.b16 %v2163
    %v3304 = vunpack.c.l.b16 %v2164
    %v3305 = vunpack.c.h.b16 %v2164
    %v3306 = vunpack.c.l.b16 %v2165
    %v3307 = vunpack.c.h.b16 %v2165
    %v3308 = vunpack.c.l.b16 %v2166
    %v3309 = vunpack.c.h.b16 %v2166
    %v3310 = vunpack.c.l.b16 %v2167
    %v3311 = vunpack.c.h.b16 %v2167
    %v3312 = vunpack.c.l.b16 %v2168
    %v3313 = vunpack.c.h.b16 %v2168
    %v3314 = vunpack.c.l.b16 %v2169
    %v3315 = vunpack.c.h.b16 %v2169
    %v3316 = vunpack.c.l.b16 %v2170
    %v3317 = vunpack.c.h.b16 %v2170
    %v3318 = vunpack.c.l.b16 %v2171
    %v3319 = vunpack.c.h.b16 %v2171
    %v3320 = vunpack.c.l.b16 %v2172
    %v3321 = vunpack.c.h.b16 %v2172
    %v3322 = vunpack.c.l.b16 %v2173
    %v3323 = vunpack.c.h.b16 %v2173
    %v3324 = vunpack.c.l.b16 %v2174
    %v3325 = vunpack.c.h.b16 %v2174
    %v3326 = vunpack.c.l.b16 %v2175
    %v3327 = vunpack.c.h.b16 %v2175
    %v3328 = vunpack.c.l.b16 %v2176
    %v3329 = vunpack.c.h.b16 %v2176
    %v3330 = vunpack.c.l.b16 %v2177
    %v3331 = vunpack.c.h.b16 %v2177
    %v3332 = vunpack.c.l.b16 %v2178
    %v3333 = vunpack.c.h.b16 %v2178
    %v3334 = vunpack.c.l.b16 %v2179
    %v3335 = vunpack.c.h.b16 %v2179
    %v3336 = vunpack.c.l.b16 %v2180
    %v3337 = vunpack.c.h.b16 %v2180
    %v3338 = vunpack.c.l.b16 %v2181
    %v3339 = vunpack.c.h.b16 %v2181
    %v3340 = vunpack.c.l.b16 %v2182
    %v3341 = vunpack.c.h.b16 %v2182
    %v3342 = vunpack.c.l.b16 %v2183
    %v3343 = vunpack.c.h.b16 %v2183
    %v3344 = vunpack.c.l.b16 %v2184
    %v3345 = vunpack.c.h.b16 %v2184
    %v3346 = vunpack.c.l.b16 %v2185
    %v3347 = vunpack.c.h.b16 %v2185
    %v3348 = vunpack.c.l.b16 %v2186
    %v3349 = vunpack.c.h.b16 %v2186
    %v3350 = vunpack.c.l.b16 %v2187
    %v3351 = vunpack.c.h.b16 %v2187
    %v3352 = vunpack.c.l.b16 %v2188
    %v3353 = vunpack.c.h.b16 %v2188
    %v3354 = vunpack.c.l.b16 %v2189
    %v3355 = vunpack.c.h.b16 %v2189
    %v3356 = vunpack.c.l.b16 %v2190
    %v3357 = vunpack.c.h.b16 %v2190
    %v3358 = vunpack.c.l.b16 %v2191
    %v3359 = vunpack.c.h.b16 %v2191
    %v3360 = vunpack.c.l.b16 %v2192
    %v3361 = vunpack.c.h.b16 %v2192
    %v3362 = vunpack.c.l.b16 %v2193
    %v3363 = vunpack.c.h.b16 %v2193
    %v3364 = vunpack.c.l.b16 %v2194
    %v3365 = vunpack.c.h.b16 %v2194
    %v3366 = vunpack.c.l.b16 %v2195
    %v3367 = vunpack.c.h.b16 %v2195
    %v3368 = vunpack.c.l.b16 %v2196
    %v3369 = vunpack.c.h.b16 %v2196
    %v3370 = vunpack.c.l.b16 %v2197
    %v3371 = vunpack.c.h.b16 %v2197
    %v3372 = vunpack.c.l.b16 %v2198
    %v3373 = vunpack.c.h.b16 %v2198
    %v3374 = vunpack.c.l.b16 %v2199
    %v3375 = vunpack.c.h.b16 %v2199
    %v3376 = vunpack.c.l.b16 %v2200
    %v3377 = vunpack.c.h.b16 %v2200
    %v3378 = vunpack.c.l.b16 %v2201
    %v3379 = vunpack.c.h.b16 %v2201
    %v3380 = vunpack.c.l.b16 %v2202
    %v3381 = vunpack.c.h.b16 %v2202
    %v3382 = vunpack.c.l.b16 %v2203
    %v3383 = vunpack.c.h.b16 %v2203
    %v3384 = vunpack.c.l.b16 %v2204
    %v3385 = vunpack.c.h.b16 %v2204
    %v3386 = vunpack.c.l.b16 %v2205
    %v3387 = vunpack.c.h.b16 %v2205
    %v3388 = vunpack.c.l.b16 %v2206
    %v3389 = vunpack.c.h.b16 %v2206
    %v3390 = vunpack.c.l.b16 %v2207
    %v3391 = vunpack.c.h.b16 %v2207
    %v3392 = vunpack.c.l.b16 %v2208
    %v3393 = vunpack.c.h.b16 %v2208
    %v3394 = vunpack.c.l.b16 %v2209
    %v3395 = vunpack.c.h.b16 %v2209
    %v3396 = vunpack.c.l.b16 %v2210
    %v3397 = vunpack.c.h.b16 %v2210
    %v3398 = vunpack.c.l.b16 %v2211
    %v3399 = vunpack.c.h.b16 %v2211
    %v3400 = vunpack.c.l.b16 %v2212
    %v3401 = vunpack.c.h.b16 %v2212
    %v3402 = vunpack.c.l.b16 %v2213
    %v3403 = vunpack.c.h.b16 %v2213
    %v3404 = vunpack.c.l.b16 %v2214
    %v3405 = vunpack.c.h.b16 %v2214
    %v3406 = vunpack.c.l.b16 %v2215
    %v3407 = vunpack.c.h.b16 %v2215
    %v3408 = vunpack.c.l.b16 %v2216
    %v3409 = vunpack.c.h.b16 %v2216
    %v3410 = vunpack.c.l.b16 %v2217
    %v3411 = vunpack.c.h.b16 %v2217
    %v3412 = vunpack.c.l.b16 %v2218
    %v3413 = vunpack.c.h.b16 %v2218
    %v3414 = vunpack.c.l.b16 %v2219
    %v3415 = vunpack.c.h.b16 %v2219
    %v3416 = vunpack.c.l.b16 %v2220
    %v3417 = vunpack.c.h.b16 %v2220
    %v3418 = vunpack.c.l.b16 %v2221
    %v3419 = vunpack.c.h.b16 %v2221
    %v3420 = vunpack.c.l.b16 %v2222
    %v3421 = vunpack.c.h.b16 %v2222
    %v3422 = vunpack.c.l.b16 %v2223
    %v3423 = vunpack.c.h.b16 %v2223
    %v3424 = vunpack.c.l.b16 %v2224
    %v3425 = vunpack.c.h.b16 %v2224
    %v3426 = vunpack.c.l.b16 %v2225
    %v3427 = vunpack.c.h.b16 %v2225
    %v3428 = vunpack.c.l.b16 %v2226
    %v3429 = vunpack.c.h.b16 %v2226
    %v3430 = vunpack.c.l.b16 %v2227
    %v3431 = vunpack.c.h.b16 %v2227
    %v3432 = vunpack.c.l.b16 %v2228
    %v3433 = vunpack.c.h.b16 %v2228
    %v3434 = vunpack.c.l.b16 %v2229
    %v3435 = vunpack.c.h.b16 %v2229
    %v3436 = vunpack.c.l.b16 %v2230
    %v3437 = vunpack.c.h.b16 %v2230
    %v3438 = vunpack.c.l.b16 %v2231
    %v3439 = vunpack.c.h.b16 %v2231
    %v3440 = vunpack.c.l.b16 %v2232
    %v3441 = vunpack.c.h.b16 %v2232
    %v3442 = vunpack.c.l.b16 %v2233
    %v3443 = vunpack.c.h.b16 %v2233
    %v3444 = vunpack.c.l.b16 %v2234
    %v3445 = vunpack.c.h.b16 %v2234
    %v3446 = vunpack.c.l.b16 %v2235
    %v3447 = vunpack.c.h.b16 %v2235
    %v3448 = vunpack.c.l.b16 %v2236
    %v3449 = vunpack.c.h.b16 %v2236
    %v3450 = vunpack.c.l.b16 %v2237
    %v3451 = vunpack.c.h.b16 %v2237
    %v3452 = vunpack.c.l.b16 %v2238
    %v3453 = vunpack.c.h.b16 %v2238
    %v3454 = vunpack.c.l.b16 %v2239
    %v3455 = vunpack.c.h.b16 %v2239
    %v3456 = vunpack.c.l.b16 %v2240
    %v3457 = vunpack.c.h.b16 %v2240
    %v3458 = vunpack.c.l.b16 %v2241
    %v3459 = vunpack.c.h.b16 %v2241
    %v3460 = vunpack.c.l.b16 %v2242
    %v3461 = vunpack.c.h.b16 %v2242
    %v3462 = vunpack.c.l.b16 %v2243
    %v3463 = vunpack.c.h.b16 %v2243
    %v3464 = vunpack.c.l.b16 %v2244
    %v3465 = vunpack.c.h.b16 %v2244
    %v3466 = vunpack.c.l.b16 %v2245
    %v3467 = vunpack.c.h.b16 %v2245
    %v3468 = vunpack.c.l.b16 %v2246
    %v3469 = vunpack.c.h.b16 %v2246
    %v3470 = vunpack.c.l.b16 %v2247
    %v3471 = vunpack.c.h.b16 %v2247
    %v3472 = vunpack.c.l.b16 %v2248
    %v3473 = vunpack.c.h.b16 %v2248
    %v3474 = vunpack.c.l.b16 %v2249
    %v3475 = vunpack.c.h.b16 %v2249
    %v3476 = vunpack.c.l.b16 %v2250
    %v3477 = vunpack.c.h.b16 %v2250
    %v3478 = vunpack.c.l.b16 %v2251
    %v3479 = vunpack.c.h.b16 %v2251
    %v3480 = vunpack.c.l.b16 %v2252
    %v3481 = vunpack.c.h.b16 %v2252
    %v3482 = vunpack.c.l.b16 %v2253
    %v3483 = vunpack.c.h.b16 %v2253
    %v3484 = vunpack.c.l.b16 %v2254
    %v3485 = vunpack.c.h.b16 %v2254
    %v3486 = vunpack.c.l.b16 %v2255
    %v3487 = vunpack.c.h.b16 %v2255
    %v3488 = vunpack.c.l.b16 %v2256
    %v3489 = vunpack.c.h.b16 %v2256
    %v3490 = vunpack.c.l.b16 %v2257
    %v3491 = vunpack.c.h.b16 %v2257
    %v3492 = vunpack.c.l.b16 %v2258
    %v3493 = vunpack.c.h.b16 %v2258
    %v3494 = vunpack.c.l.b16 %v2259
    %v3495 = vunpack.c.h.b16 %v2259
    %v3496 = vunpack.c.l.b16 %v2260
    %v3497 = vunpack.c.h.b16 %v2260
    %v3498 = vunpack.c.l.b16 %v2261
    %v3499 = vunpack.c.h.b16 %v2261
    %v3500 = vunpack.c.l.b16 %v2262
    %v3501 = vunpack.c.h.b16 %v2262
    %v3502 = vunpack.c.l.b16 %v2263
    %v3503 = vunpack.c.h.b16 %v2263
    %v3504 = vunpack.c.l.b16 %v2264
    %v3505 = vunpack.c.h.b16 %v2264
    %v3506 = vunpack.c.l.b16 %v2265
    %v3507 = vunpack.c.h.b16 %v2265
    %v3508 = vunpack.c.l.b16 %v2266
    %v3509 = vunpack.c.h.b16 %v2266
    %v3510 = vunpack.c.l.b16 %v2267
    %v3511 = vunpack.c.h.b16 %v2267
    %v3512 = vunpack.c.l.b16 %v2268
    %v3513 = vunpack.c.h.b16 %v2268
    %v3514 = vunpack.c.l.b16 %v2269
    %v3515 = vunpack.c.h.b16 %v2269
    %v3516 = vunpack.c.l.b16 %v2270
    %v3517 = vunpack.c.h.b16 %v2270
    %v3518 = vunpack.c.l.b16 %v2271
    %v3519 = vunpack.c.h.b16 %v2271
    %v3520 = vunpack.c.l.b16 %v2272
    %v3521 = vunpack.c.h.b16 %v2272
    %v3522 = vunpack.c.l.b16 %v2273
    %v3523 = vunpack.c.h.b16 %v2273
    %v3524 = vunpack.c.l.b16 %v2274
    %v3525 = vunpack.c.h.b16 %v2274
    %v3526 = vunpack.c.l.b16 %v2275
    %v3527 = vunpack.c.h.b16 %v2275
    %v3528 = vunpack.c.l.b16 %v2276
    %v3529 = vunpack.c.h.b16 %v2276
    %v3530 = vunpack.c.l.b16 %v2277
    %v3531 = vunpack.c.h.b16 %v2277
    %v3532 = vunpack.c.l.b16 %v2278
    %v3533 = vunpack.c.h.b16 %v2278
    %v3534 = vunpack.c.l.b16 %v2279
    %v3535 = vunpack.c.h.b16 %v2279
    %v3536 = vunpack.c.l.b16 %v2280
    %v3537 = vunpack.c.h.b16 %v2280
    %v3538 = vunpack.c.l.b16 %v2281
    %v3539 = vunpack.c.h.b16 %v2281
    %v3540 = vunpack.c.l.b16 %v2282
    %v3541 = vunpack.c.h.b16 %v2282
    %v3542 = vunpack.c.l.b16 %v2283
    %v3543 = vunpack.c.h.b16 %v2283
    %v3544 = vunpack.c.l.b16 %v2284
    %v3545 = vunpack.c.h.b16 %v2284
    %v3546 = vunpack.c.l.b16 %v2285
    %v3547 = vunpack.c.h.b16 %v2285
    %v3548 = vunpack.c.l.b16 %v2286
    %v3549 = vunpack.c.h.b16 %v2286
    %v3550 = vunpack.c.l.b16 %v2287
    %v3551 = vunpack.c.h.b16 %v2287
    %v3552 = vunpack.c.l.b16 %v2288
    %v3553 = vunpack.c.h.b16 %v2288
    %v3554 = vunpack.c.l.b16 %v2289
    %v3555 = vunpack.c.h.b16 %v2289
    %v3556 = vunpack.c.l.b16 %v2290
    %v3557 = vunpack.c.h.b16 %v2290
    %v3558 = vunpack.c.l.b16 %v2291
    %v3559 = vunpack.c.h.b16 %v2291
    %v3560 = vunpack.c.l.b16 %v2292
    %v3561 = vunpack.c.h.b16 %v2292
    %v3562 = vunpack.c.l.b16 %v2293
    %v3563 = vunpack.c.h.b16 %v2293
    %v3564 = vunpack.c.l.b16 %v2294
    %v3565 = vunpack.c.h.b16 %v2294
    %v3566 = vunpack.c.l.b16 %v2295
    %v3567 = vunpack.c.h.b16 %v2295
    %v3568 = vunpack.c.l.b16 %v2296
    %v3569 = vunpack.c.h.b16 %v2296
    %v3570 = vunpack.c.l.b16 %v2297
    %v3571 = vunpack.c.h.b16 %v2297
    %v3572 = vunpack.c.l.b16 %v2298
    %v3573 = vunpack.c.h.b16 %v2298
    %v3574 = vunpack.c.l.b16 %v2299
    %v3575 = vunpack.c.h.b16 %v2299
    %v3576 = vunpack.c.l.b16 %v2300
    %v3577 = vunpack.c.h.b16 %v2300
    %v3578 = vunpack.c.l.b16 %v2301
    %v3579 = vunpack.c.h.b16 %v2301
    %v3580 = vunpack.c.l.b16 %v2302
    %v3581 = vunpack.c.h.b16 %v2302
    %v3582 = vunpack.c.l.b16 %v2303
    %v3583 = vunpack.c.h.b16 %v2303
    %v3584 = vunpack.c.l.b16 %v2304
    %v3585 = vunpack.c.h.b16 %v2304
    %v3586 = vunpack.c.l.b16 %v2305
    %v3587 = vunpack.c.h.b16 %v2305
    %v3588 = vunpack.c.l.b16 %v2306
    %v3589 = vunpack.c.h.b16 %v2306
    %v3590 = vunpack.c.l.b16 %v2307
    %v3591 = vunpack.c.h.b16 %v2307
    %v3592 = vunpack.c.l.b16 %v2308
    %v3593 = vunpack.c.h.b16 %v2308
    %v3594 = vunpack.c.l.b16 %v2309
    %v3595 = vunpack.c.h.b16 %v2309
    %v3596 = vunpack.c.l.b16 %v2310
    %v3597 = vunpack.c.h.b16 %v2310
    %v3598 = vunpack.c.l.b16 %v2311
    %v3599 = vunpack.c.h.b16 %v2311
    %v3600 = vunpack.c.l.b16 %v2312
    %v3601 = vunpack.c.h.b16 %v2312
    %v3602 = vunpack.c.l.b16 %v2313
    %v3603 = vunpack.c.h.b16 %v2313
    %v3604 = vunpack.c.l.b16 %v2314
    %v3605 = vunpack.c.h.b16 %v2314
    %v3606 = vunpack.c.l.b16 %v2315
    %v3607 = vunpack.c.h.b16 %v2315
    %v3608 = vunpack.c.l.b16 %v2316
    %v3609 = vunpack.c.h.b16 %v2316
    %v3610 = vunpack.c.l.b16 %v2317
    %v3611 = vunpack.c.h.b16 %v2317
    %v3612 = vunpack.c.l.b16 %v2318
    %v3613 = vunpack.c.h.b16 %v2318
    %v3614 = vunpack.c.l.b16 %v2319
    %v3615 = vunpack.c.h.b16 %v2319
    %v3616 = vunpack.c.l.b16 %v2320
    %v3617 = vunpack.c.h.b16 %v2320
    %v3618 = vunpack.c.l.b16 %v2321
    %v3619 = vunpack.c.h.b16 %v2321
    %v3620 = vunpack.c.l.b16 %v2322
    %v3621 = vunpack.c.h.b16 %v2322
    %v3622 = vunpack.c.l.b16 %v2323
    %v3623 = vunpack.c.h.b16 %v2323
    %v3624 = vunpack.c.l.b16 %v2324
    %v3625 = vunpack.c.h.b16 %v2324
    %v3626 = vunpack.c.l.b16 %v2325
    %v3627 = vunpack.c.h.b16 %v2325
    %v3628 = vunpack.c.l.b16 %v2326
    %v3629 = vunpack.c.h.b16 %v2326
    %v3630 = vunpack.c.l.b16 %v2327
    %v3631 = vunpack.c.h.b16 %v2327
    %v3632 = vunpack.c.l.b16 %v2328
    %v3633 = vunpack.c.h.b16 %v2328
    %v3634 = vunpack.c.l.b16 %v2329
    %v3635 = vunpack.c.h.b16 %v2329
    %v3636 = vunpack.c.l.b16 %v2330
    %v3637 = vunpack.c.h.b16 %v2330
    %v3638 = vunpack.c.l.b16 %v2331
    %v3639 = vunpack.c.h.b16 %v2331
    %v3640 = vunpack.c.l.b16 %v2332
    %v3641 = vunpack.c.h.b16 %v2332
    %v3642 = vunpack.c.l.b16 %v2333
    %v3643 = vunpack.c.h.b16 %v2333
    %v3644 = vunpack.c.l.b16 %v2334
    %v3645 = vunpack.c.h.b16 %v2334
    %v3646 = vunpack.c.l.b16 %v2335
    %v3647 = vunpack.c.h.b16 %v2335
    %v3648 = vunpack.c.l.b16 %v2336
    %v3649 = vunpack.c.h.b16 %v2336
    %v3650 = vunpack.c.l.b16 %v2337
    %v3651 = vunpack.c.h.b16 %v2337
    %v3652 = vunpack.c.l.b16 %v2338
    %v3653 = vunpack.c.h.b16 %v2338
    %v3654 = vunpack.c.l.b16 %v2339
    %v3655 = vunpack.c.h.b16 %v2339
    %v3656 = vunpack.c.l.b16 %v2340
    %v3657 = vunpack.c.h.b16 %v2340
    %v3658 = vunpack.c.l.b16 %v2341
    %v3659 = vunpack.c.h.b16 %v2341
    %v3660 = vunpack.c.l.b16 %v2342
    %v3661 = vunpack.c.h.b16 %v2342
    %v3662 = vunpack.c.l.b16 %v2343
    %v3663 = vunpack.c.h.b16 %v2343
    %v3664 = vunpack.c.l.b16 %v2344
    %v3665 = vunpack.c.h.b16 %v2344
    %v3666 = vunpack.c.l.b16 %v2345
    %v3667 = vunpack.c.h.b16 %v2345
    %v3668 = vunpack.c.l.b16 %v2346
    %v3669 = vunpack.c.h.b16 %v2346
    %v3670 = vunpack.c.l.b16 %v2347
    %v3671 = vunpack.c.h.b16 %v2347
    %v3672 = vunpack.c.l.b16 %v2348
    %v3673 = vunpack.c.h.b16 %v2348
    %v3674 = vunpack.c.l.b16 %v2349
    %v3675 = vunpack.c.h.b16 %v2349
    %v3676 = vunpack.c.l.b16 %v2350
    %v3677 = vunpack.c.h.b16 %v2350
    %v3678 = vunpack.c.l.b16 %v2351
    %v3679 = vunpack.c.h.b16 %v2351
    %v3680 = vunpack.c.l.b16 %v2352
    %v3681 = vunpack.c.h.b16 %v2352
    %v3682 = vunpack.c.l.b16 %v2353
    %v3683 = vunpack.c.h.b16 %v2353
    %v3684 = vunpack.c.l.b16 %v2354
    %v3685 = vunpack.c.h.b16 %v2354
    %v3686 = vunpack.c.l.b16 %v2355
    %v3687 = vunpack.c.h.b16 %v2355
    %v3688 = vunpack.c.l.b16 %v2356
    %v3689 = vunpack.c.h.b16 %v2356
    %v3690 = vunpack.c.l.b16 %v2357
    %v3691 = vunpack.c.h.b16 %v2357
    %v3692 = vunpack.c.l.b16 %v2358
    %v3693 = vunpack.c.h.b16 %v2358
    %v3694 = vunpack.c.l.b16 %v2359
    %v3695 = vunpack.c.h.b16 %v2359
    %v3696 = vunpack.c.l.b16 %v2360
    %v3697 = vunpack.c.h.b16 %v2360
    %v3698 = vunpack.c.l.b16 %v2361
    %v3699 = vunpack.c.h.b16 %v2361
    %v3700 = vunpack.c.l.b16 %v2362
    %v3701 = vunpack.c.h.b16 %v2362
    %v3702 = vunpack.c.l.b16 %v2363
    %v3703 = vunpack.c.h.b16 %v2363
    %v3704 = vunpack.c.l.b16 %v2364
    %v3705 = vunpack.c.h.b16 %v2364
    %v3706 = vunpack.c.l.b16 %v2365
    %v3707 = vunpack.c.h.b16 %v2365
    %v3708 = vunpack.c.l.b16 %v2366
    %v3709 = vunpack.c.h.b16 %v2366
    %v3710 = vunpack.c.l.b16 %v2367
    %v3711 = vunpack.c.h.b16 %v2367
    %v3712 = vunpack.c.l.b16 %v2368
    %v3713 = vunpack.c.h.b16 %v2368
    %v3714 = vunpack.c.l.b16 %v2369
    %v3715 = vunpack.c.h.b16 %v2369
    %v3716 = vunpack.c.l.b16 %v2370
    %v3717 = vunpack.c.h.b16 %v2370
    %v3718 = vunpack.c.l.b16 %v2371
    %v3719 = vunpack.c.h.b16 %v2371
    %v3720 = vunpack.c.l.b16 %v2372
    %v3721 = vunpack.c.h.b16 %v2372
    %v3722 = vunpack.c.l.b16 %v2373
    %v3723 = vunpack.c.h.b16 %v2373
    %v3724 = vunpack.c.l.b16 %v2374
    %v3725 = vunpack.c.h.b16 %v2374
    %v3726 = vunpack.c.l.b16 %v2375
    %v3727 = vunpack.c.h.b16 %v2375
    %v3728 = vunpack.c.l.b16 %v2376
    %v3729 = vunpack.c.h.b16 %v2376
    %v3730 = vunpack.c.l.b16 %v2377
    %v3731 = vunpack.c.h.b16 %v2377
    %v3732 = vunpack.c.l.b16 %v2378
    %v3733 = vunpack.c.h.b16 %v2378
    %v3734 = vunpack.c.l.b16 %v2379
    %v3735 = vunpack.c.h.b16 %v2379
    %v3736 = vunpack.c.l.b16 %v2380
    %v3737 = vunpack.c.h.b16 %v2380
    %v3738 = vunpack.c.l.b16 %v2381
    %v3739 = vunpack.c.h.b16 %v2381
    %v3740 = vunpack.c.l.b16 %v2382
    %v3741 = vunpack.c.h.b16 %v2382
    %v3742 = vunpack.c.l.b16 %v2383
    %v3743 = vunpack.c.h.b16 %v2383
    %v3744 = vunpack.c.l.b16 %v2384
    %v3745 = vunpack.c.h.b16 %v2384
    %v3746 = vunpack.c.l.b16 %v2385
    %v3747 = vunpack.c.h.b16 %v2385
    %v3748 = vunpack.c.l.b16 %v2386
    %v3749 = vunpack.c.h.b16 %v2386
    %v3750 = vunpack.c.l.b16 %v2387
    %v3751 = vunpack.c.h.b16 %v2387
    %v3752 = vunpack.c.l.b16 %v2388
    %v3753 = vunpack.c.h.b16 %v2388
    %v3754 = vunpack.c.l.b16 %v2389
    %v3755 = vunpack.c.h.b16 %v2389
    %v3756 = vunpack.c.l.b16 %v2390
    %v3757 = vunpack.c.h.b16 %v2390
    %v3758 = vunpack.c.l.b16 %v2391
    %v3759 = vunpack.c.h.b16 %v2391
    %v3760 = vunpack.c.l.b16 %v2392
    %v3761 = vunpack.c.h.b16 %v2392
    %v3762 = vunpack.c.l.b16 %v2393
    %v3763 = vunpack.c.h.b16 %v2393
    %v3764 = vunpack.c.l.b16 %v2394
    %v3765 = vunpack.c.h.b16 %v2394
    %v3766 = vunpack.c.l.b16 %v2395
    %v3767 = vunpack.c.h.b16 %v2395
    %v3768 = vunpack.c.l.b16 %v2396
    %v3769 = vunpack.c.h.b16 %v2396
    %v3770 = vunpack.c.l.b16 %v2397
    %v3771 = vunpack.c.h.b16 %v2397
    %v3772 = vunpack.c.l.b16 %v2398
    %v3773 = vunpack.c.h.b16 %v2398
    %v3774 = vunpack.c.l.b16 %v2399
    %v3775 = vunpack.c.h.b16 %v2399
    %v3776 = vunpack.c.l.b16 %v2400
    %v3777 = vunpack.c.h.b16 %v2400
    %v3778 = vunpack.c.l.b16 %v2401
    %v3779 = vunpack.c.h.b16 %v2401
    %v3780 = vunpack.c.l.b16 %v2402
    %v3781 = vunpack.c.h.b16 %v2402
    %v3782 = vunpack.c.l.b16 %v2403
    %v3783 = vunpack.c.h.b16 %v2403
    %v3784 = vunpack.c.l.b16 %v2404
    %v3785 = vunpack.c.h.b16 %v2404
    %v3786 = vunpack.c.l.b16 %v2405
    %v3787 = vunpack.c.h.b16 %v2405
    %v3788 = vunpack.c.l.b16 %v2406
    %v3789 = vunpack.c.h.b16 %v2406
    %v3790 = vunpack.c.l.b16 %v2407
    %v3791 = vunpack.c.h.b16 %v2407
    %v3792 = vunpack.c.l.b16 %v2408
    %v3793 = vunpack.c.h.b16 %v2408
    %v3794 = vunpack.c.l.b16 %v2409
    %v3795 = vunpack.c.h.b16 %v2409
    %v3796 = vunpack.c.l.b16 %v2410
    %v3797 = vunpack.c.h.b16 %v2410
    %v3798 = vunpack.c.l.b16 %v2411
    %v3799 = vunpack.c.h.b16 %v2411
    %v3800 = vunpack.c.l.b16 %v2412
    %v3801 = vunpack.c.h.b16 %v2412
    %v3802 = vunpack.c.l.b16 %v2413
    %v3803 = vunpack.c.h.b16 %v2413
    %v3804 = vunpack.c.l.b16 %v2414
    %v3805 = vunpack.c.h.b16 %v2414
    %v3806 = vunpack.c.l.b16 %v2415
    %v3807 = vunpack.c.h.b16 %v2415
    %v3808 = vunpack.c.l.b16 %v2416
    %v3809 = vunpack.c.h.b16 %v2416
    %v3810 = vunpack.c.l.b16 %v2417
    %v3811 = vunpack.c.h.b16 %v2417
    %v3812 = vunpack.c.l.b16 %v2418
    %v3813 = vunpack.c.h.b16 %v2418
    %v3814 = vunpack.c.l.b16 %v2419
    %v3815 = vunpack.c.h.b16 %v2419
    %v3816 = vunpack.c.l.b16 %v2420
    %v3817 = vunpack.c.h.b16 %v2420
    %v3818 = vunpack.c.l.b16 %v2421
    %v3819 = vunpack.c.h.b16 %v2421
    %v3820 = vunpack.c.l.b16 %v2422
    %v3821 = vunpack.c.h.b16 %v2422
    %v3822 = vunpack.c.l.b16 %v2423
    %v3823 = vunpack.c.h.b16 %v2423
    %v3824 = vunpack.c.l.b16 %v2424
    %v3825 = vunpack.c.h.b16 %v2424
    %v3826 = vunpack.c.l.b16 %v2425
    %v3827 = vunpack.c.h.b16 %v2425
    %v3828 = vunpack.c.l.b16 %v2426
    %v3829 = vunpack.c.h.b16 %v2426
    %v3830 = vunpack.c.l.b16 %v2427
    %v3831 = vunpack.c.h.b16 %v2427
    %v3832 = vunpack.c.l.b16 %v2428
    %v3833 = vunpack.c.h.b16 %v2428
    %v3834 = vunpack.c.l.b16 %v2429
    %v3835 = vunpack.c.h.b16 %v2429
    %v3836 = vunpack.c.l.b16 %v2430
    %v3837 = vunpack.c.h.b16 %v2430
    %v3838 = vunpack.c.l.b16 %v2431
    %v3839 = vunpack.c.h.b16 %v2431
    %v3840 = vunpack.c.l.b16 %v2432
    %v3841 = vunpack.c.h.b16 %v2432
    %v3842 = vunpack.c.l.b16 %v2433
    %v3843 = vunpack.c.h.b16 %v2433
    %v3844 = vunpack.c.l.b16 %v2434
    %v3845 = vunpack.c.h.b16 %v2434
    %v3846 = vunpack.c.l.b16 %v2435
    %v3847 = vunpack.c.h.b16 %v2435
    %v3848 = vunpack.c.l.b16 %v2436
    %v3849 = vunpack.c.h.b16 %v2436
    %v3850 = vunpack.c.l.b16 %v2437
    %v3851 = vunpack.c.h.b16 %v2437
    %v3852 = vunpack.c.l.b16 %v2438
    %v3853 = vunpack.c.h.b16 %v2438
    %v3854 = vunpack.c.l.b16 %v2439
    %v3855 = vunpack.c.h.b16 %v2439
    %v3856 = vunpack.c.l.b16 %v2440
    %v3857 = vunpack.c.h.b16 %v2440
    %v3858 = vunpack.c.l.b16 %v2441
    %v3859 = vunpack.c.h.b16 %v2441
    %v3860 = vunpack.c.l.b16 %v2442
    %v3861 = vunpack.c.h.b16 %v2442
    %v3862 = vunpack.c.l.b16 %v2443
    %v3863 = vunpack.c.h.b16 %v2443
    %v3864 = vunpack.c.l.b16 %v2444
    %v3865 = vunpack.c.h.b16 %v2444
    %v3866 = vunpack.c.l.b16 %v2445
    %v3867 = vunpack.c.h.b16 %v2445
    %v3868 = vunpack.c.l.b16 %v2446
    %v3869 = vunpack.c.h.b16 %v2446
    %v3870 = vunpack.c.l.b16 %v2447
    %v3871 = vunpack.c.h.b16 %v2447
    %v3872 = vunpack.c.l.b16 %v2448
    %v3873 = vunpack.c.h.b16 %v2448
    %v3874 = vunpack.c.l.b16 %v2449
    %v3875 = vunpack.c.h.b16 %v2449
    %v3876 = vunpack.c.l.b16 %v2450
    %v3877 = vunpack.c.h.b16 %v2450
    %v3878 = vunpack.c.l.b16 %v2451
    %v3879 = vunpack.c.h.b16 %v2451
    %v3880 = vunpack.c.l.b16 %v2452
    %v3881 = vunpack.c.h.b16 %v2452
    %v3882 = vunpack.c.l.b16 %v2453
    %v3883 = vunpack.c.h.b16 %v2453
    %v3884 = vunpack.c.l.b16 %v2454
    %v3885 = vunpack.c.h.b16 %v2454
    %v3886 = vunpack.c.l.b16 %v2455
    %v3887 = vunpack.c.h.b16 %v2455
    %v3888 = vunpack.c.l.b16 %v2456
    %v3889 = vunpack.c.h.b16 %v2456
    %v3890 = vunpack.c.l.b16 %v2457
    %v3891 = vunpack.c.h.b16 %v2457
    %v3892 = vunpack.c.l.b16 %v2458
    %v3893 = vunpack.c.h.b16 %v2458
    %v3894 = vunpack.c.l.b16 %v2459
    %v3895 = vunpack.c.h.b16 %v2459
    %v3896 = vunpack.c.l.b16 %v2460
    %v3897 = vunpack.c.h.b16 %v2460
    %v3898 = vunpack.c.l.b16 %v2461
    %v3899 = vunpack.c.h.b16 %v2461
    %v3900 = vunpack.c.l.b16 %v2462
    %v3901 = vunpack.c.h.b16 %v2462
    %v3902 = vunpack.c.l.b16 %v2463
    %v3903 = vunpack.c.h.b16 %v2463
    %v3904 = vunpack.c.l.b16 %v2464
    %v3905 = vunpack.c.h.b16 %v2464
    %v3906 = vunpack.c.l.b16 %v2465
    %v3907 = vunpack.c.h.b16 %v2465
    %v3908 = vunpack.c.l.b16 %v2466
    %v3909 = vunpack.c.h.b16 %v2466
    %v3910 = vunpack.c.l.b16 %v2467
    %v3911 = vunpack.c.h.b16 %v2467
    %v3912 = vunpack.c.l.b16 %v2468
    %v3913 = vunpack.c.h.b16 %v2468
    %v3914 = vunpack.c.l.b16 %v2469
    %v3915 = vunpack.c.h.b16 %v2469
    %v3916 = vunpack.c.l.b16 %v2470
    %v3917 = vunpack.c.h.b16 %v2470
    %v3918 = vunpack.c.l.b16 %v2471
    %v3919 = vunpack.c.h.b16 %v2471
    %v3920 = vunpack.c.l.b16 %v2472
    %v3921 = vunpack.c.h.b16 %v2472
    %v3922 = vunpack.c.l.b16 %v2473
    %v3923 = vunpack.c.h.b16 %v2473
    %v3924 = vunpack.c.l.b16 %v2474
    %v3925 = vunpack.c.h.b16 %v2474
    %v3926 = vunpack.c.l.b16 %v2475
    %v3927 = vunpack.c.h.b16 %v2475
    %v3928 = vunpack.c.l.b16 %v2476
    %v3929 = vunpack.c.h.b16 %v2476
    %v3930 = vunpack.c.l.b16 %v2477
    %v3931 = vunpack.c.h.b16 %v2477
    %v3932 = vunpack.c.l.b16 %v2478
    %v3933 = vunpack.c.h.b16 %v2478
    %v3934 = vunpack.c.l.b16 %v2479
    %v3935 = vunpack.c.h.b16 %v2479
    %v3936 = vunpack.c.l.b16 %v2480
    %v3937 = vunpack.c.h.b16 %v2480
    %v3938 = vunpack.c.l.b16 %v2481
    %v3939 = vunpack.c.h.b16 %v2481
    %v3940 = vunpack.c.l.b16 %v2482
    %v3941 = vunpack.c.h.b16 %v2482
    %v3942 = vunpack.c.l.b16 %v2483
    %v3943 = vunpack.c.h.b16 %v2483
    %v3944 = vunpack.c.l.b16 %v2484
    %v3945 = vunpack.c.h.b16 %v2484
    %v3946 = vunpack.c.l.b16 %v2485
    %v3947 = vunpack.c.h.b16 %v2485
    %v3948 = vunpack.c.l.b16 %v2486
    %v3949 = vunpack.c.h.b16 %v2486
    %v3950 = vunpack.c.l.b16 %v2487
    %v3951 = vunpack.c.h.b16 %v2487
    %v3952 = vunpack.c.l.b16 %v2488
    %v3953 = vunpack.c.h.b16 %v2488
    %v3954 = vunpack.c.l.b16 %v2489
    %v3955 = vunpack.c.h.b16 %v2489
    %v3956 = vunpack.c.l.b16 %v2490
    %v3957 = vunpack.c.h.b16 %v2490
    %v3958 = vunpack.c.l.b16 %v2491
    %v3959 = vunpack.c.h.b16 %v2491
    %v3960 = vunpack.c.l.b16 %v2492
    %v3961 = vunpack.c.h.b16 %v2492
    %v3962 = vunpack.c.l.b16 %v2493
    %v3963 = vunpack.c.h.b16 %v2493
    %v3964 = vunpack.c.l.b16 %v2494
    %v3965 = vunpack.c.h.b16 %v2494
    %v3966 = vunpack.c.l.b16 %v2495
    %v3967 = vunpack.c.h.b16 %v2495
    %v3968 = vunpack.c.l.b16 %v2496
    %v3969 = vunpack.c.h.b16 %v2496
    %v3970 = vunpack.c.l.b16 %v2497
    %v3971 = vunpack.c.h.b16 %v2497
    %v3972 = vunpack.c.l.b16 %v2498
    %v3973 = vunpack.c.h.b16 %v2498
    %v3974 = vunpack.c.l.b16 %v2499
    %v3975 = vunpack.c.h.b16 %v2499
    %v3976 = vunpack.c.l.b16 %v2500
    %v3977 = vunpack.c.h.b16 %v2500
    %v3978 = vunpack.c.l.b16 %v2501
    %v3979 = vunpack.c.h.b16 %v2501
    %v3980 = vunpack.c.l.b16 %v2502
    %v3981 = vunpack.c.h.b16 %v2502
    %v3982 = vunpack.c.l.b16 %v2503
    %v3983 = vunpack.c.h.b16 %v2503
    %v3984 = vunpack.c.l.b16 %v2504
    %v3985 = vunpack.c.h.b16 %v2504
    %v3986 = vunpack.c.l.b16 %v2505
    %v3987 = vunpack.c.h.b16 %v2505
    %v3988 = vunpack.c.l.b16 %v2506
    %v3989 = vunpack.c.h.b16 %v2506
    %v3990 = vunpack.c.l.b16 %v2507
    %v3991 = vunpack.c.h.b16 %v2507
    %v3992 = vunpack.c.l.b16 %v2508
    %v3993 = vunpack.c.h.b16 %v2508
    %v3994 = vunpack.c.l.b16 %v2509
    %v3995 = vunpack.c.h.b16 %v2509
    %v3996 = vunpack.c.l.b16 %v2510
    %v3997 = vunpack.c.h.b16 %v2510
    %v3998 = vunpack.c.l.b16 %v2511
    %v3999 = vunpack.c.h.b16 %v2511
    %v4000 = vunpack.c.l.b16 %v2512
    %v4001 = vunpack.c.h.b16 %v2512
    %v4002 = vunpack.c.l.b16 %v2513
    %v4003 = vunpack.c.h.b16 %v2513
    %v4004 = vunpack.c.l.b16 %v2514
    %v4005 = vunpack.c.h.b16 %v2514
    %v4006 = vunpack.c.l.b16 %v2515
    %v4007 = vunpack.c.h.b16 %v2515
    %v4008 = vunpack.c.l.b16 %v2516
    %v4009 = vunpack.c.h.b16 %v2516
    %v4010 = vunpack.c.l.b16 %v2517
    %v4011 = vunpack.c.h.b16 %v2517
    %v4012 = vunpack.c.l.b16 %v2518
    %v4013 = vunpack.c.h.b16 %v2518
    %v4014 = vunpack.c.l.b16 %v2519
    %v4015 = vunpack.c.h.b16 %v2519
    %v4016 = vunpack.c.l.b16 %v2520
    %v4017 = vunpack.c.h.b16 %v2520
    %v4018 = vunpack.c.l.b16 %v2521
    %v4019 = vunpack.c.h.b16 %v2521
    %v4020 = vunpack.c.l.b16 %v2522
    %v4021 = vunpack.c.h.b16 %v2522
    %v4022 = vunpack.c.l.b16 %v2523
    %v4023 = vunpack.c.h.b16 %v2523
    %v4024 = vunpack.c.l.b16 %v2524
    %v4025 = vunpack.c.h.b16 %v2524
    %v4026 = vunpack.c.l.b16 %v2525
    %v4027 = vunpack.c.h.b16 %v2525
    %v4028 = vunpack.c.l.b16 %v2526
    %v4029 = vunpack.c.h.b16 %v2526
    %v4030 = vunpack.c.l.b16 %v2527
    %v4031 = vunpack.c.h.b16 %v2527
    %v4032 = vunpack.c.l.b16 %v2528
    %v4033 = vunpack.c.h.b16 %v2528
    %v4034 = vunpack.c.l.b16 %v2529
    %v4035 = vunpack.c.h.b16 %v2529
    %v4036 = vunpack.c.l.b16 %v2530
    %v4037 = vunpack.c.h.b16 %v2530
    %v4038 = vunpack.c.l.b16 %v2531
    %v4039 = vunpack.c.h.b16 %v2531
    %v4040 = vunpack.c.l.b16 %v2532
    %v4041 = vunpack.c.h.b16 %v2532
    %v4042 = vunpack.c.l.b16 %v2533
    %v4043 = vunpack.c.h.b16 %v2533
    %v4044 = vunpack.c.l.b16 %v2534
    %v4045 = vunpack.c.h.b16 %v2534
    %v4046 = vunpack.c.l.b16 %v2535
    %v4047 = vunpack.c.h.b16 %v2535
    %v4048 = vunpack.c.l.b16 %v2536
    %v4049 = vunpack.c.h.b16 %v2536
    %v4050 = vunpack.c.l.b16 %v2537
    %v4051 = vunpack.c.h.b16 %v2537
    %v4052 = vunpack.c.l.b16 %v2538
    %v4053 = vunpack.c.h.b16 %v2538
    %v4054 = vunpack.c.l.b16 %v2539
    %v4055 = vunpack.c.h.b16 %v2539
    %v4056 = vunpack.c.l.b16 %v2540
    %v4057 = vunpack.c.h.b16 %v2540
    %v4058 = vunpack.c.l.b16 %v2541
    %v4059 = vunpack.c.h.b16 %v2541
    %v4060 = vunpack.c.l.b16 %v2542
    %v4061 = vunpack.c.h.b16 %v2542
    %v4062 = vunpack.c.l.b16 %v2543
    %v4063 = vunpack.c.h.b16 %v2543
    %v4064 = vunpack.c.l.b16 %v2544
    %v4065 = vunpack.c.h.b16 %v2544
    %v4066 = vunpack.c.l.b16 %v2545
    %v4067 = vunpack.c.h.b16 %v2545
    %v4068 = vunpack.c.l.b16 %v2546
    %v4069 = vunpack.c.h.b16 %v2546
    %v4070 = vunpack.c.l.b16 %v2547
    %v4071 = vunpack.c.h.b16 %v2547
    %v4072 = vunpack.c.l.b16 %v2548
    %v4073 = vunpack.c.h.b16 %v2548
    %v4074 = vunpack.c.l.b16 %v2549
    %v4075 = vunpack.c.h.b16 %v2549
    %v4076 = vunpack.c.l.b16 %v2550
    %v4077 = vunpack.c.h.b16 %v2550
    %v4078 = vunpack.c.l.b16 %v2551
    %v4079 = vunpack.c.h.b16 %v2551
    %v4080 = vunpack.c.l.b16 %v2552
    %v4081 = vunpack.c.h.b16 %v2552
    %v4082 = vunpack.c.l.b16 %v2553
    %v4083 = vunpack.c.h.b16 %v2553
    %v4084 = vunpack.c.l.b16 %v2554
    %v4085 = vunpack.c.h.b16 %v2554
    %v4086 = vunpack.c.l.b16 %v2555
    %v4087 = vunpack.c.h.b16 %v2555
    %v4088 = vunpack.c.l.b16 %v2556
    %v4089 = vunpack.c.h.b16 %v2556
    %v4090 = vunpack.c.l.b16 %v2557
    %v4091 = vunpack.c.h.b16 %v2557
    %v4092 = vunpack.c.l.b16 %v2558
    %v4093 = vunpack.c.h.b16 %v2558
    %v4094 = vunpack.c.l.b16 %v2559
    %v4095 = vunpack.c.h.b16 %v2559
    %v4096 = vpack.c.b16 %v3088, %v3072
    %v4097 = vpack.c.b16 %v3089, %v3073
    %v4098 = vpack.c.b16 %v3090, %v3074
    %v4099 = vpack.c.b16 %v3091, %v3075
    %v4100 = vpack.c.b16 %v3092, %v3076
    %v4101 = vpack.c.b16 %v3093, %v3077
    %v4102 = vpack.c.b16 %v3094, %v3078
    %v4103 = vpack.c.b16 %v3095, %v3079
    %v4104 = vpack.c.b16 %v3096, %v3080
    %v4105 = vpack.c.b16 %v3097, %v3081
    %v4106 = vpack.c.b16 %v3098, %v3082
    %v4107 = vpack.c.b16 %v3099, %v3083
    %v4108 = vpack.c.b16 %v3100, %v3084
    %v4109 = vpack.c.b16 %v3101, %v3085
    %v4110 = vpack.c.b16 %v3102, %v3086
    %v4111 = vpack.c.b16 %v3103, %v3087
    %v4112 = vpack.c.b16 %v3120, %v3104
    %v4113 = vpack.c.b16 %v3121, %v3105
    %v4114 = vpack.c.b16 %v3122, %v3106
    %v4115 = vpack.c.b16 %v3123, %v3107
    %v4116 = vpack.c.b16 %v3124, %v3108
    %v4117 = vpack.c.b16 %v3125, %v3109
    %v4118 = vpack.c.b16 %v3126, %v3110
    %v4119 = vpack.c.b16 %v3127, %v3111
    %v4120 = vpack.c.b16 %v3128, %v3112
    %v4121 = vpack.c.b16 %v3129, %v3113
    %v4122 = vpack.c.b16 %v3130, %v3114
    %v4123 = vpack.c.b16 %v3131, %v3115
    %v4124 = vpack.c.b16 %v3132, %v3116
    %v4125 = vpack.c.b16 %v3133, %v3117
    %v4126 = vpack.c.b16 %v3134, %v3118
    %v4127 = vpack.c.b16 %v3135, %v3119
    %v4128 = vpack.c.b16 %v3152, %v3136
    %v4129 = vpack.c.b16 %v3153, %v3137
    %v4130 = vpack.c.b16 %v3154, %v3138
    %v4131 = vpack.c.b16 %v3155, %v3139
    %v4132 = vpack.c.b16 %v3156, %v3140
    %v4133 = vpack.c.b16 %v3157, %v3141
    %v4134 = vpack.c.b16 %v3158, %v3142
    %v4135 = vpack.c.b16 %v3159, %v3143
    %v4136 = vpack.c.b16 %v3160, %v3144
    %v4137 = vpack.c.b16 %v3161, %v3145
    %v4138 = vpack.c.b16 %v3162, %v3146
    %v4139 = vpack.c.b16 %v3163, %v3147
    %v4140 = vpack.c.b16 %v3164, %v3148
    %v4141 = vpack.c.b16 %v3165, %v3149
    %v4142 = vpack.c.b16 %v3166, %v3150
    %v4143 = vpack.c.b16 %v3167, %v3151
    %v4144 = vpack.c.b16 %v3184, %v3168
    %v4145 = vpack.c.b16 %v3185, %v3169
    %v4146 = vpack.c.b16 %v3186, %v3170
    %v4147 = vpack.c.b16 %v3187, %v3171
    %v4148 = vpack.c.b16 %v3188, %v3172
    %v4149 = vpack.c.b16 %v3189, %v3173
    %v4150 = vpack.c.b16 %v3190, %v3174
    %v4151 = vpack.c.b16 %v3191, %v3175
    %v4152 = vpack.c.b16 %v3192, %v3176
    %v4153 = vpack.c.b16 %v3193, %v3177
    %v4154 = vpack.c.b16 %v3194, %v3178
    %v4155 = vpack.c.b16 %v3195, %v3179
    %v4156 = vpack.c.b16 %v3196, %v3180
    %v4157 = vpack.c.b16 %v3197, %v3181
    %v4158 = vpack.c.b16 %v3198, %v3182
    %v4159 = vpack.c.b16 %v3199, %v3183
    %v4160 = vpack.c.b16 %v3216, %v3200
    %v4161 = vpack.c.b16 %v3217, %v3201
    %v4162 = vpack.c.b16 %v3218, %v3202
    %v4163 = vpack.c.b16 %v3219, %v3203
    %v4164 = vpack.c.b16 %v3220, %v3204
    %v4165 = vpack.c.b16 %v3221, %v3205
    %v4166 = vpack.c.b16 %v3222, %v3206
    %v4167 = vpack.c.b16 %v3223, %v3207
    %v4168 = vpack.c.b16 %v3224, %v3208
    %v4169 = vpack.c.b16 %v3225, %v3209
    %v4170 = vpack.c.b16 %v3226, %v3210
    %v4171 = vpack.c.b16 %v3227, %v3211
    %v4172 = vpack.c.b16 %v3228, %v3212
    %v4173 = vpack.c.b16 %v3229, %v3213
    %v4174 = vpack.c.b16 %v3230, %v3214
    %v4175 = vpack.c.b16 %v3231, %v3215
    %v4176 = vpack.c.b16 %v3248, %v3232
    %v4177 = vpack.c.b16 %v3249, %v3233
    %v4178 = vpack.c.b16 %v3250, %v3234
    %v4179 = vpack.c.b16 %v3251, %v3235
    %v4180 = vpack.c.b16 %v3252, %v3236
    %v4181 = vpack.c.b16 %v3253, %v3237
    %v4182 = vpack.c.b16 %v3254, %v3238
    %v4183 = vpack.c.b16 %v3255, %v3239
    %v4184 = vpack.c.b16 %v3256, %v3240
    %v4185 = vpack.c.b16 %v3257, %v3241
    %v4186 = vpack.c.b16 %v3258, %v3242
    %v4187 = vpack.c.b16 %v3259, %v3243
    %v4188 = vpack.c.b16 %v3260, %v3244
    %v4189 = vpack.c.b16 %v3261, %v3245
    %v4190 = vpack.c.b16 %v3262, %v3246
    %v4191 = vpack.c.b16 %v3263, %v3247
    %v4192 = vpack.c.b16 %v3280, %v3264
    %v4193 = vpack.c.b16 %v3281, %v3265
    %v4194 = vpack.c.b16 %v3282, %v3266
    %v4195 = vpack.c.b16 %v3283, %v3267
    %v4196 = vpack.c.b16 %v3284, %v3268
    %v4197 = vpack.c.b16 %v3285, %v3269
    %v4198 = vpack.c.b16 %v3286, %v3270
    %v4199 = vpack.c.b16 %v3287, %v3271
    %v4200 = vpack.c.b16 %v3288, %v3272
    %v4201 = vpack.c.b16 %v3289, %v3273
    %v4202 = vpack.c.b16 %v3290, %v3274
    %v4203 = vpack.c.b16 %v3291, %v3275
    %v4204 = vpack.c.b16 %v3292, %v3276
    %v4205 = vpack.c.b16 %v3293, %v3277
    %v4206 = vpack.c.b16 %v3294, %v3278
    %v4207 = vpack.c.b16 %v3295, %v3279
    %v4208 = vpack.c.b16 %v3312, %v3296
    %v4209 = vpack.c.b16 %v3313, %v3297
    %v4210 = vpack.c.b16 %v3314, %v3298
    %v4211 = vpack.c.b16 %v3315, %v3299
    %v4212 = vpack.c.b16 %v3316, %v3300
    %v4213 = vpack.c.b16 %v3317, %v3301
    %v4214 = vpack.c.b16 %v3318, %v3302
    %v4215 = vpack.c.b16 %v3319, %v3303
    %v4216 = vpack.c.b16 %v3320, %v3304
    %v4217 = vpack.c.b16 %v3321, %v3305
    %v4218 = vpack.c.b16 %v3322, %v3306
    %v4219 = vpack.c.b16 %v3323, %v3307
    %v4220 = vpack.c.b16 %v3324, %v3308
    %v4221 = vpack.c.b16 %v3325, %v3309
    %v4222 = vpack.c.b16 %v3326, %v3310
    %v4223 = vpack.c.b16 %v3327, %v3311
    %v4224 = vpack.c.b16 %v3344, %v3328
    %v4225 = vpack.c.b16 %v3345, %v3329
    %v4226 = vpack.c.b16 %v3346, %v3330
    %v4227 = vpack.c.b16 %v3347, %v3331
    %v4228 = vpack.c.b16 %v3348, %v3332
    %v4229 = vpack.c.b16 %v3349, %v3333
    %v4230 = vpack.c.b16 %v3350, %v3334
    %v4231 = vpack.c.b16 %v3351, %v3335
    %v4232 = vpack.c.b16 %v3352, %v3336
    %v4233 = vpack.c.b16 %v3353, %v3337
    %v4234 = vpack.c.b16 %v3354, %v3338
    %v4235 = vpack.c.b16 %v3355, %v3339
    %v4236 = vpack.c.b16 %v3356, %v3340
    %v4237 = vpack.c.b16 %v3357, %v3341
    %v4238 = vpack.c.b16 %v3358, %v3342
    %v4239 = vpack.c.b16 %v3359, %v3343
    %v4240 = vpack.c.b16 %v3376, %v3360
    %v4241 = vpack.c.b16 %v3377, %v3361
    %v4242 = vpack.c.b16 %v3378, %v3362
    %v4243 = vpack.c.b16 %v3379, %v3363
    %v4244 = vpack.c.b16 %v3380, %v3364
    %v4245 = vpack.c.b16 %v3381, %v3365
    %v4246 = vpack.c.b16 %v3382, %v3366
    %v4247 = vpack.c.b16 %v3383, %v3367
    %v4248 = vpack.c.b16 %v3384, %v3368
    %v4249 = vpack.c.b16 %v3385, %v3369
    %v4250 = vpack.c.b16 %v3386, %v3370
    %v4251 = vpack.c.b16 %v3387, %v3371
    %v4252 = vpack.c.b16 %v3388, %v3372
    %v4253 = vpack.c.b16 %v3389, %v3373
    %v4254 = vpack.c.b16 %v3390, %v3374
    %v4255 = vpack.c.b16 %v3391, %v3375
    %v4256 = vpack.c.b16 %v3408, %v3392
    %v4257 = vpack.c.b16 %v3409, %v3393
    %v4258 = vpack.c.b16 %v3410, %v3394
    %v4259 = vpack.c.b16 %v3411, %v3395
    %v4260 = vpack.c.b16 %v3412, %v3396
    %v4261 = vpack.c.b16 %v3413, %v3397
    %v4262 = vpack.c.b16 %v3414, %v3398
    %v4263 = vpack.c.b16 %v3415, %v3399
    %v4264 = vpack.c.b16 %v3416, %v3400
    %v4265 = vpack.c.b16 %v3417, %v3401
    %v4266 = vpack.c.b16 %v3418, %v3402
    %v4267 = vpack.c.b16 %v3419, %v3403
    %v4268 = vpack.c.b16 %v3420, %v3404
    %v4269 = vpack.c.b16 %v3421, %v3405
    %v4270 = vpack.c.b16 %v3422, %v3406
    %v4271 = vpack.c.b16 %v3423, %v3407
    %v4272 = vpack.c.b16 %v3440, %v3424
    %v4273 = vpack.c.b16 %v3441, %v3425
    %v4274 = vpack.c.b16 %v3442, %v3426
    %v4275 = vpack.c.b16 %v3443, %v3427
    %v4276 = vpack.c.b16 %v3444, %v3428
    %v4277 = vpack.c.b16 %v3445, %v3429
    %v4278 = vpack.c.b16 %v3446, %v3430
    %v4279 = vpack.c.b16 %v3447, %v3431
    %v4280 = vpack.c.b16 %v3448, %v3432
    %v4281 = vpack.c.b16 %v3449, %v3433
    %v4282 = vpack.c.b16 %v3450, %v3434
    %v4283 = vpack.c.b16 %v3451, %v3435
    %v4284 = vpack.c.b16 %v3452, %v3436
    %v4285 = vpack.c.b16 %v3453, %v3437
    %v4286 = vpack.c.b16 %v3454, %v3438
    %v4287 = vpack.c.b16 %v3455, %v3439
    %v4288 = vpack.c.b16 %v3472, %v3456
    %v4289 = vpack.c.b16 %v3473, %v3457
    %v4290 = vpack.c.b16 %v3474, %v3458
    %v4291 = vpack.c.b16 %v3475, %v3459
    %v4292 = vpack.c.b16 %v3476, %v3460
    %v4293 = vpack.c.b16 %v3477, %v3461
    %v4294 = vpack.c.b16 %v3478, %v3462
    %v4295 = vpack.c.b16 %v3479, %v3463
    %v4296 = vpack.c.b16 %v3480, %v3464
    %v4297 = vpack.c.b16 %v3481, %v3465
    %v4298 = vpack.c.b16 %v3482, %v3466
    %v4299 = vpack.c.b16 %v3483, %v3467
    %v4300 = vpack.c.b16 %v3484, %v3468
    %v4301 = vpack.c.b16 %v3485, %v3469
    %v4302 = vpack.c.b16 %v3486, %v3470
    %v4303 = vpack.c.b16 %v3487, %v3471
    %v4304 = vpack.c.b16 %v3504, %v3488
    %v4305 = vpack.c.b16 %v3505, %v3489
    %v4306 = vpack.c.b16 %v3506, %v3490
    %v4307 = vpack.c.b16 %v3507, %v3491
    %v4308 = vpack.c.b16 %v3508, %v3492
    %v4309 = vpack.c.b16 %v3509, %v3493
    %v4310 = vpack.c.b16 %v3510, %v3494
    %v4311 = vpack.c.b16 %v3511, %v3495
    %v4312 = vpack.c.b16 %v3512, %v3496
    %v4313 = vpack.c.b16 %v3513, %v3497
    %v4314 = vpack.c.b16 %v3514, %v3498
    %v4315 = vpack.c.b16 %v3515, %v3499
    %v4316 = vpack.c.b16 %v3516, %v3500
    %v4317 = vpack.c.b16 %v3517, %v3501
    %v4318 = vpack.c.b16 %v3518, %v3502
    %v4319 = vpack.c.b16 %v3519, %v3503
    %v4320 = vpack.c.b16 %v3536, %v3520
    %v4321 = vpack.c.b16 %v3537, %v3521
    %v4322 = vpack.c.b16 %v3538, %v3522
    %v4323 = vpack.c.b16 %v3539, %v3523
    %v4324 = vpack.c.b16 %v3540, %v3524
    %v4325 = vpack.c.b16 %v3541, %v3525
    %v4326 = vpack.c.b16 %v3542, %v3526
    %v4327 = vpack.c.b16 %v3543, %v3527
    %v4328 = vpack.c.b16 %v3544, %v3528
    %v4329 = vpack.c.b16 %v3545, %v3529
    %v4330 = vpack.c.b16 %v3546, %v3530
    %v4331 = vpack.c.b16 %v3547, %v3531
    %v4332 = vpack.c.b16 %v3548, %v3532
    %v4333 = vpack.c.b16 %v3549, %v3533
    %v4334 = vpack.c.b16 %v3550, %v3534
    %v4335 = vpack.c.b16 %v3551, %v3535
    %v4336 = vpack.c.b16 %v3568, %v3552
    %v4337 = vpack.c.b16 %v3569, %v3553
    %v4338 = vpack.c.b16 %v3570, %v3554
    %v4339 = vpack.c.b16 %v3571, %v3555
    %v4340 = vpack.c.b16 %v3572, %v3556
    %v4341 = vpack.c.b16 %v3573, %v3557
    %v4342 = vpack.c.b16 %v3574, %v3558
    %v4343 = vpack.c.b16 %v3575, %v3559
    %v4344 = vpack.c.b16 %v3576, %v3560
    %v4345 = vpack.c.b16 %v3577, %v3561
    %v4346 = vpack.c.b16 %v3578, %v3562
    %v4347 = vpack.c.b16 %v3579, %v3563
    %v4348 = vpack.c.b16 %v3580, %v3564
    %v4349 = vpack.c.b16 %v3581, %v3565
    %v4350 = vpack.c.b16 %v3582, %v3566
    %v4351 = vpack.c.b16 %v3583, %v3567
    %v4352 = vpack.c.b16 %v3600, %v3584
    %v4353 = vpack.c.b16 %v3601, %v3585
    %v4354 = vpack.c.b16 %v3602, %v3586
    %v4355 = vpack.c.b16 %v3603, %v3587
    %v4356 = vpack.c.b16 %v3604, %v3588
    %v4357 = vpack.c.b16 %v3605, %v3589
    %v4358 = vpack.c.b16 %v3606, %v3590
    %v4359 = vpack.c.b16 %v3607, %v3591
    %v4360 = vpack.c.b16 %v3608, %v3592
    %v4361 = vpack.c.b16 %v3609, %v3593
    %v4362 = vpack.c.b16 %v3610, %v3594
    %v4363 = vpack.c.b16 %v3611, %v3595
    %v4364 = vpack.c.b16 %v3612, %v3596
    %v4365 = vpack.c.b16 %v3613, %v3597
    %v4366 = vpack.c.b16 %v3614, %v3598
    %v4367 = vpack.c.b16 %v3615, %v3599
    %v4368 = vpack.c.b16 %v3632, %v3616
    %v4369 = vpack.c.b16 %v3633, %v3617
    %v4370 = vpack.c.b16 %v3634, %v3618
    %v4371 = vpack.c.b16 %v3635, %v3619
    %v4372 = vpack.c.b16 %v3636, %v3620
    %v4373 = vpack.c.b16 %v3637, %v3621
    %v4374 = vpack.c.b16 %v3638, %v3622
    %v4375 = vpack.c.b16 %v3639, %v3623
    %v4376 = vpack.c.b16 %v3640, %v3624
    %v4377 = vpack.c.b16 %v3641, %v3625
    %v4378 = vpack.c.b16 %v3642, %v3626
    %v4379 = vpack.c.b16 %v3643, %v3627
    %v4380 = vpack.c.b16 %v3644, %v3628
    %v4381 = vpack.c.b16 %v3645, %v3629
    %v4382 = vpack.c.b16 %v3646, %v3630
    %v4383 = vpack.c.b16 %v3647, %v3631
    %v4384 = vpack.c.b16 %v3664, %v3648
    %v4385 = vpack.c.b16 %v3665, %v3649
    %v4386 = vpack.c.b16 %v3666, %v3650
    %v4387 = vpack.c.b16 %v3667, %v3651
    %v4388 = vpack.c.b16 %v3668, %v3652
    %v4389 = vpack.c.b16 %v3669, %v3653
    %v4390 = vpack.c.b16 %v3670, %v3654
    %v4391 = vpack.c.b16 %v3671, %v3655
    %v4392 = vpack.c.b16 %v3672, %v3656
    %v4393 = vpack.c.b16 %v3673, %v3657
    %v4394 = vpack.c.b16 %v3674, %v3658
    %v4395 = vpack.c.b16 %v3675, %v3659
    %v4396 = vpack.c.b16 %v3676, %v3660
    %v4397 = vpack.c.b16 %v3677, %v3661
    %v4398 = vpack.c.b16 %v3678, %v3662
    %v4399 = vpack.c.b16 %v3679, %v3663
    %v4400 = vpack.c.b16 %v3696, %v3680
    %v4401 = vpack.c.b16 %v3697, %v3681
    %v4402 = vpack.c.b16 %v3698, %v3682
    %v4403 = vpack.c.b16 %v3699, %v3683
    %v4404 = vpack.c.b16 %v3700, %v3684
    %v4405 = vpack.c.b16 %v3701, %v3685
    %v4406 = vpack.c.b16 %v3702, %v3686
    %v4407 = vpack.c.b16 %v3703, %v3687
    %v4408 = vpack.c.b16 %v3704, %v3688
    %v4409 = vpack.c.b16 %v3705, %v3689
    %v4410 = vpack.c.b16 %v3706, %v3690
    %v4411 = vpack.c.b16 %v3707, %v3691
    %v4412 = vpack.c.b16 %v3708, %v3692
    %v4413 = vpack.c.b16 %v3709, %v3693
    %v4414 = vpack.c.b16 %v3710, %v3694
    %v4415 = vpack.c.b16 %v3711, %v3695
    %v4416 = vpack.c.b16 %v3728, %v3712
    %v4417 = vpack.c.b16 %v3729, %v3713
    %v4418 = vpack.c.b16 %v3730, %v3714
    %v4419 = vpack.c.b16 %v3731, %v3715
    %v4420 = vpack.c.b16 %v3732, %v3716
    %v4421 = vpack.c.b16 %v3733, %v3717
    %v4422 = vpack.c.b16 %v3734, %v3718
    %v4423 = vpack.c.b16 %v3735, %v3719
    %v4424 = vpack.c.b16 %v3736, %v3720
    %v4425 = vpack.c.b16 %v3737, %v3721
    %v4426 = vpack.c.b16 %v3738, %v3722
    %v4427 = vpack.c.b16 %v3739, %v3723
    %v4428 = vpack.c.b16 %v3740, %v3724
    %v4429 = vpack.c.b16 %v3741, %v3725
    %v4430 = vpack.c.b16 %v3742, %v3726
    %v4431 = vpack.c.b16 %v3743, %v3727
    %v4432 = vpack.c.b16 %v3760, %v3744
    %v4433 = vpack.c.b16 %v3761, %v3745
    %v4434 = vpack.c.b16 %v3762, %v3746
    %v4435 = vpack.c.b16 %v3763, %v3747
    %v4436 = vpack.c.b16 %v3764, %v3748
    %v4437 = vpack.c.b16 %v3765, %v3749
    %v4438 = vpack.c.b16 %v3766, %v3750
    %v4439 = vpack.c.b16 %v3767, %v3751
    %v4440 = vpack.c.b16 %v3768, %v3752
    %v4441 = vpack.c.b16 %v3769, %v3753
    %v4442 = vpack.c.b16 %v3770, %v3754
    %v4443 = vpack.c.b16 %v3771, %v3755
    %v4444 = vpack.c.b16 %v3772, %v3756
    %v4445 = vpack.c.b16 %v3773, %v3757
    %v4446 = vpack.c.b16 %v3774, %v3758
    %v4447 = vpack.c.b16 %v3775, %v3759
    %v4448 = vpack.c.b16 %v3792, %v3776
    %v4449 = vpack.c.b16 %v3793, %v3777
    %v4450 = vpack.c.b16 %v3794, %v3778
    %v4451 = vpack.c.b16 %v3795, %v3779
    %v4452 = vpack.c.b16 %v3796, %v3780
    %v4453 = vpack.c.b16 %v3797, %v3781
    %v4454 = vpack.c.b16 %v3798, %v3782
    %v4455 = vpack.c.b16 %v3799, %v3783
    %v4456 = vpack.c.b16 %v3800, %v3784
    %v4457 = vpack.c.b16 %v3801, %v3785
    %v4458 = vpack.c.b16 %v3802, %v3786
    %v4459 = vpack.c.b16 %v3803, %v3787
    %v4460 = vpack.c.b16 %v3804, %v3788
    %v4461 = vpack.c.b16 %v3805, %v3789
    %v4462 = vpack.c.b16 %v3806, %v3790
    %v4463 = vpack.c.b16 %v3807, %v3791
    %v4464 = vpack.c.b16 %v3824, %v3808
    %v4465 = vpack.c.b16 %v3825, %v3809
    %v4466 = vpack.c.b16 %v3826, %v3810
    %v4467 = vpack.c.b16 %v3827, %v3811
    %v4468 = vpack.c.b16 %v3828, %v3812
    %v4469 = vpack.c.b16 %v3829, %v3813
    %v4470 = vpack.c.b16 %v3830, %v3814
    %v4471 = vpack.c.b16 %v3831, %v3815
    %v4472 = vpack.c.b16 %v3832, %v3816
    %v4473 = vpack.c.b16 %v3833, %v3817
    %v4474 = vpack.c.b16 %v3834, %v3818
    %v4475 = vpack.c.b16 %v3835, %v3819
    %v4476 = vpack.c.b16 %v3836, %v3820
    %v4477 = vpack.c.b16 %v3837, %v3821
    %v4478 = vpack.c.b16 %v3838, %v3822
    %v4479 = vpack.c.b16 %v3839, %v3823
    %v4480 = vpack.c.b16 %v3856, %v3840
    %v4481 = vpack.c.b16 %v3857, %v3841
    %v4482 = vpack.c.b16 %v3858, %v3842
    %v4483 = vpack.c.b16 %v3859, %v3843
    %v4484 = vpack.c.b16 %v3860, %v3844
    %v4485 = vpack.c.b16 %v3861, %v3845
    %v4486 = vpack.c.b16 %v3862, %v3846
    %v4487 = vpack.c.b16 %v3863, %v3847
    %v4488 = vpack.c.b16 %v3864, %v3848
    %v4489 = vpack.c.b16 %v3865, %v3849
    %v4490 = vpack.c.b16 %v3866, %v3850
    %v4491 = vpack.c.b16 %v3867, %v3851
    %v4492 = vpack.c.b16 %v3868, %v3852
    %v4493 = vpack.c.b16 %v3869, %v3853
    %v4494 = vpack.c.b16 %v3870, %v3854
    %v4495 = vpack.c.b16 %v3871, %v3855
    %v4496 = vpack.c.b16 %v3888, %v3872
    %v4497 = vpack.c.b16 %v3889, %v3873
    %v4498 = vpack.c.b16 %v3890, %v3874
    %v4499 = vpack.c.b16 %v3891, %v3875
    %v4500 = vpack.c.b16 %v3892, %v3876
    %v4501 = vpack.c.b16 %v3893, %v3877
    %v4502 = vpack.c.b16 %v3894, %v3878
    %v4503 = vpack.c.b16 %v3895, %v3879
    %v4504 = vpack.c.b16 %v3896, %v3880
    %v4505 = vpack.c.b16 %v3897, %v3881
    %v4506 = vpack.c.b16 %v3898, %v3882
    %v4507 = vpack.c.b16 %v3899, %v3883
    %v4508 = vpack.c.b16 %v3900, %v3884
    %v4509 = vpack.c.b16 %v3901, %v3885
    %v4510 = vpack.c.b16 %v3902, %v3886
    %v4511 = vpack.c.b16 %v3903, %v3887
    %v4512 = vpack.c.b16 %v3920, %v3904
    %v4513 = vpack.c.b16 %v3921, %v3905
    %v4514 = vpack.c.b16 %v3922, %v3906
    %v4515 = vpack.c.b16 %v3923, %v3907
    %v4516 = vpack.c.b16 %v3924, %v3908
    %v4517 = vpack.c.b16 %v3925, %v3909
    %v4518 = vpack.c.b16 %v3926, %v3910
    %v4519 = vpack.c.b16 %v3927, %v3911
    %v4520 = vpack.c.b16 %v3928, %v3912
    %v4521 = vpack.c.b16 %v3929, %v3913
    %v4522 = vpack.c.b16 %v3930, %v3914
    %v4523 = vpack.c.b16 %v3931, %v3915
    %v4524 = vpack.c.b16 %v3932, %v3916
    %v4525 = vpack.c.b16 %v3933, %v3917
    %v4526 = vpack.c.b16 %v3934, %v3918
    %v4527 = vpack.c.b16 %v3935, %v3919
    %v4528 = vpack.c.b16 %v3952, %v3936
    %v4529 = vpack.c.b16 %v3953, %v3937
    %v4530 = vpack.c.b16 %v3954, %v3938
    %v4531 = vpack.c.b16 %v3955, %v3939
    %v4532 = vpack.c.b16 %v3956, %v3940
    %v4533 = vpack.c.b16 %v3957, %v3941
    %v4534 = vpack.c.b16 %v3958, %v3942
    %v4535 = vpack.c.b16 %v3959, %v3943
    %v4536 = vpack.c.b16 %v3960, %v3944
    %v4537 = vpack.c.b16 %v3961, %v3945
    %v4538 = vpack.c.b16 %v3962, %v3946
    %v4539 = vpack.c.b16 %v3963, %v3947
    %v4540 = vpack.c.b16 %v3964, %v3948
    %v4541 = vpack.c.b16 %v3965, %v3949
    %v4542 = vpack.c.b16 %v3966, %v3950
    %v4543 = vpack.c.b16 %v3967, %v3951
    %v4544 = vpack.c.b16 %v3984, %v3968
    %v4545 = vpack.c.b16 %v3985, %v3969
    %v4546 = vpack.c.b16 %v3986, %v3970
    %v4547 = vpack.c.b16 %v3987, %v3971
    %v4548 = vpack.c.b16 %v3988, %v3972
    %v4549 = vpack.c.b16 %v3989, %v3973
    %v4550 = vpack.c.b16 %v3990, %v3974
    %v4551 = vpack.c.b16 %v3991, %v3975
    %v4552 = vpack.c.b16 %v3992, %v3976
    %v4553 = vpack.c.b16 %v3993, %v3977
    %v4554 = vpack.c.b16 %v3994, %v3978
    %v4555 = vpack.c.b16 %v3995, %v3979
    %v4556 = vpack.c.b16 %v3996, %v3980
    %v4557 = vpack.c.b16 %v3997, %v3981
    %v4558 = vpack.c.b16 %v3998, %v3982
    %v4559 = vpack.c.b16 %v3999, %v3983
    %v4560 = vpack.c.b16 %v4016, %v4000
    %v4561 = vpack.c.b16 %v4017, %v4001
    %v4562 = vpack.c.b16 %v4018, %v4002
    %v4563 = vpack.c.b16 %v4019, %v4003
    %v4564 = vpack.c.b16 %v4020, %v4004
    %v4565 = vpack.c.b16 %v4021, %v4005
    %v4566 = vpack.c.b16 %v4022, %v4006
    %v4567 = vpack.c.b16 %v4023, %v4007
    %v4568 = vpack.c.b16 %v4024, %v4008
    %v4569 = vpack.c.b16 %v4025, %v4009
    %v4570 = vpack.c.b16 %v4026, %v4010
    %v4571 = vpack.c.b16 %v4027, %v4011
    %v4572 = vpack.c.b16 %v4028, %v4012
    %v4573 = vpack.c.b16 %v4029, %v4013
    %v4574 = vpack.c.b16 %v4030, %v4014
    %v4575 = vpack.c.b16 %v4031, %v4015
    %v4576 = vpack.c.b16 %v4048, %v4032
    %v4577 = vpack.c.b16 %v4049, %v4033
    %v4578 = vpack.c.b16 %v4050, %v4034
    %v4579 = vpack.c.b16 %v4051, %v4035
    %v4580 = vpack.c.b16 %v4052, %v4036
    %v4581 = vpack.c.b16 %v4053, %v4037
    %v4582 = vpack.c.b16 %v4054, %v4038
    %v4583 = vpack.c.b16 %v4055, %v4039
    %v4584 = vpack.c.b16 %v4056, %v4040
    %v4585 = vpack.c.b16 %v4057, %v4041
    %v4586 = vpack.c.b16 %v4058, %v4042
    %v4587 = vpack.c.b16 %v4059, %v4043
    %v4588 = vpack.c.b16 %v4060, %v4044
    %v4589 = vpack.c.b16 %v4061, %v4045
    %v4590 = vpack.c.b16 %v4062, %v4046
    %v4591 = vpack.c.b16 %v4063, %v4047
    %v4592 = vpack.c.b16 %v4080, %v4064
    %v4593 = vpack.c.b16 %v4081, %v4065
    %v4594 = vpack.c.b16 %v4082, %v4066
    %v4595 = vpack.c.b16 %v4083, %v4067
    %v4596 = vpack.c.b16 %v4084, %v4068
    %v4597 = vpack.c.b16 %v4085, %v4069
    %v4598 = vpack.c.b16 %v4086, %v4070
    %v4599 = vpack.c.b16 %v4087, %v4071
    %v4600 = vpack.c.b16 %v4088, %v4072
    %v4601 = vpack.c.b16 %v4089, %v4073
    %v4602 = vpack.c.b16 %v4090, %v4074
    %v4603 = vpack.c.b16 %v4091, %v4075
    %v4604 = vpack.c.b16 %v4092, %v4076
    %v4605 = vpack.c.b16 %v4093, %v4077
    %v4606 = vpack.c.b16 %v4094, %v4078
    %v4607 = vpack.c.b16 %v4095, %v4079
    %5120 = vmatpush.bf16.msra.mxu0 %v4208
    %5121 = vmatpush.bf16.msra.mxu0 %v4192
    %5122 = vmatpush.bf16.msra.mxu0 %v4176
    %5123 = vmatpush.bf16.msra.mxu0 %v4160
    %5124 = vmatpush.bf16.msra.mxu0 %v4144
    %5125 = vmatpush.bf16.msra.mxu0 %v4128
    %5126 = vmatpush.bf16.msra.mxu0 %v4112
    %5127 = vmatpush.bf16.msra.mxu0 %v4096
    %5128 = vmatmul.bf16.gmra.mxu0 %v2044
    %v5129 = vpop.f32.mrf.mxu0
    %v5130 = vadd.f32 -0.12503907, %v5129
    %v5131 = vpop.f32.mrf.mxu0
    %5132 = vdwg.mxu0
    %5133 = vmatpush.bf16.msra.mxu0 %v4336
    %5134 = vmatpush.bf16.msra.mxu0 %v4320
    %5135 = vmatpush.bf16.msra.mxu0 %v4304
    %5136 = vmatpush.bf16.msra.mxu0 %v4288
    %5137 = vmatpush.bf16.msra.mxu0 %v4272
    %5138 = vmatpush.bf16.msra.mxu0 %v4256
    %5139 = vmatpush.bf16.msra.mxu0 %v4240
    %5140 = vmatpush.bf16.msra.mxu0 %v4224
    %5141 = vmatmul.bf16.gmra.mxu0 %v2045
    %v5142 = vpop.f32.mrf.mxu0
    %v5143 = vadd.f32 %v5130, %v5142
    %v5144 = vpop.f32.mrf.mxu0
    %5145 = vdwg.mxu0
    %5146 = vmatpush.bf16.msra.mxu0 %v4464
    %5147 = vmatpush.bf16.msra.mxu0 %v4448
    %5148 = vmatpush.bf16.msra.mxu0 %v4432
    %5149 = vmatpush.bf16.msra.mxu0 %v4416
    %5150 = vmatpush.bf16.msra.mxu0 %v4400
    %5151 = vmatpush.bf16.msra.mxu0 %v4384
    %5152 = vmatpush.bf16.msra.mxu0 %v4368
    %5153 = vmatpush.bf16.msra.mxu0 %v4352
    %5154 = vmatmul.bf16.gmra.mxu0 %v2046
    %v5155 = vpop.f32.mrf.mxu0
    %v5156 = vadd.f32 %v5143, %v5155
    %v5157 = vpop.f32.mrf.mxu0
    %5158 = vdwg.mxu0
    %5159 = vmatpush.bf16.msra.mxu0 %v4592
    %5160 = vmatpush.bf16.msra.mxu0 %v4576
    %5161 = vmatpush.bf16.msra.mxu0 %v4560
    %5162 = vmatpush.bf16.msra.mxu0 %v4544
    %5163 = vmatpush.bf16.msra.mxu0 %v4528
    %5164 = vmatpush.bf16.msra.mxu0 %v4512
    %5165 = vmatpush.bf16.msra.mxu0 %v4496
    %5166 = vmatpush.bf16.msra.mxu0 %v4480
    %5167 = vmatmul.bf16.gmra.mxu0 %v2047
    %v5168 = vpop.f32.mrf.mxu0
    %v5169 = vadd.f32 %v5156, %v5168
    %v5170 = vpop.f32.mrf.mxu0
    %5171 = vdwg.mxu0
    %5172 = vmatpush.bf16.msra.mxu0 %v4209
    %5173 = vmatpush.bf16.msra.mxu0 %v4193
    %5174 = vmatpush.bf16.msra.mxu0 %v4177
    %5175 = vmatpush.bf16.msra.mxu0 %v4161
    %5176 = vmatpush.bf16.msra.mxu0 %v4145
    %5177 = vmatpush.bf16.msra.mxu0 %v4129
    %5178 = vmatpush.bf16.msra.mxu0 %v4113
    %5179 = vmatpush.bf16.msra.mxu0 %v4097
    %5180 = vmatmul.bf16.gmra.mxu0 %v2044
    %v5181 = vpop.f32.mrf.mxu0
    %v5182 = vadd.f32 -0.12503907, %v5181
    %v5183 = vpop.f32.mrf.mxu0
    %5184 = vdwg.mxu0
    %5185 = vmatpush.bf16.msra.mxu0 %v4337
    %5186 = vmatpush.bf16.msra.mxu0 %v4321
    %5187 = vmatpush.bf16.msra.mxu0 %v4305
    %5188 = vmatpush.bf16.msra.mxu0 %v4289
    %5189 = vmatpush.bf16.msra.mxu0 %v4273
    %5190 = vmatpush.bf16.msra.mxu0 %v4257
    %5191 = vmatpush.bf16.msra.mxu0 %v4241
    %5192 = vmatpush.bf16.msra.mxu0 %v4225
    %5193 = vmatmul.bf16.gmra.mxu0 %v2045
    %v5194 = vpop.f32.mrf.mxu0
    %v5195 = vadd.f32 %v5182, %v5194
    %v5196 = vpop.f32.mrf.mxu0
    %5197 = vdwg.mxu0
    %5198 = vmatpush.bf16.msra.mxu0 %v4465
    %5199 = vmatpush.bf16.msra.mxu0 %v4449
    %5200 = vmatpush.bf16.msra.mxu0 %v4433
    %5201 = vmatpush.bf16.msra.mxu0 %v4417
    %5202 = vmatpush.bf16.msra.mxu0 %v4401
    %5203 = vmatpush.bf16.msra.mxu0 %v4385
    %5204 = vmatpush.bf16.msra.mxu0 %v4369
    %5205 = vmatpush.bf16.msra.mxu0 %v4353
    %5206 = vmatmul.bf16.gmra.mxu0 %v2046
    %v5207 = vpop.f32.mrf.mxu0
    %v5208 = vadd.f32 %v5195, %v5207
    %v5209 = vpop.f32.mrf.mxu0
    %5210 = vdwg.mxu0
    %5211 = vmatpush.bf16.msra.mxu0 %v4593
    %5212 = vmatpush.bf16.msra.mxu0 %v4577
    %5213 = vmatpush.bf16.msra.mxu0 %v4561
    %5214 = vmatpush.bf16.msra.mxu0 %v4545
    %5215 = vmatpush.bf16.msra.mxu0 %v4529
    %5216 = vmatpush.bf16.msra.mxu0 %v4513
    %5217 = vmatpush.bf16.msra.mxu0 %v4497
    %5218 = vmatpush.bf16.msra.mxu0 %v4481
    %5219 = vmatmul.bf16.gmra.mxu0 %v2047
    %v5220 = vpop.f32.mrf.mxu0
    %v5221 = vadd.f32 %v5208, %v5220
    %v5222 = vpop.f32.mrf.mxu0
    %5223 = vdwg.mxu0
    %5224 = vmatpush.bf16.msra.mxu0 %v4210
    %5225 = vmatpush.bf16.msra.mxu0 %v4194
    %5226 = vmatpush.bf16.msra.mxu0 %v4178
    %5227 = vmatpush.bf16.msra.mxu0 %v4162
    %5228 = vmatpush.bf16.msra.mxu0 %v4146
    %5229 = vmatpush.bf16.msra.mxu0 %v4130
    %5230 = vmatpush.bf16.msra.mxu0 %v4114
    %5231 = vmatpush.bf16.msra.mxu0 %v4098
    %5232 = vmatmul.bf16.gmra.mxu0 %v2044
    %v5233 = vpop.f32.mrf.mxu0
    %v5234 = vadd.f32 -0.12503907, %v5233
    %v5235 = vpop.f32.mrf.mxu0
    %5236 = vdwg.mxu0
    %5237 = vmatpush.bf16.msra.mxu0 %v4338
    %5238 = vmatpush.bf16.msra.mxu0 %v4322
    %5239 = vmatpush.bf16.msra.mxu0 %v4306
    %5240 = vmatpush.bf16.msra.mxu0 %v4290
    %5241 = vmatpush.bf16.msra.mxu0 %v4274
    %5242 = vmatpush.bf16.msra.mxu0 %v4258
    %5243 = vmatpush.bf16.msra.mxu0 %v4242
    %5244 = vmatpush.bf16.msra.mxu0 %v4226
    %5245 = vmatmul.bf16.gmra.mxu0 %v2045
    %v5246 = vpop.f32.mrf.mxu0
    %v5247 = vadd.f32 %v5234, %v5246
    %v5248 = vpop.f32.mrf.mxu0
    %5249 = vdwg.mxu0
    %5250 = vmatpush.bf16.msra.mxu0 %v4466
    %5251 = vmatpush.bf16.msra.mxu0 %v4450
    %5252 = vmatpush.bf16.msra.mxu0 %v4434
    %5253 = vmatpush.bf16.msra.mxu0 %v4418
    %5254 = vmatpush.bf16.msra.mxu0 %v4402
    %5255 = vmatpush.bf16.msra.mxu0 %v4386
    %5256 = vmatpush.bf16.msra.mxu0 %v4370
    %5257 = vmatpush.bf16.msra.mxu0 %v4354
    %5258 = vmatmul.bf16.gmra.mxu0 %v2046
    %v5259 = vpop.f32.mrf.mxu0
    %v5260 = vadd.f32 %v5247, %v5259
    %v5261 = vpop.f32.mrf.mxu0
    %5262 = vdwg.mxu0
    %5263 = vmatpush.bf16.msra.mxu0 %v4594
    %5264 = vmatpush.bf16.msra.mxu0 %v4578
    %5265 = vmatpush.bf16.msra.mxu0 %v4562
    %5266 = vmatpush.bf16.msra.mxu0 %v4546
    %5267 = vmatpush.bf16.msra.mxu0 %v4530
    %5268 = vmatpush.bf16.msra.mxu0 %v4514
    %5269 = vmatpush.bf16.msra.mxu0 %v4498
    %5270 = vmatpush.bf16.msra.mxu0 %v4482
    %5271 = vmatmul.bf16.gmra.mxu0 %v2047
    %v5272 = vpop.f32.mrf.mxu0
    %v5273 = vadd.f32 %v5260, %v5272
    %v5274 = vpop.f32.mrf.mxu0
    %5275 = vdwg.mxu0
    %5276 = vmatpush.bf16.msra.mxu0 %v4211
    %5277 = vmatpush.bf16.msra.mxu0 %v4195
    %5278 = vmatpush.bf16.msra.mxu0 %v4179
    %5279 = vmatpush.bf16.msra.mxu0 %v4163
    %5280 = vmatpush.bf16.msra.mxu0 %v4147
    %5281 = vmatpush.bf16.msra.mxu0 %v4131
    %5282 = vmatpush.bf16.msra.mxu0 %v4115
    %5283 = vmatpush.bf16.msra.mxu0 %v4099
    %5284 = vmatmul.bf16.gmra.mxu0 %v2044
    %v5285 = vpop.f32.mrf.mxu0
    %v5286 = vadd.f32 -0.12503907, %v5285
    %v5287 = vpop.f32.mrf.mxu0
    %5288 = vdwg.mxu0
    %5289 = vmatpush.bf16.msra.mxu0 %v4339
    %5290 = vmatpush.bf16.msra.mxu0 %v4323
    %5291 = vmatpush.bf16.msra.mxu0 %v4307
    %5292 = vmatpush.bf16.msra.mxu0 %v4291
    %5293 = vmatpush.bf16.msra.mxu0 %v4275
    %5294 = vmatpush.bf16.msra.mxu0 %v4259
    %5295 = vmatpush.bf16.msra.mxu0 %v4243
    %5296 = vmatpush.bf16.msra.mxu0 %v4227
    %5297 = vmatmul.bf16.gmra.mxu0 %v2045
    %v5298 = vpop.f32.mrf.mxu0
    %v5299 = vadd.f32 %v5286, %v5298
    %v5300 = vpop.f32.mrf.mxu0
    %5301 = vdwg.mxu0
    %5302 = vmatpush.bf16.msra.mxu0 %v4467
    %5303 = vmatpush.bf16.msra.mxu0 %v4451
    %5304 = vmatpush.bf16.msra.mxu0 %v4435
    %5305 = vmatpush.bf16.msra.mxu0 %v4419
    %5306 = vmatpush.bf16.msra.mxu0 %v4403
    %5307 = vmatpush.bf16.msra.mxu0 %v4387
    %5308 = vmatpush.bf16.msra.mxu0 %v4371
    %5309 = vmatpush.bf16.msra.mxu0 %v4355
    %5310 = vmatmul.bf16.gmra.mxu0 %v2046
    %v5311 = vpop.f32.mrf.mxu0
    %v5312 = vadd.f32 %v5299, %v5311
    %v5313 = vpop.f32.mrf.mxu0
    %5314 = vdwg.mxu0
    %5315 = vmatpush.bf16.msra.mxu0 %v4595
    %5316 = vmatpush.bf16.msra.mxu0 %v4579
    %5317 = vmatpush.bf16.msra.mxu0 %v4563
    %5318 = vmatpush.bf16.msra.mxu0 %v4547
    %5319 = vmatpush.bf16.msra.mxu0 %v4531
    %5320 = vmatpush.bf16.msra.mxu0 %v4515
    %5321 = vmatpush.bf16.msra.mxu0 %v4499
    %5322 = vmatpush.bf16.msra.mxu0 %v4483
    %5323 = vmatmul.bf16.gmra.mxu0 %v2047
    %v5324 = vpop.f32.mrf.mxu0
    %v5325 = vadd.f32 %v5312, %v5324
    %v5326 = vpop.f32.mrf.mxu0
    %5327 = vdwg.mxu0
    %5328 = vmatpush.bf16.msra.mxu0 %v4212
    %5329 = vmatpush.bf16.msra.mxu0 %v4196
    %5330 = vmatpush.bf16.msra.mxu0 %v4180
    %5331 = vmatpush.bf16.msra.mxu0 %v4164
    %5332 = vmatpush.bf16.msra.mxu0 %v4148
    %5333 = vmatpush.bf16.msra.mxu0 %v4132
    %5334 = vmatpush.bf16.msra.mxu0 %v4116
    %5335 = vmatpush.bf16.msra.mxu0 %v4100
    %5336 = vmatmul.bf16.gmra.mxu0 %v2044
    %v5337 = vpop.f32.mrf.mxu0
    %v5338 = vadd.f32 -0.12503907, %v5337
    %v5339 = vpop.f32.mrf.mxu0
    %5340 = vdwg.mxu0
    %5341 = vmatpush.bf16.msra.mxu0 %v4340
    %5342 = vmatpush.bf16.msra.mxu0 %v4324
    %5343 = vmatpush.bf16.msra.mxu0 %v4308
    %5344 = vmatpush.bf16.msra.mxu0 %v4292
    %5345 = vmatpush.bf16.msra.mxu0 %v4276
    %5346 = vmatpush.bf16.msra.mxu0 %v4260
    %5347 = vmatpush.bf16.msra.mxu0 %v4244
    %5348 = vmatpush.bf16.msra.mxu0 %v4228
    %5349 = vmatmul.bf16.gmra.mxu0 %v2045
    %v5350 = vpop.f32.mrf.mxu0
    %v5351 = vadd.f32 %v5338, %v5350
    %v5352 = vpop.f32.mrf.mxu0
    %5353 = vdwg.mxu0
    %5354 = vmatpush.bf16.msra.mxu0 %v4468
    %5355 = vmatpush.bf16.msra.mxu0 %v4452
    %5356 = vmatpush.bf16.msra.mxu0 %v4436
    %5357 = vmatpush.bf16.msra.mxu0 %v4420
    %5358 = vmatpush.bf16.msra.mxu0 %v4404
    %5359 = vmatpush.bf16.msra.mxu0 %v4388
    %5360 = vmatpush.bf16.msra.mxu0 %v4372
    %5361 = vmatpush.bf16.msra.mxu0 %v4356
    %5362 = vmatmul.bf16.gmra.mxu0 %v2046
    %v5363 = vpop.f32.mrf.mxu0
    %v5364 = vadd.f32 %v5351, %v5363
    %v5365 = vpop.f32.mrf.mxu0
    %5366 = vdwg.mxu0
    %5367 = vmatpush.bf16.msra.mxu0 %v4596
    %5368 = vmatpush.bf16.msra.mxu0 %v4580
    %5369 = vmatpush.bf16.msra.mxu0 %v4564
    %5370 = vmatpush.bf16.msra.mxu0 %v4548
    %5371 = vmatpush.bf16.msra.mxu0 %v4532
    %5372 = vmatpush.bf16.msra.mxu0 %v4516
    %5373 = vmatpush.bf16.msra.mxu0 %v4500
    %5374 = vmatpush.bf16.msra.mxu0 %v4484
    %5375 = vmatmul.bf16.gmra.mxu0 %v2047
    %v5376 = vpop.f32.mrf.mxu0
    %v5377 = vadd.f32 %v5364, %v5376
    %v5378 = vpop.f32.mrf.mxu0
    %5379 = vdwg.mxu0
    %5380 = vmatpush.bf16.msra.mxu0 %v4213
    %5381 = vmatpush.bf16.msra.mxu0 %v4197
    %5382 = vmatpush.bf16.msra.mxu0 %v4181
    %5383 = vmatpush.bf16.msra.mxu0 %v4165
    %5384 = vmatpush.bf16.msra.mxu0 %v4149
    %5385 = vmatpush.bf16.msra.mxu0 %v4133
    %5386 = vmatpush.bf16.msra.mxu0 %v4117
    %5387 = vmatpush.bf16.msra.mxu0 %v4101
    %5388 = vmatmul.bf16.gmra.mxu0 %v2044
    %v5389 = vpop.f32.mrf.mxu0
    %v5390 = vadd.f32 -0.12503907, %v5389
    %v5391 = vpop.f32.mrf.mxu0
    %5392 = vdwg.mxu0
    %5393 = vmatpush.bf16.msra.mxu0 %v4341
    %5394 = vmatpush.bf16.msra.mxu0 %v4325
    %5395 = vmatpush.bf16.msra.mxu0 %v4309
    %5396 = vmatpush.bf16.msra.mxu0 %v4293
    %5397 = vmatpush.bf16.msra.mxu0 %v4277
    %5398 = vmatpush.bf16.msra.mxu0 %v4261
    %5399 = vmatpush.bf16.msra.mxu0 %v4245
    %5400 = vmatpush.bf16.msra.mxu0 %v4229
    %5401 = vmatmul.bf16.gmra.mxu0 %v2045
    %v5402 = vpop.f32.mrf.mxu0
    %v5403 = vadd.f32 %v5390, %v5402
    %v5404 = vpop.f32.mrf.mxu0
    %5405 = vdwg.mxu0
    %5406 = vmatpush.bf16.msra.mxu0 %v4469
    %5407 = vmatpush.bf16.msra.mxu0 %v4453
    %5408 = vmatpush.bf16.msra.mxu0 %v4437
    %5409 = vmatpush.bf16.msra.mxu0 %v4421
    %5410 = vmatpush.bf16.msra.mxu0 %v4405
    %5411 = vmatpush.bf16.msra.mxu0 %v4389
    %5412 = vmatpush.bf16.msra.mxu0 %v4373
    %5413 = vmatpush.bf16.msra.mxu0 %v4357
    %5414 = vmatmul.bf16.gmra.mxu0 %v2046
    %v5415 = vpop.f32.mrf.mxu0
    %v5416 = vadd.f32 %v5403, %v5415
    %v5417 = vpop.f32.mrf.mxu0
    %5418 = vdwg.mxu0
    %5419 = vmatpush.bf16.msra.mxu0 %v4597
    %5420 = vmatpush.bf16.msra.mxu0 %v4581
    %5421 = vmatpush.bf16.msra.mxu0 %v4565
    %5422 = vmatpush.bf16.msra.mxu0 %v4549
    %5423 = vmatpush.bf16.msra.mxu0 %v4533
    %5424 = vmatpush.bf16.msra.mxu0 %v4517
    %5425 = vmatpush.bf16.msra.mxu0 %v4501
    %5426 = vmatpush.bf16.msra.mxu0 %v4485
    %5427 = vmatmul.bf16.gmra.mxu0 %v2047
    %v5428 = vpop.f32.mrf.mxu0
    %v5429 = vadd.f32 %v5416, %v5428
    %v5430 = vpop.f32.mrf.mxu0
    %5431 = vdwg.mxu0
    %5432 = vmatpush.bf16.msra.mxu0 %v4214
    %5433 = vmatpush.bf16.msra.mxu0 %v4198
    %5434 = vmatpush.bf16.msra.mxu0 %v4182
    %5435 = vmatpush.bf16.msra.mxu0 %v4166
    %5436 = vmatpush.bf16.msra.mxu0 %v4150
    %5437 = vmatpush.bf16.msra.mxu0 %v4134
    %5438 = vmatpush.bf16.msra.mxu0 %v4118
    %5439 = vmatpush.bf16.msra.mxu0 %v4102
    %5440 = vmatmul.bf16.gmra.mxu0 %v2044
    %v5441 = vpop.f32.mrf.mxu0
    %v5442 = vadd.f32 -0.12503907, %v5441
    %v5443 = vpop.f32.mrf.mxu0
    %5444 = vdwg.mxu0
    %5445 = vmatpush.bf16.msra.mxu0 %v4342
    %5446 = vmatpush.bf16.msra.mxu0 %v4326
    %5447 = vmatpush.bf16.msra.mxu0 %v4310
    %5448 = vmatpush.bf16.msra.mxu0 %v4294
    %5449 = vmatpush.bf16.msra.mxu0 %v4278
    %5450 = vmatpush.bf16.msra.mxu0 %v4262
    %5451 = vmatpush.bf16.msra.mxu0 %v4246
    %5452 = vmatpush.bf16.msra.mxu0 %v4230
    %5453 = vmatmul.bf16.gmra.mxu0 %v2045
    %v5454 = vpop.f32.mrf.mxu0
    %v5455 = vadd.f32 %v5442, %v5454
    %v5456 = vpop.f32.mrf.mxu0
    %5457 = vdwg.mxu0
    %5458 = vmatpush.bf16.msra.mxu0 %v4470
    %5459 = vmatpush.bf16.msra.mxu0 %v4454
    %5460 = vmatpush.bf16.msra.mxu0 %v4438
    %5461 = vmatpush.bf16.msra.mxu0 %v4422
    %5462 = vmatpush.bf16.msra.mxu0 %v4406
    %5463 = vmatpush.bf16.msra.mxu0 %v4390
    %5464 = vmatpush.bf16.msra.mxu0 %v4374
    %5465 = vmatpush.bf16.msra.mxu0 %v4358
    %5466 = vmatmul.bf16.gmra.mxu0 %v2046
    %v5467 = vpop.f32.mrf.mxu0
    %v5468 = vadd.f32 %v5455, %v5467
    %v5469 = vpop.f32.mrf.mxu0
    %5470 = vdwg.mxu0
    %5471 = vmatpush.bf16.msra.mxu0 %v4598
    %5472 = vmatpush.bf16.msra.mxu0 %v4582
    %5473 = vmatpush.bf16.msra.mxu0 %v4566
    %5474 = vmatpush.bf16.msra.mxu0 %v4550
    %5475 = vmatpush.bf16.msra.mxu0 %v4534
    %5476 = vmatpush.bf16.msra.mxu0 %v4518
    %5477 = vmatpush.bf16.msra.mxu0 %v4502
    %5478 = vmatpush.bf16.msra.mxu0 %v4486
    %5479 = vmatmul.bf16.gmra.mxu0 %v2047
    %v5480 = vpop.f32.mrf.mxu0
    %v5481 = vadd.f32 %v5468, %v5480
    %v5482 = vpop.f32.mrf.mxu0
    %5483 = vdwg.mxu0
    %5484 = vmatpush.bf16.msra.mxu0 %v4215
    %5485 = vmatpush.bf16.msra.mxu0 %v4199
    %5486 = vmatpush.bf16.msra.mxu0 %v4183
    %5487 = vmatpush.bf16.msra.mxu0 %v4167
    %5488 = vmatpush.bf16.msra.mxu0 %v4151
    %5489 = vmatpush.bf16.msra.mxu0 %v4135
    %5490 = vmatpush.bf16.msra.mxu0 %v4119
    %5491 = vmatpush.bf16.msra.mxu0 %v4103
    %5492 = vmatmul.bf16.gmra.mxu0 %v2044
    %v5493 = vpop.f32.mrf.mxu0
    %v5494 = vadd.f32 -0.12503907, %v5493
    %v5495 = vpop.f32.mrf.mxu0
    %5496 = vdwg.mxu0
    %5497 = vmatpush.bf16.msra.mxu0 %v4343
    %5498 = vmatpush.bf16.msra.mxu0 %v4327
    %5499 = vmatpush.bf16.msra.mxu0 %v4311
    %5500 = vmatpush.bf16.msra.mxu0 %v4295
    %5501 = vmatpush.bf16.msra.mxu0 %v4279
    %5502 = vmatpush.bf16.msra.mxu0 %v4263
    %5503 = vmatpush.bf16.msra.mxu0 %v4247
    %5504 = vmatpush.bf16.msra.mxu0 %v4231
    %5505 = vmatmul.bf16.gmra.mxu0 %v2045
    %v5506 = vpop.f32.mrf.mxu0
    %v5507 = vadd.f32 %v5494, %v5506
    %v5508 = vpop.f32.mrf.mxu0
    %5509 = vdwg.mxu0
    %5510 = vmatpush.bf16.msra.mxu0 %v4471
    %5511 = vmatpush.bf16.msra.mxu0 %v4455
    %5512 = vmatpush.bf16.msra.mxu0 %v4439
    %5513 = vmatpush.bf16.msra.mxu0 %v4423
    %5514 = vmatpush.bf16.msra.mxu0 %v4407
    %5515 = vmatpush.bf16.msra.mxu0 %v4391
    %5516 = vmatpush.bf16.msra.mxu0 %v4375
    %5517 = vmatpush.bf16.msra.mxu0 %v4359
    %5518 = vmatmul.bf16.gmra.mxu0 %v2046
    %v5519 = vpop.f32.mrf.mxu0
    %v5520 = vadd.f32 %v5507, %v5519
    %v5521 = vpop.f32.mrf.mxu0
    %5522 = vdwg.mxu0
    %5523 = vmatpush.bf16.msra.mxu0 %v4599
    %5524 = vmatpush.bf16.msra.mxu0 %v4583
    %5525 = vmatpush.bf16.msra.mxu0 %v4567
    %5526 = vmatpush.bf16.msra.mxu0 %v4551
    %5527 = vmatpush.bf16.msra.mxu0 %v4535
    %5528 = vmatpush.bf16.msra.mxu0 %v4519
    %5529 = vmatpush.bf16.msra.mxu0 %v4503
    %5530 = vmatpush.bf16.msra.mxu0 %v4487
    %5531 = vmatmul.bf16.gmra.mxu0 %v2047
    %v5532 = vpop.f32.mrf.mxu0
    %v5533 = vadd.f32 %v5520, %v5532
    %v5534 = vpop.f32.mrf.mxu0
    %5535 = vdwg.mxu0
    %5536 = vmatpush.bf16.msra.mxu0 %v4216
    %5537 = vmatpush.bf16.msra.mxu0 %v4200
    %5538 = vmatpush.bf16.msra.mxu0 %v4184
    %5539 = vmatpush.bf16.msra.mxu0 %v4168
    %5540 = vmatpush.bf16.msra.mxu0 %v4152
    %5541 = vmatpush.bf16.msra.mxu0 %v4136
    %5542 = vmatpush.bf16.msra.mxu0 %v4120
    %5543 = vmatpush.bf16.msra.mxu0 %v4104
    %5544 = vmatmul.bf16.gmra.mxu0 %v2044
    %v5545 = vpop.f32.mrf.mxu0
    %v5546 = vadd.f32 -0.12503907, %v5545
    %v5547 = vpop.f32.mrf.mxu0
    %5548 = vdwg.mxu0
    %5549 = vmatpush.bf16.msra.mxu0 %v4344
    %5550 = vmatpush.bf16.msra.mxu0 %v4328
    %5551 = vmatpush.bf16.msra.mxu0 %v4312
    %5552 = vmatpush.bf16.msra.mxu0 %v4296
    %5553 = vmatpush.bf16.msra.mxu0 %v4280
    %5554 = vmatpush.bf16.msra.mxu0 %v4264
    %5555 = vmatpush.bf16.msra.mxu0 %v4248
    %5556 = vmatpush.bf16.msra.mxu0 %v4232
    %5557 = vmatmul.bf16.gmra.mxu0 %v2045
    %v5558 = vpop.f32.mrf.mxu0
    %v5559 = vadd.f32 %v5546, %v5558
    %v5560 = vpop.f32.mrf.mxu0
    %5561 = vdwg.mxu0
    %5562 = vmatpush.bf16.msra.mxu0 %v4472
    %5563 = vmatpush.bf16.msra.mxu0 %v4456
    %5564 = vmatpush.bf16.msra.mxu0 %v4440
    %5565 = vmatpush.bf16.msra.mxu0 %v4424
    %5566 = vmatpush.bf16.msra.mxu0 %v4408
    %5567 = vmatpush.bf16.msra.mxu0 %v4392
    %5568 = vmatpush.bf16.msra.mxu0 %v4376
    %5569 = vmatpush.bf16.msra.mxu0 %v4360
    %5570 = vmatmul.bf16.gmra.mxu0 %v2046
    %v5571 = vpop.f32.mrf.mxu0
    %v5572 = vadd.f32 %v5559, %v5571
    %v5573 = vpop.f32.mrf.mxu0
    %5574 = vdwg.mxu0
    %5575 = vmatpush.bf16.msra.mxu0 %v4600
    %5576 = vmatpush.bf16.msra.mxu0 %v4584
    %5577 = vmatpush.bf16.msra.mxu0 %v4568
    %5578 = vmatpush.bf16.msra.mxu0 %v4552
    %5579 = vmatpush.bf16.msra.mxu0 %v4536
    %5580 = vmatpush.bf16.msra.mxu0 %v4520
    %5581 = vmatpush.bf16.msra.mxu0 %v4504
    %5582 = vmatpush.bf16.msra.mxu0 %v4488
    %5583 = vmatmul.bf16.gmra.mxu0 %v2047
    %v5584 = vpop.f32.mrf.mxu0
    %v5585 = vadd.f32 %v5572, %v5584
    %v5586 = vpop.f32.mrf.mxu0
    %5587 = vdwg.mxu0
    %5588 = vmatpush.bf16.msra.mxu0 %v4217
    %5589 = vmatpush.bf16.msra.mxu0 %v4201
    %5590 = vmatpush.bf16.msra.mxu0 %v4185
    %5591 = vmatpush.bf16.msra.mxu0 %v4169
    %5592 = vmatpush.bf16.msra.mxu0 %v4153
    %5593 = vmatpush.bf16.msra.mxu0 %v4137
    %5594 = vmatpush.bf16.msra.mxu0 %v4121
    %5595 = vmatpush.bf16.msra.mxu0 %v4105
    %5596 = vmatmul.bf16.gmra.mxu0 %v2044
    %v5597 = vpop.f32.mrf.mxu0
    %v5598 = vadd.f32 -0.12503907, %v5597
    %v5599 = vpop.f32.mrf.mxu0
    %5600 = vdwg.mxu0
    %5601 = vmatpush.bf16.msra.mxu0 %v4345
    %5602 = vmatpush.bf16.msra.mxu0 %v4329
    %5603 = vmatpush.bf16.msra.mxu0 %v4313
    %5604 = vmatpush.bf16.msra.mxu0 %v4297
    %5605 = vmatpush.bf16.msra.mxu0 %v4281
    %5606 = vmatpush.bf16.msra.mxu0 %v4265
    %5607 = vmatpush.bf16.msra.mxu0 %v4249
    %5608 = vmatpush.bf16.msra.mxu0 %v4233
    %5609 = vmatmul.bf16.gmra.mxu0 %v2045
    %v5610 = vpop.f32.mrf.mxu0
    %v5611 = vadd.f32 %v5598, %v5610
    %v5612 = vpop.f32.mrf.mxu0
    %5613 = vdwg.mxu0
    %5614 = vmatpush.bf16.msra.mxu0 %v4473
    %5615 = vmatpush.bf16.msra.mxu0 %v4457
    %5616 = vmatpush.bf16.msra.mxu0 %v4441
    %5617 = vmatpush.bf16.msra.mxu0 %v4425
    %5618 = vmatpush.bf16.msra.mxu0 %v4409
    %5619 = vmatpush.bf16.msra.mxu0 %v4393
    %5620 = vmatpush.bf16.msra.mxu0 %v4377
    %5621 = vmatpush.bf16.msra.mxu0 %v4361
    %5622 = vmatmul.bf16.gmra.mxu0 %v2046
    %v5623 = vpop.f32.mrf.mxu0
    %v5624 = vadd.f32 %v5611, %v5623
    %v5625 = vpop.f32.mrf.mxu0
    %5626 = vdwg.mxu0
    %5627 = vmatpush.bf16.msra.mxu0 %v4601
    %5628 = vmatpush.bf16.msra.mxu0 %v4585
    %5629 = vmatpush.bf16.msra.mxu0 %v4569
    %5630 = vmatpush.bf16.msra.mxu0 %v4553
    %5631 = vmatpush.bf16.msra.mxu0 %v4537
    %5632 = vmatpush.bf16.msra.mxu0 %v4521
    %5633 = vmatpush.bf16.msra.mxu0 %v4505
    %5634 = vmatpush.bf16.msra.mxu0 %v4489
    %5635 = vmatmul.bf16.gmra.mxu0 %v2047
    %v5636 = vpop.f32.mrf.mxu0
    %v5637 = vadd.f32 %v5624, %v5636
    %v5638 = vpop.f32.mrf.mxu0
    %5639 = vdwg.mxu0
    %5640 = vmatpush.bf16.msra.mxu0 %v4218
    %5641 = vmatpush.bf16.msra.mxu0 %v4202
    %5642 = vmatpush.bf16.msra.mxu0 %v4186
    %5643 = vmatpush.bf16.msra.mxu0 %v4170
    %5644 = vmatpush.bf16.msra.mxu0 %v4154
    %5645 = vmatpush.bf16.msra.mxu0 %v4138
    %5646 = vmatpush.bf16.msra.mxu0 %v4122
    %5647 = vmatpush.bf16.msra.mxu0 %v4106
    %5648 = vmatmul.bf16.gmra.mxu0 %v2044
    %v5649 = vpop.f32.mrf.mxu0
    %v5650 = vadd.f32 -0.12503907, %v5649
    %v5651 = vpop.f32.mrf.mxu0
    %5652 = vdwg.mxu0
    %5653 = vmatpush.bf16.msra.mxu0 %v4346
    %5654 = vmatpush.bf16.msra.mxu0 %v4330
    %5655 = vmatpush.bf16.msra.mxu0 %v4314
    %5656 = vmatpush.bf16.msra.mxu0 %v4298
    %5657 = vmatpush.bf16.msra.mxu0 %v4282
    %5658 = vmatpush.bf16.msra.mxu0 %v4266
    %5659 = vmatpush.bf16.msra.mxu0 %v4250
    %5660 = vmatpush.bf16.msra.mxu0 %v4234
    %5661 = vmatmul.bf16.gmra.mxu0 %v2045
    %v5662 = vpop.f32.mrf.mxu0
    %v5663 = vadd.f32 %v5650, %v5662
    %v5664 = vpop.f32.mrf.mxu0
    %5665 = vdwg.mxu0
    %5666 = vmatpush.bf16.msra.mxu0 %v4474
    %5667 = vmatpush.bf16.msra.mxu0 %v4458
    %5668 = vmatpush.bf16.msra.mxu0 %v4442
    %5669 = vmatpush.bf16.msra.mxu0 %v4426
    %5670 = vmatpush.bf16.msra.mxu0 %v4410
    %5671 = vmatpush.bf16.msra.mxu0 %v4394
    %5672 = vmatpush.bf16.msra.mxu0 %v4378
    %5673 = vmatpush.bf16.msra.mxu0 %v4362
    %5674 = vmatmul.bf16.gmra.mxu0 %v2046
    %v5675 = vpop.f32.mrf.mxu0
    %v5676 = vadd.f32 %v5663, %v5675
    %v5677 = vpop.f32.mrf.mxu0
    %5678 = vdwg.mxu0
    %5679 = vmatpush.bf16.msra.mxu0 %v4602
    %5680 = vmatpush.bf16.msra.mxu0 %v4586
    %5681 = vmatpush.bf16.msra.mxu0 %v4570
    %5682 = vmatpush.bf16.msra.mxu0 %v4554
    %5683 = vmatpush.bf16.msra.mxu0 %v4538
    %5684 = vmatpush.bf16.msra.mxu0 %v4522
    %5685 = vmatpush.bf16.msra.mxu0 %v4506
    %5686 = vmatpush.bf16.msra.mxu0 %v4490
    %5687 = vmatmul.bf16.gmra.mxu0 %v2047
    %v5688 = vpop.f32.mrf.mxu0
    %v5689 = vadd.f32 %v5676, %v5688
    %v5690 = vpop.f32.mrf.mxu0
    %5691 = vdwg.mxu0
    %5692 = vmatpush.bf16.msra.mxu0 %v4219
    %5693 = vmatpush.bf16.msra.mxu0 %v4203
    %5694 = vmatpush.bf16.msra.mxu0 %v4187
    %5695 = vmatpush.bf16.msra.mxu0 %v4171
    %5696 = vmatpush.bf16.msra.mxu0 %v4155
    %5697 = vmatpush.bf16.msra.mxu0 %v4139
    %5698 = vmatpush.bf16.msra.mxu0 %v4123
    %5699 = vmatpush.bf16.msra.mxu0 %v4107
    %5700 = vmatmul.bf16.gmra.mxu0 %v2044
    %v5701 = vpop.f32.mrf.mxu0
    %v5702 = vadd.f32 -0.12503907, %v5701
    %v5703 = vpop.f32.mrf.mxu0
    %5704 = vdwg.mxu0
    %5705 = vmatpush.bf16.msra.mxu0 %v4347
    %5706 = vmatpush.bf16.msra.mxu0 %v4331
    %5707 = vmatpush.bf16.msra.mxu0 %v4315
    %5708 = vmatpush.bf16.msra.mxu0 %v4299
    %5709 = vmatpush.bf16.msra.mxu0 %v4283
    %5710 = vmatpush.bf16.msra.mxu0 %v4267
    %5711 = vmatpush.bf16.msra.mxu0 %v4251
    %5712 = vmatpush.bf16.msra.mxu0 %v4235
    %5713 = vmatmul.bf16.gmra.mxu0 %v2045
    %v5714 = vpop.f32.mrf.mxu0
    %v5715 = vadd.f32 %v5702, %v5714
    %v5716 = vpop.f32.mrf.mxu0
    %5717 = vdwg.mxu0
    %5718 = vmatpush.bf16.msra.mxu0 %v4475
    %5719 = vmatpush.bf16.msra.mxu0 %v4459
    %5720 = vmatpush.bf16.msra.mxu0 %v4443
    %5721 = vmatpush.bf16.msra.mxu0 %v4427
    %5722 = vmatpush.bf16.msra.mxu0 %v4411
    %5723 = vmatpush.bf16.msra.mxu0 %v4395
    %5724 = vmatpush.bf16.msra.mxu0 %v4379
    %5725 = vmatpush.bf16.msra.mxu0 %v4363
    %5726 = vmatmul.bf16.gmra.mxu0 %v2046
    %v5727 = vpop.f32.mrf.mxu0
    %v5728 = vadd.f32 %v5715, %v5727
    %v5729 = vpop.f32.mrf.mxu0
    %5730 = vdwg.mxu0
    %5731 = vmatpush.bf16.msra.mxu0 %v4603
    %5732 = vmatpush.bf16.msra.mxu0 %v4587
    %5733 = vmatpush.bf16.msra.mxu0 %v4571
    %5734 = vmatpush.bf16.msra.mxu0 %v4555
    %5735 = vmatpush.bf16.msra.mxu0 %v4539
    %5736 = vmatpush.bf16.msra.mxu0 %v4523
    %5737 = vmatpush.bf16.msra.mxu0 %v4507
    %5738 = vmatpush.bf16.msra.mxu0 %v4491
    %5739 = vmatmul.bf16.gmra.mxu0 %v2047
    %v5740 = vpop.f32.mrf.mxu0
    %v5741 = vadd.f32 %v5728, %v5740
    %v5742 = vpop.f32.mrf.mxu0
    %5743 = vdwg.mxu0
    %5744 = vmatpush.bf16.msra.mxu0 %v4220
    %5745 = vmatpush.bf16.msra.mxu0 %v4204
    %5746 = vmatpush.bf16.msra.mxu0 %v4188
    %5747 = vmatpush.bf16.msra.mxu0 %v4172
    %5748 = vmatpush.bf16.msra.mxu0 %v4156
    %5749 = vmatpush.bf16.msra.mxu0 %v4140
    %5750 = vmatpush.bf16.msra.mxu0 %v4124
    %5751 = vmatpush.bf16.msra.mxu0 %v4108
    %5752 = vmatmul.bf16.gmra.mxu0 %v2044
    %v5753 = vpop.f32.mrf.mxu0
    %v5754 = vadd.f32 -0.12503907, %v5753
    %v5755 = vpop.f32.mrf.mxu0
    %5756 = vdwg.mxu0
    %5757 = vmatpush.bf16.msra.mxu0 %v4348
    %5758 = vmatpush.bf16.msra.mxu0 %v4332
    %5759 = vmatpush.bf16.msra.mxu0 %v4316
    %5760 = vmatpush.bf16.msra.mxu0 %v4300
    %5761 = vmatpush.bf16.msra.mxu0 %v4284
    %5762 = vmatpush.bf16.msra.mxu0 %v4268
    %5763 = vmatpush.bf16.msra.mxu0 %v4252
    %5764 = vmatpush.bf16.msra.mxu0 %v4236
    %5765 = vmatmul.bf16.gmra.mxu0 %v2045
    %v5766 = vpop.f32.mrf.mxu0
    %v5767 = vadd.f32 %v5754, %v5766
    %v5768 = vpop.f32.mrf.mxu0
    %5769 = vdwg.mxu0
    %5770 = vmatpush.bf16.msra.mxu0 %v4476
    %5771 = vmatpush.bf16.msra.mxu0 %v4460
    %5772 = vmatpush.bf16.msra.mxu0 %v4444
    %5773 = vmatpush.bf16.msra.mxu0 %v4428
    %5774 = vmatpush.bf16.msra.mxu0 %v4412
    %5775 = vmatpush.bf16.msra.mxu0 %v4396
    %5776 = vmatpush.bf16.msra.mxu0 %v4380
    %5777 = vmatpush.bf16.msra.mxu0 %v4364
    %5778 = vmatmul.bf16.gmra.mxu0 %v2046
    %v5779 = vpop.f32.mrf.mxu0
    %v5780 = vadd.f32 %v5767, %v5779
    %v5781 = vpop.f32.mrf.mxu0
    %5782 = vdwg.mxu0
    %5783 = vmatpush.bf16.msra.mxu0 %v4604
    %5784 = vmatpush.bf16.msra.mxu0 %v4588
    %5785 = vmatpush.bf16.msra.mxu0 %v4572
    %5786 = vmatpush.bf16.msra.mxu0 %v4556
    %5787 = vmatpush.bf16.msra.mxu0 %v4540
    %5788 = vmatpush.bf16.msra.mxu0 %v4524
    %5789 = vmatpush.bf16.msra.mxu0 %v4508
    %5790 = vmatpush.bf16.msra.mxu0 %v4492
    %5791 = vmatmul.bf16.gmra.mxu0 %v2047
    %v5792 = vpop.f32.mrf.mxu0
    %v5793 = vadd.f32 %v5780, %v5792
    %v5794 = vpop.f32.mrf.mxu0
    %5795 = vdwg.mxu0
    %5796 = vmatpush.bf16.msra.mxu0 %v4221
    %5797 = vmatpush.bf16.msra.mxu0 %v4205
    %5798 = vmatpush.bf16.msra.mxu0 %v4189
    %5799 = vmatpush.bf16.msra.mxu0 %v4173
    %5800 = vmatpush.bf16.msra.mxu0 %v4157
    %5801 = vmatpush.bf16.msra.mxu0 %v4141
    %5802 = vmatpush.bf16.msra.mxu0 %v4125
    %5803 = vmatpush.bf16.msra.mxu0 %v4109
    %5804 = vmatmul.bf16.gmra.mxu0 %v2044
    %v5805 = vpop.f32.mrf.mxu0
    %v5806 = vadd.f32 -0.12503907, %v5805
    %v5807 = vpop.f32.mrf.mxu0
    %5808 = vdwg.mxu0
    %5809 = vmatpush.bf16.msra.mxu0 %v4349
    %5810 = vmatpush.bf16.msra.mxu0 %v4333
    %5811 = vmatpush.bf16.msra.mxu0 %v4317
    %5812 = vmatpush.bf16.msra.mxu0 %v4301
    %5813 = vmatpush.bf16.msra.mxu0 %v4285
    %5814 = vmatpush.bf16.msra.mxu0 %v4269
    %5815 = vmatpush.bf16.msra.mxu0 %v4253
    %5816 = vmatpush.bf16.msra.mxu0 %v4237
    %5817 = vmatmul.bf16.gmra.mxu0 %v2045
    %v5818 = vpop.f32.mrf.mxu0
    %v5819 = vadd.f32 %v5806, %v5818
    %v5820 = vpop.f32.mrf.mxu0
    %5821 = vdwg.mxu0
    %5822 = vmatpush.bf16.msra.mxu0 %v4477
    %5823 = vmatpush.bf16.msra.mxu0 %v4461
    %5824 = vmatpush.bf16.msra.mxu0 %v4445
    %5825 = vmatpush.bf16.msra.mxu0 %v4429
    %5826 = vmatpush.bf16.msra.mxu0 %v4413
    %5827 = vmatpush.bf16.msra.mxu0 %v4397
    %5828 = vmatpush.bf16.msra.mxu0 %v4381
    %5829 = vmatpush.bf16.msra.mxu0 %v4365
    %5830 = vmatmul.bf16.gmra.mxu0 %v2046
    %v5831 = vpop.f32.mrf.mxu0
    %v5832 = vadd.f32 %v5819, %v5831
    %v5833 = vpop.f32.mrf.mxu0
    %5834 = vdwg.mxu0
    %5835 = vmatpush.bf16.msra.mxu0 %v4605
    %5836 = vmatpush.bf16.msra.mxu0 %v4589
    %5837 = vmatpush.bf16.msra.mxu0 %v4573
    %5838 = vmatpush.bf16.msra.mxu0 %v4557
    %5839 = vmatpush.bf16.msra.mxu0 %v4541
    %5840 = vmatpush.bf16.msra.mxu0 %v4525
    %5841 = vmatpush.bf16.msra.mxu0 %v4509
    %5842 = vmatpush.bf16.msra.mxu0 %v4493
    %5843 = vmatmul.bf16.gmra.mxu0 %v2047
    %v5844 = vpop.f32.mrf.mxu0
    %v5845 = vadd.f32 %v5832, %v5844
    %v5846 = vpop.f32.mrf.mxu0
    %5847 = vdwg.mxu0
    %5848 = vmatpush.bf16.msra.mxu0 %v4222
    %5849 = vmatpush.bf16.msra.mxu0 %v4206
    %5850 = vmatpush.bf16.msra.mxu0 %v4190
    %5851 = vmatpush.bf16.msra.mxu0 %v4174
    %5852 = vmatpush.bf16.msra.mxu0 %v4158
    %5853 = vmatpush.bf16.msra.mxu0 %v4142
    %5854 = vmatpush.bf16.msra.mxu0 %v4126
    %5855 = vmatpush.bf16.msra.mxu0 %v4110
    %5856 = vmatmul.bf16.gmra.mxu0 %v2044
    %v5857 = vpop.f32.mrf.mxu0
    %v5858 = vadd.f32 -0.12503907, %v5857
    %v5859 = vpop.f32.mrf.mxu0
    %5860 = vdwg.mxu0
    %5861 = vmatpush.bf16.msra.mxu0 %v4350
    %5862 = vmatpush.bf16.msra.mxu0 %v4334
    %5863 = vmatpush.bf16.msra.mxu0 %v4318
    %5864 = vmatpush.bf16.msra.mxu0 %v4302
    %5865 = vmatpush.bf16.msra.mxu0 %v4286
    %5866 = vmatpush.bf16.msra.mxu0 %v4270
    %5867 = vmatpush.bf16.msra.mxu0 %v4254
    %5868 = vmatpush.bf16.msra.mxu0 %v4238
    %5869 = vmatmul.bf16.gmra.mxu0 %v2045
    %v5870 = vpop.f32.mrf.mxu0
    %v5871 = vadd.f32 %v5858, %v5870
    %v5872 = vpop.f32.mrf.mxu0
    %5873 = vdwg.mxu0
    %5874 = vmatpush.bf16.msra.mxu0 %v4478
    %5875 = vmatpush.bf16.msra.mxu0 %v4462
    %5876 = vmatpush.bf16.msra.mxu0 %v4446
    %5877 = vmatpush.bf16.msra.mxu0 %v4430
    %5878 = vmatpush.bf16.msra.mxu0 %v4414
    %5879 = vmatpush.bf16.msra.mxu0 %v4398
    %5880 = vmatpush.bf16.msra.mxu0 %v4382
    %5881 = vmatpush.bf16.msra.mxu0 %v4366
    %5882 = vmatmul.bf16.gmra.mxu0 %v2046
    %v5883 = vpop.f32.mrf.mxu0
    %v5884 = vadd.f32 %v5871, %v5883
    %v5885 = vpop.f32.mrf.mxu0
    %5886 = vdwg.mxu0
    %5887 = vmatpush.bf16.msra.mxu0 %v4606
    %5888 = vmatpush.bf16.msra.mxu0 %v4590
    %5889 = vmatpush.bf16.msra.mxu0 %v4574
    %5890 = vmatpush.bf16.msra.mxu0 %v4558
    %5891 = vmatpush.bf16.msra.mxu0 %v4542
    %5892 = vmatpush.bf16.msra.mxu0 %v4526
    %5893 = vmatpush.bf16.msra.mxu0 %v4510
    %5894 = vmatpush.bf16.msra.mxu0 %v4494
    %5895 = vmatmul.bf16.gmra.mxu0 %v2047
    %v5896 = vpop.f32.mrf.mxu0
    %v5897 = vadd.f32 %v5884, %v5896
    %v5898 = vpop.f32.mrf.mxu0
    %5899 = vdwg.mxu0
    %5900 = vmatpush.bf16.msra.mxu0 %v4223
    %5901 = vmatpush.bf16.msra.mxu0 %v4207
    %5902 = vmatpush.bf16.msra.mxu0 %v4191
    %5903 = vmatpush.bf16.msra.mxu0 %v4175
    %5904 = vmatpush.bf16.msra.mxu0 %v4159
    %5905 = vmatpush.bf16.msra.mxu0 %v4143
    %5906 = vmatpush.bf16.msra.mxu0 %v4127
    %5907 = vmatpush.bf16.msra.mxu0 %v4111
    %5908 = vmatmul.bf16.gmra.mxu0 %v2044
    %v5909 = vpop.f32.mrf.mxu0
    %v5910 = vadd.f32 -0.12503907, %v5909
    %v5911 = vpop.f32.mrf.mxu0
    %5912 = vdwg.mxu0
    %5913 = vmatpush.bf16.msra.mxu0 %v4351
    %5914 = vmatpush.bf16.msra.mxu0 %v4335
    %5915 = vmatpush.bf16.msra.mxu0 %v4319
    %5916 = vmatpush.bf16.msra.mxu0 %v4303
    %5917 = vmatpush.bf16.msra.mxu0 %v4287
    %5918 = vmatpush.bf16.msra.mxu0 %v4271
    %5919 = vmatpush.bf16.msra.mxu0 %v4255
    %5920 = vmatpush.bf16.msra.mxu0 %v4239
    %5921 = vmatmul.bf16.gmra.mxu0 %v2045
    %v5922 = vpop.f32.mrf.mxu0
    %v5923 = vadd.f32 %v5910, %v5922
    %v5924 = vpop.f32.mrf.mxu0
    %5925 = vdwg.mxu0
    %5926 = vmatpush.bf16.msra.mxu0 %v4479
    %5927 = vmatpush.bf16.msra.mxu0 %v4463
    %5928 = vmatpush.bf16.msra.mxu0 %v4447
    %5929 = vmatpush.bf16.msra.mxu0 %v4431
    %5930 = vmatpush.bf16.msra.mxu0 %v4415
    %5931 = vmatpush.bf16.msra.mxu0 %v4399
    %5932 = vmatpush.bf16.msra.mxu0 %v4383
    %5933 = vmatpush.bf16.msra.mxu0 %v4367
    %5934 = vmatmul.bf16.gmra.mxu0 %v2046
    %v5935 = vpop.f32.mrf.mxu0
    %v5936 = vadd.f32 %v5923, %v5935
    %v5937 = vpop.f32.mrf.mxu0
    %5938 = vdwg.mxu0
    %5939 = vmatpush.bf16.msra.mxu0 %v4607
    %5940 = vmatpush.bf16.msra.mxu0 %v4591
    %5941 = vmatpush.bf16.msra.mxu0 %v4575
    %5942 = vmatpush.bf16.msra.mxu0 %v4559
    %5943 = vmatpush.bf16.msra.mxu0 %v4543
    %5944 = vmatpush.bf16.msra.mxu0 %v4527
    %5945 = vmatpush.bf16.msra.mxu0 %v4511
    %5946 = vmatpush.bf16.msra.mxu0 %v4495
    %5947 = vmatmul.bf16.gmra.mxu0 %v2047
    %v5948 = vpop.f32.mrf.mxu0
    %v5949 = vadd.f32 %v5936, %v5948
    %v5950 = vpop.f32.mrf.mxu0
    %5951 = vdwg.mxu0
    %v5952 = vxor.u32 %v5169, 2147483648
    %v5953 = vxor.u32 %v5221, 2147483648
    %v5954 = vxor.u32 %v5273, 2147483648
    %v5955 = vxor.u32 %v5325, 2147483648
    %v5956 = vxor.u32 %v5377, 2147483648
    %v5957 = vxor.u32 %v5429, 2147483648
    %v5958 = vxor.u32 %v5481, 2147483648
    %v5959 = vxor.u32 %v5533, 2147483648
    %v5960 = vxor.u32 %v5585, 2147483648
    %v5961 = vxor.u32 %v5637, 2147483648
    %v5962 = vxor.u32 %v5689, 2147483648
    %v5963 = vxor.u32 %v5741, 2147483648
    %v5964 = vxor.u32 %v5793, 2147483648
    %v5965 = vxor.u32 %v5845, 2147483648
    %v5966 = vxor.u32 %v5897, 2147483648
    %v5967 = vxor.u32 %v5949, 2147483648
    %v5968 = vmul.f32 %v5952, 1.442695
    %v5969 = vpow.pop %v5968
    %v5970 = vmul.f32 %v5953, 1.442695
    %v5971 = vpow.pop %v5970
    %v5972 = vmul.f32 %v5954, 1.442695
    %v5973 = vpow.pop %v5972
    %v5974 = vmul.f32 %v5955, 1.442695
    %v5975 = vpow.pop %v5974
    %v5976 = vmul.f32 %v5956, 1.442695
    %v5977 = vpow.pop %v5976
    %v5978 = vmul.f32 %v5957, 1.442695
    %v5979 = vpow.pop %v5978
    %v5980 = vmul.f32 %v5958, 1.442695
    %v5981 = vpow.pop %v5980
    %v5982 = vmul.f32 %v5959, 1.442695
    %v5983 = vpow.pop %v5982
    %v5984 = vmul.f32 %v5960, 1.442695
    %v5985 = vpow.pop %v5984
    %v5986 = vmul.f32 %v5961, 1.442695
    %v5987 = vpow.pop %v5986
    %v5988 = vmul.f32 %v5962, 1.442695
    %v5989 = vpow.pop %v5988
    %v5990 = vmul.f32 %v5963, 1.442695
    %v5991 = vpow.pop %v5990
    %v5992 = vmul.f32 %v5964, 1.442695
    %v5993 = vpow.pop %v5992
    %v5994 = vmul.f32 %v5965, 1.442695
    %v5995 = vpow.pop %v5994
    %v5996 = vmul.f32 %v5966, 1.442695
    %v5997 = vpow.pop %v5996
    %v5998 = vmul.f32 %v5967, 1.442695
    %v5999 = vpow.pop %v5998
    %v6000 = vadd.f32 %v5969, 1.0
    %v6001 = vadd.f32 %v5971, 1.0
    %v6002 = vadd.f32 %v5973, 1.0
    %v6003 = vadd.f32 %v5975, 1.0
    %v6004 = vadd.f32 %v5977, 1.0
    %v6005 = vadd.f32 %v5979, 1.0
    %v6006 = vadd.f32 %v5981, 1.0
    %v6007 = vadd.f32 %v5983, 1.0
    %v6008 = vadd.f32 %v5985, 1.0
    %v6009 = vadd.f32 %v5987, 1.0
    %v6010 = vadd.f32 %v5989, 1.0
    %v6011 = vadd.f32 %v5991, 1.0
    %v6012 = vadd.f32 %v5993, 1.0
    %v6013 = vadd.f32 %v5995, 1.0
    %v6014 = vadd.f32 %v5997, 1.0
    %v6015 = vadd.f32 %v5999, 1.0
    %v6016 = vrcp.pop %v6000
    %v6017 = vmul.f32 %v6000, %v6016
    %v6018 = vsub.f32 1.0, %v6017
    %v6019 = vmul.f32 %v6016, %v6018
    %v6020 = vadd.f32 %v6016, %v6019
    %vm6021 = vweird.f32 %v6000
    %vm6022 = vweird.f32 %v6016
    %vm6023 = vmor %vm6021, %vm6022
    %v6024 = vsel %vm6023, %v6016, %v6020
    %v6025 = vand.u32 2147483647, %v6000
    %vm6026 = vcmp.eq.f32.partialorder %v6025, 8.507059e+37
    %v6027 = vand.u32 %v6000, 2147483648
    %v6028 = vor.u32 1.1754944e-38, %v6027
    %v6029 = vsel %vm6026, %v6028, %v6024
    %v6030 = vmul.f32 1.0, %v6029
    %v6031 = vrcp.pop %v6001
    %v6032 = vmul.f32 %v6001, %v6031
    %v6033 = vsub.f32 1.0, %v6032
    %v6034 = vmul.f32 %v6031, %v6033
    %v6035 = vadd.f32 %v6031, %v6034
    %vm6036 = vweird.f32 %v6001
    %vm6037 = vweird.f32 %v6031
    %vm6038 = vmor %vm6036, %vm6037
    %v6039 = vsel %vm6038, %v6031, %v6035
    %v6040 = vand.u32 2147483647, %v6001
    %vm6041 = vcmp.eq.f32.partialorder %v6040, 8.507059e+37
    %v6042 = vand.u32 %v6001, 2147483648
    %v6043 = vor.u32 1.1754944e-38, %v6042
    %v6044 = vsel %vm6041, %v6043, %v6039
    %v6045 = vmul.f32 1.0, %v6044
    %v6046 = vrcp.pop %v6002
    %v6047 = vmul.f32 %v6002, %v6046
    %v6048 = vsub.f32 1.0, %v6047
    %v6049 = vmul.f32 %v6046, %v6048
    %v6050 = vadd.f32 %v6046, %v6049
    %vm6051 = vweird.f32 %v6002
    %vm6052 = vweird.f32 %v6046
    %vm6053 = vmor %vm6051, %vm6052
    %v6054 = vsel %vm6053, %v6046, %v6050
    %v6055 = vand.u32 2147483647, %v6002
    %vm6056 = vcmp.eq.f32.partialorder %v6055, 8.507059e+37
    %v6057 = vand.u32 %v6002, 2147483648
    %v6058 = vor.u32 1.1754944e-38, %v6057
    %v6059 = vsel %vm6056, %v6058, %v6054
    %v6060 = vmul.f32 1.0, %v6059
    %v6061 = vrcp.pop %v6003
    %v6062 = vmul.f32 %v6003, %v6061
    %v6063 = vsub.f32 1.0, %v6062
    %v6064 = vmul.f32 %v6061, %v6063
    %v6065 = vadd.f32 %v6061, %v6064
    %vm6066 = vweird.f32 %v6003
    %vm6067 = vweird.f32 %v6061
    %vm6068 = vmor %vm6066, %vm6067
    %v6069 = vsel %vm6068, %v6061, %v6065
    %v6070 = vand.u32 2147483647, %v6003
    %vm6071 = vcmp.eq.f32.partialorder %v6070, 8.507059e+37
    %v6072 = vand.u32 %v6003, 2147483648
    %v6073 = vor.u32 1.1754944e-38, %v6072
    %v6074 = vsel %vm6071, %v6073, %v6069
    %v6075 = vmul.f32 1.0, %v6074
    %v6076 = vrcp.pop %v6004
    %v6077 = vmul.f32 %v6004, %v6076
    %v6078 = vsub.f32 1.0, %v6077
    %v6079 = vmul.f32 %v6076, %v6078
    %v6080 = vadd.f32 %v6076, %v6079
    %vm6081 = vweird.f32 %v6004
    %vm6082 = vweird.f32 %v6076
    %vm6083 = vmor %vm6081, %vm6082
    %v6084 = vsel %vm6083, %v6076, %v6080
    %v6085 = vand.u32 2147483647, %v6004
    %vm6086 = vcmp.eq.f32.partialorder %v6085, 8.507059e+37
    %v6087 = vand.u32 %v6004, 2147483648
    %v6088 = vor.u32 1.1754944e-38, %v6087
    %v6089 = vsel %vm6086, %v6088, %v6084
    %v6090 = vmul.f32 1.0, %v6089
    %v6091 = vrcp.pop %v6005
    %v6092 = vmul.f32 %v6005, %v6091
    %v6093 = vsub.f32 1.0, %v6092
    %v6094 = vmul.f32 %v6091, %v6093
    %v6095 = vadd.f32 %v6091, %v6094
    %vm6096 = vweird.f32 %v6005
    %vm6097 = vweird.f32 %v6091
    %vm6098 = vmor %vm6096, %vm6097
    %v6099 = vsel %vm6098, %v6091, %v6095
    %v6100 = vand.u32 2147483647, %v6005
    %vm6101 = vcmp.eq.f32.partialorder %v6100, 8.507059e+37
    %v6102 = vand.u32 %v6005, 2147483648
    %v6103 = vor.u32 1.1754944e-38, %v6102
    %v6104 = vsel %vm6101, %v6103, %v6099
    %v6105 = vmul.f32 1.0, %v6104
    %v6106 = vrcp.pop %v6006
    %v6107 = vmul.f32 %v6006, %v6106
    %v6108 = vsub.f32 1.0, %v6107
    %v6109 = vmul.f32 %v6106, %v6108
    %v6110 = vadd.f32 %v6106, %v6109
    %vm6111 = vweird.f32 %v6006
    %vm6112 = vweird.f32 %v6106
    %vm6113 = vmor %vm6111, %vm6112
    %v6114 = vsel %vm6113, %v6106, %v6110
    %v6115 = vand.u32 2147483647, %v6006
    %vm6116 = vcmp.eq.f32.partialorder %v6115, 8.507059e+37
    %v6117 = vand.u32 %v6006, 2147483648
    %v6118 = vor.u32 1.1754944e-38, %v6117
    %v6119 = vsel %vm6116, %v6118, %v6114
    %v6120 = vmul.f32 1.0, %v6119
    %v6121 = vrcp.pop %v6007
    %v6122 = vmul.f32 %v6007, %v6121
    %v6123 = vsub.f32 1.0, %v6122
    %v6124 = vmul.f32 %v6121, %v6123
    %v6125 = vadd.f32 %v6121, %v6124
    %vm6126 = vweird.f32 %v6007
    %vm6127 = vweird.f32 %v6121
    %vm6128 = vmor %vm6126, %vm6127
    %v6129 = vsel %vm6128, %v6121, %v6125
    %v6130 = vand.u32 2147483647, %v6007
    %vm6131 = vcmp.eq.f32.partialorder %v6130, 8.507059e+37
    %v6132 = vand.u32 %v6007, 2147483648
    %v6133 = vor.u32 1.1754944e-38, %v6132
    %v6134 = vsel %vm6131, %v6133, %v6129
    %v6135 = vmul.f32 1.0, %v6134
    %v6136 = vrcp.pop %v6008
    %v6137 = vmul.f32 %v6008, %v6136
    %v6138 = vsub.f32 1.0, %v6137
    %v6139 = vmul.f32 %v6136, %v6138
    %v6140 = vadd.f32 %v6136, %v6139
    %vm6141 = vweird.f32 %v6008
    %vm6142 = vweird.f32 %v6136
    %vm6143 = vmor %vm6141, %vm6142
    %v6144 = vsel %vm6143, %v6136, %v6140
    %v6145 = vand.u32 2147483647, %v6008
    %vm6146 = vcmp.eq.f32.partialorder %v6145, 8.507059e+37
    %v6147 = vand.u32 %v6008, 2147483648
    %v6148 = vor.u32 1.1754944e-38, %v6147
    %v6149 = vsel %vm6146, %v6148, %v6144
    %v6150 = vmul.f32 1.0, %v6149
    %v6151 = vrcp.pop %v6009
    %v6152 = vmul.f32 %v6009, %v6151
    %v6153 = vsub.f32 1.0, %v6152
    %v6154 = vmul.f32 %v6151, %v6153
    %v6155 = vadd.f32 %v6151, %v6154
    %vm6156 = vweird.f32 %v6009
    %vm6157 = vweird.f32 %v6151
    %vm6158 = vmor %vm6156, %vm6157
    %v6159 = vsel %vm6158, %v6151, %v6155
    %v6160 = vand.u32 2147483647, %v6009
    %vm6161 = vcmp.eq.f32.partialorder %v6160, 8.507059e+37
    %v6162 = vand.u32 %v6009, 2147483648
    %v6163 = vor.u32 1.1754944e-38, %v6162
    %v6164 = vsel %vm6161, %v6163, %v6159
    %v6165 = vmul.f32 1.0, %v6164
    %v6166 = vrcp.pop %v6010
    %v6167 = vmul.f32 %v6010, %v6166
    %v6168 = vsub.f32 1.0, %v6167
    %v6169 = vmul.f32 %v6166, %v6168
    %v6170 = vadd.f32 %v6166, %v6169
    %vm6171 = vweird.f32 %v6010
    %vm6172 = vweird.f32 %v6166
    %vm6173 = vmor %vm6171, %vm6172
    %v6174 = vsel %vm6173, %v6166, %v6170
    %v6175 = vand.u32 2147483647, %v6010
    %vm6176 = vcmp.eq.f32.partialorder %v6175, 8.507059e+37
    %v6177 = vand.u32 %v6010, 2147483648
    %v6178 = vor.u32 1.1754944e-38, %v6177
    %v6179 = vsel %vm6176, %v6178, %v6174
    %v6180 = vmul.f32 1.0, %v6179
    %v6181 = vrcp.pop %v6011
    %v6182 = vmul.f32 %v6011, %v6181
    %v6183 = vsub.f32 1.0, %v6182
    %v6184 = vmul.f32 %v6181, %v6183
    %v6185 = vadd.f32 %v6181, %v6184
    %vm6186 = vweird.f32 %v6011
    %vm6187 = vweird.f32 %v6181
    %vm6188 = vmor %vm6186, %vm6187
    %v6189 = vsel %vm6188, %v6181, %v6185
    %v6190 = vand.u32 2147483647, %v6011
    %vm6191 = vcmp.eq.f32.partialorder %v6190, 8.507059e+37
    %v6192 = vand.u32 %v6011, 2147483648
    %v6193 = vor.u32 1.1754944e-38, %v6192
    %v6194 = vsel %vm6191, %v6193, %v6189
    %v6195 = vmul.f32 1.0, %v6194
    %v6196 = vrcp.pop %v6012
    %v6197 = vmul.f32 %v6012, %v6196
    %v6198 = vsub.f32 1.0, %v6197
    %v6199 = vmul.f32 %v6196, %v6198
    %v6200 = vadd.f32 %v6196, %v6199
    %vm6201 = vweird.f32 %v6012
    %vm6202 = vweird.f32 %v6196
    %vm6203 = vmor %vm6201, %vm6202
    %v6204 = vsel %vm6203, %v6196, %v6200
    %v6205 = vand.u32 2147483647, %v6012
    %vm6206 = vcmp.eq.f32.partialorder %v6205, 8.507059e+37
    %v6207 = vand.u32 %v6012, 2147483648
    %v6208 = vor.u32 1.1754944e-38, %v6207
    %v6209 = vsel %vm6206, %v6208, %v6204
    %v6210 = vmul.f32 1.0, %v6209
    %v6211 = vrcp.pop %v6013
    %v6212 = vmul.f32 %v6013, %v6211
    %v6213 = vsub.f32 1.0, %v6212
    %v6214 = vmul.f32 %v6211, %v6213
    %v6215 = vadd.f32 %v6211, %v6214
    %vm6216 = vweird.f32 %v6013
    %vm6217 = vweird.f32 %v6211
    %vm6218 = vmor %vm6216, %vm6217
    %v6219 = vsel %vm6218, %v6211, %v6215
    %v6220 = vand.u32 2147483647, %v6013
    %vm6221 = vcmp.eq.f32.partialorder %v6220, 8.507059e+37
    %v6222 = vand.u32 %v6013, 2147483648
    %v6223 = vor.u32 1.1754944e-38, %v6222
    %v6224 = vsel %vm6221, %v6223, %v6219
    %v6225 = vmul.f32 1.0, %v6224
    %v6226 = vrcp.pop %v6014
    %v6227 = vmul.f32 %v6014, %v6226
    %v6228 = vsub.f32 1.0, %v6227
    %v6229 = vmul.f32 %v6226, %v6228
    %v6230 = vadd.f32 %v6226, %v6229
    %vm6231 = vweird.f32 %v6014
    %vm6232 = vweird.f32 %v6226
    %vm6233 = vmor %vm6231, %vm6232
    %v6234 = vsel %vm6233, %v6226, %v6230
    %v6235 = vand.u32 2147483647, %v6014
    %vm6236 = vcmp.eq.f32.partialorder %v6235, 8.507059e+37
    %v6237 = vand.u32 %v6014, 2147483648
    %v6238 = vor.u32 1.1754944e-38, %v6237
    %v6239 = vsel %vm6236, %v6238, %v6234
    %v6240 = vmul.f32 1.0, %v6239
    %v6241 = vrcp.pop %v6015
    %v6242 = vmul.f32 %v6015, %v6241
    %v6243 = vsub.f32 1.0, %v6242
    %v6244 = vmul.f32 %v6241, %v6243
    %v6245 = vadd.f32 %v6241, %v6244
    %vm6246 = vweird.f32 %v6015
    %vm6247 = vweird.f32 %v6241
    %vm6248 = vmor %vm6246, %vm6247
    %v6249 = vsel %vm6248, %v6241, %v6245
    %v6250 = vand.u32 2147483647, %v6015
    %vm6251 = vcmp.eq.f32.partialorder %v6250, 8.507059e+37
    %v6252 = vand.u32 %v6015, 2147483648
    %v6253 = vor.u32 1.1754944e-38, %v6252
    %v6254 = vsel %vm6251, %v6253, %v6249
    %v6255 = vmul.f32 1.0, %v6254
    %v6272 = vrot.slane %v6045, 7
    %v6273 = vrot.slane %v6060, 6
    %v6274 = vrot.slane %v6075, 5
    %v6275 = vrot.slane %v6090, 4
    %v6276 = vrot.slane %v6105, 3
    %v6277 = vrot.slane %v6120, 2
    %v6278 = vrot.slane %v6135, 1
    %v6279 = vrot.slane %v6165, 7
    %v6280 = vrot.slane %v6180, 6
    %v6281 = vrot.slane %v6195, 5
    %v6282 = vrot.slane %v6210, 4
    %v6283 = vrot.slane %v6225, 3
    %v6284 = vrot.slane %v6240, 2
    %v6285 = vrot.slane %v6255, 1
    %vm6286 = vcmask 1040384
    %v6287 = vsel %vm6286, %v6030, %v6272
    %vm6288 = vcmask 1042434
    %v6289 = vsel %vm6288, %v6273, %v6274
    %vm6290 = vcmask 1041408
    %v6291 = vsel %vm6290, %v6287, %v6289
    %vm6292 = vcmask 1044484
    %v6293 = vsel %vm6292, %v6275, %v6276
    %vm6294 = vcmask 1046534
    %v6295 = vsel %vm6294, %v6277, %v6278
    %vm6296 = vcmask 1045508
    %v6297 = vsel %vm6296, %v6293, %v6295
    %v6298 = vsel %vm373, %v6291, %v6297
    %v6299 = vsel %vm6286, %v6150, %v6279
    %v6300 = vsel %vm6288, %v6280, %v6281
    %v6301 = vsel %vm6290, %v6299, %v6300
    %v6302 = vsel %vm6292, %v6282, %v6283
    %v6303 = vsel %vm6294, %v6284, %v6285
    %v6304 = vsel %vm6296, %v6302, %v6303
    %v6305 = vsel %vm373, %v6301, %v6304
    %6308 = vst [vmem:[%s19] sm:$0xff] %v6298
    %6309 = vst [vmem:[%s19 + $0x8] sm:$0xff] %v6305
    // Predicated region
    $region146: #{forward.1} parent=1 // pred_check
      _
    $region147: #{forward.1} parent=1 // pred_check_branch
      %6311 = sbr.rel (0) target = $region149
    $region148: #{forward.1} parent=1 // pred_region
      _
    $region149: #{forward.1} parent=1 // pred_fallthru
      _
    // Predicated region
    $region150: #{forward.1} parent=1 // pred_check
      _
    $region151: #{forward.1} parent=1 // pred_check_branch
      %6313 = sbr.rel (0) target = $region153
    $region152: #{forward.1} parent=1 // pred_region
      _
    $region153: #{forward.1} parent=1 // pred_fallthru
      _
    %6314 = vsyncpa [#allocation3], 1
    %6315 = vsyncpa [#allocation5], 1
    %6316 = vsyncpa [#allocation8], 1
    %6317 = vsyncpa [#allocation11], 1
    %6318 = vsyncpa [#allocation14], 1
    %6319 = vsyncpa [#allocation17], 1
    %6320 = vsyncpa [#allocation20], 1
    %6321 = vsyncpa [#allocation23], 1
    %6322 = vsyncpa [#allocation26], 1

</llo_original>
